<compile_context>
chip_gen: v6e
topology: v6e:2x2x1
jax: 0.10.0
libtpu: 0.0.40
codegen_flags: <defaults>
</compile_context>

<pallas_src>
import jax
import jax.numpy as jnp
import numpy as np
from jax.experimental import pallas as pl
from jax.experimental.pallas import tpu as pltpu


# ----------------------------- small helpers --------------------------------

def _round_up(x, m):
    return ((x + m - 1) // m) * m


def nearest_upsample(x, upsampling):
    """KPConv-style nearest upsample (reference only): gather closest coarse
    neighbor; index == M selects a zero 'shadow' row."""
    shadow = jnp.zeros_like(x[:1])
    x_pad = jnp.concatenate([x, shadow], axis=0)
    return x_pad[upsampling[:, 0]]


# ------------------------------- Pallas kernel -------------------------------

def decoder_kernel(idx_ref, cur_inv_ref, cur_equ_ref,
                   last_inv_c_ref, last_equ_c_ref,
                   w_last_bd_ref, w_cur_bd_ref,
                   w_inv_l_ref, w_inv_c_ref, w_equ_ref,
                   out_ref):
    tile_n = idx_ref.shape[0]
    m_pad = last_inv_c_ref.shape[0]

    # Fused nearest-upsample gather via one-hot matmul (kernel is memory-bound,
    # MXU has slack).  Out-of-range / shadow indices -> all-zero one-hot row ->
    # zero features, exactly like the reference's zero shadow row.
    idx = idx_ref[...]                                               # (tn, 1) i32
    cols = jax.lax.broadcasted_iota(jnp.int32, (tile_n, m_pad), 1)
    onehot = (cols == idx).astype(jnp.float32)                       # (tn, m_pad)

    last_inv = jnp.dot(onehot, last_inv_c_ref[...],
                       preferred_element_type=jnp.float32)           # (tn, Cil)
    last_equ = jnp.dot(onehot, last_equ_c_ref[...],
                       preferred_element_type=jnp.float32)           # (tn, B*Cel)

    # Per-basis Linear layers as single matmuls against block-diagonal weights.
    a = jnp.dot(last_equ, w_last_bd_ref[...],
                preferred_element_type=jnp.float32)                  # (tn, B*Cec)
    c = jnp.dot(cur_equ_ref[...], w_cur_bd_ref[...],
                preferred_element_type=jnp.float32)                  # (tn, B*Cec)
    prod = a * c

    # cat([last_inv, cur_inv, equ]) @ W_mlp == split matmul + sum;
    # the 1/B of the basis mean is folded into w_equ_ref (stacked weight).
    out = (jnp.dot(last_inv, w_inv_l_ref[...],
                   preferred_element_type=jnp.float32)
           + jnp.dot(cur_inv_ref[...], w_inv_c_ref[...],
                     preferred_element_type=jnp.float32)
           + jnp.dot(prod, w_equ_ref[...],
                     preferred_element_type=jnp.float32))
    out_ref[...] = out.astype(out_ref.dtype)


# --------------------------------- wrapper -----------------------------------

def decoder_forward(last_inv, cur_inv, last_equ, cur_equ, upsampling, params,
                    *, min_basis, tile_n=512):
    n, cic = cur_inv.shape
    m, cil = last_inv.shape
    cel = last_equ.shape[2]
    cec = cur_equ.shape[2]
    cout = params["w_equ"].shape[1]
    b = min_basis

    # ----- host-side packing: cheap contiguous reshapes / zero pads ---------
    n_pad = _round_up(n, tile_n)
    m_pad = _round_up(m, 8)

    # Coarse (VMEM-resident) arrays, basis packed into lanes, zero-padded rows.
    last_equ_2d = last_equ[:, :b, :].reshape(m, b * cel)
    last_inv_c = jnp.zeros((m_pad, cil), last_inv.dtype).at[:m].set(last_inv)
    last_equ_c = jnp.zeros((m_pad, b * cel), last_equ.dtype).at[:m].set(last_equ_2d)

    # Fine (streamed) arrays, basis packed, zero-padded rows.
    cur_equ_2d = cur_equ[:, :b, :].reshape(n, b * cec)
    cur_inv_p = jnp.zeros((n_pad, cic), cur_inv.dtype).at[:n].set(cur_inv)
    cur_equ_p = jnp.zeros((n_pad, b * cec), cur_equ.dtype).at[:n].set(cur_equ_2d)
    # Nearest-neighbor index per fine point; padded rows point at the shadow.
    idx = jnp.full((n_pad, 1), m, jnp.int32).at[:n, 0].set(
        upsampling[:, 0].astype(jnp.int32))

    # Weight prep: block-diagonal per-basis linears, basis-mean folded in.
    eye_b = jnp.eye(b, dtype=params["w_last"].dtype)
    w_last_bd = jnp.kron(eye_b, params["w_last"])            # (B*Cel, B*Cec)
    w_cur_bd = jnp.kron(eye_b, params["w_cur"])              # (B*Cec, B*Cec)
    w_equ_stk = jnp.tile(params["w_equ"], (b, 1)) / b        # (B*Cec, Cout)

    grid = (n_pad // tile_n,)

    in_specs = [
        # streamed per-tile blocks
        pl.BlockSpec((tile_n, 1), lambda i: (i, 0)),          # idx
        pl.BlockSpec((tile_n, cic), lambda i: (i, 0)),        # cur_inv
        pl.BlockSpec((tile_n, b * cec), lambda i: (i, 0)),    # cur_equ packed
        # coarse arrays, VMEM-resident (constant index map -> loaded once)
        pl.BlockSpec((m_pad, cil), lambda i: (0, 0)),
        pl.BlockSpec((m_pad, b * cel), lambda i: (0, 0)),
        # weights (resident)
        pl.BlockSpec((b * cel, b * cec), lambda i: (0, 0)),
        pl.BlockSpec((b * cec, b * cec), lambda i: (0, 0)),
        pl.BlockSpec((cil, cout), lambda i: (0, 0)),
        pl.BlockSpec((cic, cout), lambda i: (0, 0)),
        pl.BlockSpec((b * cec, cout), lambda i: (0, 0)),
    ]

    out = pl.pallas_call(
        decoder_kernel,
        out_shape=jax.ShapeDtypeStruct((n_pad, cout), cur_inv.dtype),
        grid_spec=pltpu.PrefetchScalarGridSpec(
            num_scalar_prefetch=0,
            grid=grid,
            in_specs=in_specs,
            out_specs=pl.BlockSpec((tile_n, cout), lambda i: (i, 0)),
        ),
        compiler_params=pltpu.CompilerParams(
            dimension_semantics=("parallel",)),
    )(idx, cur_inv_p, cur_equ_p, last_inv_c, last_equ_c,
      w_last_bd, w_cur_bd, params["w_inv_l"], params["w_inv_c"], w_equ_stk)

    return out[:n]


# --------------------------- pure-JAX reference ------------------------------

def decoder_ref(last_inv, cur_inv, last_equ, cur_equ, upsampling, params,
                *, min_basis):
    li = nearest_upsample(last_inv, upsampling)
    le = nearest_upsample(last_equ, upsampling)[:, :min_basis, :]
    le = le @ params["w_last"]
    ce = cur_equ[:, :min_basis, :] @ params["w_cur"]
    equ = (ce * le).mean(1)
    com = jnp.concatenate([li, cur_inv, equ], axis=-1)
    w_mlp = jnp.concatenate(
        [params["w_inv_l"], params["w_inv_c"], params["w_equ"]], axis=0)
    return com @ w_mlp


# ----------------------------------- main ------------------------------------

if __name__ == "__main__":
    # Module hyper-parameters (consistent with the constructor).
    inv_channel_l = 16
    inv_channel_c = 16
    equ_channel_l = 8
    equ_channel_c = 8
    out_channel = 32
    L_in, L_out = 2, 1
    in_basis = (L_in + 1) ** 2               # 9
    basis = (L_out + 1) ** 2                 # 4
    min_basis = (min(L_in, L_out) + 1) ** 2  # 4

    n_coarse = 200
    n_fine = 1000        # not a multiple of tile_n -> exercises the padding path
    k_neighbors = 3
    tile_n = 512

    key = jax.random.PRNGKey(0)
    ks = jax.random.split(key, 10)

    last_inv = jax.random.normal(ks[0], (n_coarse, inv_channel_l), jnp.float32)
    cur_inv = jax.random.normal(ks[1], (n_fine, inv_channel_c), jnp.float32)
    last_equ = jax.random.normal(ks[2], (n_coarse, in_basis, equ_channel_l),
                                 jnp.float32)
    cur_equ = jax.random.normal(ks[3], (n_fine, basis, equ_channel_c),
                                jnp.float32)
    # Neighbor indices into [0, n_coarse]; index == n_coarse hits the zero shadow.
    upsampling = jax.random.randint(ks[4], (n_fine, k_neighbors), 0,
                                    n_coarse + 1, dtype=jnp.int32)

    # Deterministic parameter init, stored as (in, out) so y = x @ W
    # (== PyTorch's x @ weight.T with weight of shape (out, in)).
    def init_w(k, fan_in, fan_out):
        bound = 1.0 / np.sqrt(fan_in)
        return jax.random.uniform(k, (fan_in, fan_out), jnp.float32,
                                  -bound, bound)

    in_mlp = inv_channel_l + inv_channel_c + equ_channel_c
    w_mlp_full = init_w(ks[8], in_mlp, out_channel)
    params = {
        "w_last": init_w(ks[6], equ_channel_l, equ_channel_c),
        "w_cur": init_w(ks[7], equ_channel_c, equ_channel_c),
        # LastUnaryBlock linear, split into the three concat segments.
        "w_inv_l": w_mlp_full[:inv_channel_l],
        "w_inv_c": w_mlp_full[inv_channel_l:inv_channel_l + inv_channel_c],
        "w_equ": w_mlp_full[inv_channel_l + inv_channel_c:],
    }
    # TODO(synk): group_norm branch (UnaryBlock = Linear+GroupNorm+LeakyReLU) not
    # implemented; this script covers the group_norm=None path.

    out = decoder_forward(last_inv, cur_inv, last_equ, cur_equ, upsampling,
                          params, min_basis=min_basis, tile_n=tile_n)
    out = jax.block_until_ready(out)

    ref = decoder_ref(last_inv, cur_inv, last_equ, cur_equ, upsampling,
                      params, min_basis=min_basis)
    np.testing.assert_allclose(np.asarray(out), np.asarray(ref),
                               rtol=1e-4, atol=1e-4)
    print("KERNEL_OK")
</pallas_src>

<mosaic_0001>
module attributes {stable_mosaic.version = 11 : i64} {
  func.func @decoder_kernel(%arg0: i32, %arg1: memref<512x1xi32, #tpu.memory_space<vmem>>, %arg2: memref<512x16xf32, #tpu.memory_space<vmem>>, %arg3: memref<512x32xf32, #tpu.memory_space<vmem>>, %arg4: memref<200x16xf32, #tpu.memory_space<vmem>>, %arg5: memref<200x32xf32, #tpu.memory_space<vmem>>, %arg6: memref<32x32xf32, #tpu.memory_space<vmem>>, %arg7: memref<32x32xf32, #tpu.memory_space<vmem>>, %arg8: memref<16x32xf32, #tpu.memory_space<vmem>>, %arg9: memref<16x32xf32, #tpu.memory_space<vmem>>, %arg10: memref<32x32xf32, #tpu.memory_space<vmem>>, %arg11: memref<512x32xf32, #tpu.memory_space<vmem>>) attributes {dimension_semantics = [#tpu.dimension_semantics<parallel>], iteration_bounds = array<i64: 2>, scalar_prefetch = 0 : i64, scratch_operands = 0 : i64, tpu.core_type = #tpu.core_type<tc>, window_params = [{transform_indices = @transform_0, window_bounds = array<i64: 512, 1>}, {transform_indices = @transform_1, window_bounds = array<i64: 512, 16>}, {transform_indices = @transform_2, window_bounds = array<i64: 512, 32>}, {pipeline_mode = #tpu.pipeline_mode<synchronous>, transform_indices = @transform_3, window_bounds = array<i64: 200, 16>}, {pipeline_mode = #tpu.pipeline_mode<synchronous>, transform_indices = @transform_4, window_bounds = array<i64: 200, 32>}, {pipeline_mode = #tpu.pipeline_mode<synchronous>, transform_indices = @transform_5, window_bounds = array<i64: 32, 32>}, {pipeline_mode = #tpu.pipeline_mode<synchronous>, transform_indices = @transform_6, window_bounds = array<i64: 32, 32>}, {pipeline_mode = #tpu.pipeline_mode<synchronous>, transform_indices = @transform_7, window_bounds = array<i64: 16, 32>}, {pipeline_mode = #tpu.pipeline_mode<synchronous>, transform_indices = @transform_8, window_bounds = array<i64: 16, 32>}, {pipeline_mode = #tpu.pipeline_mode<synchronous>, transform_indices = @transform_9, window_bounds = array<i64: 32, 32>}, {transform_indices = @transform_10, window_bounds = array<i64: 512, 32>}]} {
    %c0 = arith.constant 0 : index
    %c0_0 = arith.constant 0 : index
    %0 = vector.load %arg1[%c0, %c0_0] : memref<512x1xi32, #tpu.memory_space<vmem>>, vector<512x1xi32>
    %1 = tpu.iota {dimensions = array<i32: 1>} : vector<512x200xi32>
    %2 = vector.broadcast %0 : vector<512x1xi32> to vector<512x200xi32>
    %3 = arith.cmpi eq, %1, %2 : vector<512x200xi32>
    %4 = arith.extui %3 : vector<512x200xi1> to vector<512x200xi32>
    %5 = arith.sitofp %4 : vector<512x200xi32> to vector<512x200xf32>
    %c0_1 = arith.constant 0 : index
    %c0_2 = arith.constant 0 : index
    %6 = vector.load %arg4[%c0_1, %c0_2] : memref<200x16xf32, #tpu.memory_space<vmem>>, vector<200x16xf32>
    %cst = arith.constant dense<0.000000e+00> : vector<512x16xf32>
    %7 = tpu.matmul %5, %6, %cst {dimension_numbers = #tpu.dot_dimension_numbers<[1], [0], [0], [1], [0, 0, 1, 1], [], []>} : vector<512x200xf32>, vector<200x16xf32>, vector<512x16xf32> -> vector<512x16xf32>
    %c0_3 = arith.constant 0 : index
    %c0_4 = arith.constant 0 : index
    %8 = vector.load %arg5[%c0_3, %c0_4] : memref<200x32xf32, #tpu.memory_space<vmem>>, vector<200x32xf32>
    %cst_5 = arith.constant dense<0.000000e+00> : vector<512x32xf32>
    %9 = tpu.matmul %5, %8, %cst_5 {dimension_numbers = #tpu.dot_dimension_numbers<[1], [0], [0], [1], [0, 0, 1, 1], [], []>} : vector<512x200xf32>, vector<200x32xf32>, vector<512x32xf32> -> vector<512x32xf32>
    %c0_6 = arith.constant 0 : index
    %c0_7 = arith.constant 0 : index
    %10 = vector.load %arg6[%c0_6, %c0_7] : memref<32x32xf32, #tpu.memory_space<vmem>>, vector<32x32xf32>
    %cst_8 = arith.constant dense<0.000000e+00> : vector<512x32xf32>
    %11 = tpu.matmul %9, %10, %cst_8 {dimension_numbers = #tpu.dot_dimension_numbers<[1], [0], [0], [1], [0, 0, 1, 1], [], []>} : vector<512x32xf32>, vector<32x32xf32>, vector<512x32xf32> -> vector<512x32xf32>
    %c0_9 = arith.constant 0 : index
    %c0_10 = arith.constant 0 : index
    %12 = vector.load %arg3[%c0_9, %c0_10] : memref<512x32xf32, #tpu.memory_space<vmem>>, vector<512x32xf32>
    %c0_11 = arith.constant 0 : index
    %c0_12 = arith.constant 0 : index
    %13 = vector.load %arg7[%c0_11, %c0_12] : memref<32x32xf32, #tpu.memory_space<vmem>>, vector<32x32xf32>
    %cst_13 = arith.constant dense<0.000000e+00> : vector<512x32xf32>
    %14 = tpu.matmul %12, %13, %cst_13 {dimension_numbers = #tpu.dot_dimension_numbers<[1], [0], [0], [1], [0, 0, 1, 1], [], []>} : vector<512x32xf32>, vector<32x32xf32>, vector<512x32xf32> -> vector<512x32xf32>
    %15 = arith.mulf %11, %14 : vector<512x32xf32>
    %c0_14 = arith.constant 0 : index
    %c0_15 = arith.constant 0 : index
    %16 = vector.load %arg8[%c0_14, %c0_15] : memref<16x32xf32, #tpu.memory_space<vmem>>, vector<16x32xf32>
    %cst_16 = arith.constant dense<0.000000e+00> : vector<512x32xf32>
    %17 = tpu.matmul %7, %16, %cst_16 {dimension_numbers = #tpu.dot_dimension_numbers<[1], [0], [0], [1], [0, 0, 1, 1], [], []>} : vector<512x16xf32>, vector<16x32xf32>, vector<512x32xf32> -> vector<512x32xf32>
    %c0_17 = arith.constant 0 : index
    %c0_18 = arith.constant 0 : index
    %18 = vector.load %arg2[%c0_17, %c0_18] : memref<512x16xf32, #tpu.memory_space<vmem>>, vector<512x16xf32>
    %c0_19 = arith.constant 0 : index
    %c0_20 = arith.constant 0 : index
    %19 = vector.load %arg9[%c0_19, %c0_20] : memref<16x32xf32, #tpu.memory_space<vmem>>, vector<16x32xf32>
    %cst_21 = arith.constant dense<0.000000e+00> : vector<512x32xf32>
    %20 = tpu.matmul %18, %19, %cst_21 {dimension_numbers = #tpu.dot_dimension_numbers<[1], [0], [0], [1], [0, 0, 1, 1], [], []>} : vector<512x16xf32>, vector<16x32xf32>, vector<512x32xf32> -> vector<512x32xf32>
    %21 = arith.addf %17, %20 : vector<512x32xf32>
    %c0_22 = arith.constant 0 : index
    %c0_23 = arith.constant 0 : index
    %22 = vector.load %arg10[%c0_22, %c0_23] : memref<32x32xf32, #tpu.memory_space<vmem>>, vector<32x32xf32>
    %cst_24 = arith.constant dense<0.000000e+00> : vector<512x32xf32>
    %23 = tpu.matmul %15, %22, %cst_24 {dimension_numbers = #tpu.dot_dimension_numbers<[1], [0], [0], [1], [0, 0, 1, 1], [], []>} : vector<512x32xf32>, vector<32x32xf32>, vector<512x32xf32> -> vector<512x32xf32>
    %24 = arith.addf %21, %23 : vector<512x32xf32>
    %c0_25 = arith.constant 0 : index
    %c0_26 = arith.constant 0 : index
    %25 = vector.load %arg11[%c0_25, %c0_26] : memref<512x32xf32, #tpu.memory_space<vmem>>, vector<512x32xf32>
    tpu.vector_store %arg11[%c0_25, %c0_26], %24 {strides = array<i32>} : memref<512x32xf32, #tpu.memory_space<vmem>>, vector<512x32xf32>,
    return
  }
  func.func @transform_0(%arg0: i32) -> (i32, i32) {
    %c0_i32 = arith.constant 0 : i32
    %c0_i32_0 = arith.constant 0 : i32
    return %arg0, %c0_i32 : i32, i32
  }
  func.func @transform_1(%arg0: i32) -> (i32, i32) {
    %c0_i32 = arith.constant 0 : i32
    %c0_i32_0 = arith.constant 0 : i32
    return %arg0, %c0_i32 : i32, i32
  }
  func.func @transform_2(%arg0: i32) -> (i32, i32) {
    %c0_i32 = arith.constant 0 : i32
    %c0_i32_0 = arith.constant 0 : i32
    return %arg0, %c0_i32 : i32, i32
  }
  func.func @transform_3(%arg0: i32) -> (i32, i32) {
    %c0_i32 = arith.constant 0 : i32
    %c0_i32_0 = arith.constant 0 : i32
    %c0_i32_1 = arith.constant 0 : i32
    return %c0_i32, %c0_i32_0 : i32, i32
  }
  func.func @transform_4(%arg0: i32) -> (i32, i32) {
    %c0_i32 = arith.constant 0 : i32
    %c0_i32_0 = arith.constant 0 : i32
    %c0_i32_1 = arith.constant 0 : i32
    return %c0_i32, %c0_i32_0 : i32, i32
  }
  func.func @transform_5(%arg0: i32) -> (i32, i32) {
    %c0_i32 = arith.constant 0 : i32
    %c0_i32_0 = arith.constant 0 : i32
    %c0_i32_1 = arith.constant 0 : i32
    return %c0_i32, %c0_i32_0 : i32, i32
  }
  func.func @transform_6(%arg0: i32) -> (i32, i32) {
    %c0_i32 = arith.constant 0 : i32
    %c0_i32_0 = arith.constant 0 : i32
    %c0_i32_1 = arith.constant 0 : i32
    return %c0_i32, %c0_i32_0 : i32, i32
  }
  func.func @transform_7(%arg0: i32) -> (i32, i32) {
    %c0_i32 = arith.constant 0 : i32
    %c0_i32_0 = arith.constant 0 : i32
    %c0_i32_1 = arith.constant 0 : i32
    return %c0_i32, %c0_i32_0 : i32, i32
  }
  func.func @transform_8(%arg0: i32) -> (i32, i32) {
    %c0_i32 = arith.constant 0 : i32
    %c0_i32_0 = arith.constant 0 : i32
    %c0_i32_1 = arith.constant 0 : i32
    return %c0_i32, %c0_i32_0 : i32, i32
  }
  func.func @transform_9(%arg0: i32) -> (i32, i32) {
    %c0_i32 = arith.constant 0 : i32
    %c0_i32_0 = arith.constant 0 : i32
    %c0_i32_1 = arith.constant 0 : i32
    return %c0_i32, %c0_i32_0 : i32, i32
  }
  func.func @transform_10(%arg0: i32) -> (i32, i32) {
    %c0_i32 = arith.constant 0 : i32
    %c0_i32_0 = arith.constant 0 : i32
    return %arg0, %c0_i32 : i32, i32
  }
}

</mosaic_0001>

<llo_original>
// kernel: tpu_custom_call.1
$region0: #{tpu_custom_call.1}
  #allocation0 [shape = 'u32[]', space=smem, size = 0x4, offset = 0x4, fixed_abs, tag = 'smem constant byte address 0x4 - core index']
  #allocation1 [shape = 'u32[144,128]{1,0:T(1,128)}', space=vmem, size = 0x12000, scoped, tag = 'internal scratch']
  %s0 = inlined_call_operand.vmem [shape: s32[1024,1], index: 0, kind: input, shape index: {}]
  %s1 = inlined_call_operand.vmem [shape: f32[1024,16], index: 1, kind: input, shape index: {}]
  %s2 = inlined_call_operand.vmem [shape: f32[1024,32], index: 2, kind: input, shape index: {}]
  %s3 = inlined_call_operand.vmem [shape: f32[200,16], index: 3, kind: input, shape index: {}]
  %s4 = inlined_call_operand.vmem [shape: f32[200,32], index: 4, kind: input, shape index: {}]
  %s5 = inlined_call_operand.vmem [shape: f32[32,32], index: 5, kind: input, shape index: {}]
  %s6 = inlined_call_operand.vmem [shape: f32[32,32], index: 6, kind: input, shape index: {}]
  %s7 = inlined_call_operand.vmem [shape: f32[16,32], index: 7, kind: input, shape index: {}]
  %s8 = inlined_call_operand.vmem [shape: f32[16,32], index: 8, kind: input, shape index: {}]
  %s9 = inlined_call_operand.vmem [shape: f32[32,32], index: 9, kind: input, shape index: {}]
  %s10 = inlined_call_operand.vmem [shape: f32[1024,32], index: 10, kind: output, shape index: {}]
  %s11 = sld [smem:[#allocation0]]
  $region73: #{tpu_custom_call.1} parent=0
    _
  %s13 = ssub.s32 1, %s11
  %s14 = scalar_select 0, %s13, %s11
  loop: start=0, step=1, limit=4
  $region2: #{tpu_custom_call.1} parent=0 // loop_pre_header
    _
  $region3: #{tpu_custom_call.1} parent=0 // loop_header
    %s16 = sphi 0, %s20
    %p17 = scmp.ge.s32.totalorder %s16, 4
    %s26 = sphi 0, %s28
    %s29 = sphi 0, %s26
    %s30 = sphi 0, %s29
    %s46 = sphi 0, %s30
    %s52 = sphi 0, %s54
    %s55 = sphi 0, %s52
    %s56 = sphi 0, %s55
    %s72 = sphi 0, %s56
    %s78 = sphi 0, %s80
    %s81 = sphi 0, %s78
    %s82 = sphi 0, %s81
    %s98 = sphi 0, %s82
    %s102 = sphi 0, %s102
    %s104 = sphi 0, %s102
    %s105 = sphi 0, %s104
    %s119 = sphi 0, %s105
    %s123 = sphi 0, %s123
    %s125 = sphi 0, %s123
    %s126 = sphi 0, %s125
    %s140 = sphi 0, %s126
    %s144 = sphi 0, %s144
    %s146 = sphi 0, %s144
    %s147 = sphi 0, %s146
    %s161 = sphi 0, %s147
    %s165 = sphi 0, %s165
    %s167 = sphi 0, %s165
    %s168 = sphi 0, %s167
    %s182 = sphi 0, %s168
    %s186 = sphi 0, %s186
    %s188 = sphi 0, %s186
    %s189 = sphi 0, %s188
    %s203 = sphi 0, %s189
    %s207 = sphi 0, %s207
    %s209 = sphi 0, %s207
    %s210 = sphi 0, %s209
    %s224 = sphi 0, %s210
    %s228 = sphi 0, %s228
    %s230 = sphi 0, %s228
    %s231 = sphi 0, %s230
    %s245 = sphi 0, %s231
    %s251 = sphi 0, %s253
    %s254 = sphi 0, %s251
    %s255 = sphi 0, %s254
    %s271 = sphi 0, %s255
  $region4: #{tpu_custom_call.1} parent=0 // loop_header_branch
    %19 = sbr.rel (%p17) target = $region8
  $region5: #{tpu_custom_call.1} parent=0 // loop_body
    %s21 = ssub.s32 %s16, 1
    %s22 = ssub.s32 %s16, 2
    %s23 = sadd.s32 %s16, 1
    %s24 = ssub.s32 %s16, %s23
    %p25 = scmp.eq.s32.totalorder %s24, 0
    %s27 = sadd.s32 %s26, 1
    %s28 = scalar_select %p25, %s26, %s27
    %p31 = pneg %p25
    %p32 = scmp.eq.s32.totalorder %s16, 1
    %p33 = por %p31, %p32
    %p34 = scmp.ne.s32.totalorder %s26, %s29
    %p35 = scmp.eq.s32.totalorder %s16, 0
    %p36 = por %p34, %p35
    %p37 = scmp.ne.s32.totalorder %s26, %s29
    %p38 = scmp.eq.s32.totalorder %s21, 1
    %p39 = por %p37, %p38
    %p40 = scmp.ne.s32.totalorder %s29, %s30
    %p41 = scmp.eq.s32.totalorder %s21, 0
    %p42 = por %p40, %p41
    %p43 = scmp.ne.s32.totalorder %s29, %s30
    %p44 = scmp.eq.s32.totalorder %s22, 1
    %p45 = por %p43, %p44
    %p47 = scmp.ne.s32.totalorder %s30, %s46
    %p48 = scmp.eq.s32.totalorder %s22, 0
    %p49 = por %p47, %p48
    %s50 = ssub.s32 %s16, %s23
    %p51 = scmp.eq.s32.totalorder %s50, 0
    %s53 = sadd.s32 %s52, 1
    %s54 = scalar_select %p51, %s52, %s53
    %p57 = pneg %p51
    %p58 = scmp.eq.s32.totalorder %s16, 1
    %p59 = por %p57, %p58
    %p60 = scmp.ne.s32.totalorder %s52, %s55
    %p61 = scmp.eq.s32.totalorder %s16, 0
    %p62 = por %p60, %p61
    %p63 = scmp.ne.s32.totalorder %s52, %s55
    %p64 = scmp.eq.s32.totalorder %s21, 1
    %p65 = por %p63, %p64
    %p66 = scmp.ne.s32.totalorder %s55, %s56
    %p67 = scmp.eq.s32.totalorder %s21, 0
    %p68 = por %p66, %p67
    %p69 = scmp.ne.s32.totalorder %s55, %s56
    %p70 = scmp.eq.s32.totalorder %s22, 1
    %p71 = por %p69, %p70
    %p73 = scmp.ne.s32.totalorder %s56, %s72
    %p74 = scmp.eq.s32.totalorder %s22, 0
    %p75 = por %p73, %p74
    %s76 = ssub.s32 %s16, %s23
    %p77 = scmp.eq.s32.totalorder %s76, 0
    %s79 = sadd.s32 %s78, 1
    %s80 = scalar_select %p77, %s78, %s79
    %p83 = pneg %p77
    %p84 = scmp.eq.s32.totalorder %s16, 1
    %p85 = por %p83, %p84
    %p86 = scmp.ne.s32.totalorder %s78, %s81
    %p87 = scmp.eq.s32.totalorder %s16, 0
    %p88 = por %p86, %p87
    %p89 = scmp.ne.s32.totalorder %s78, %s81
    %p90 = scmp.eq.s32.totalorder %s21, 1
    %p91 = por %p89, %p90
    %p92 = scmp.ne.s32.totalorder %s81, %s82
    %p93 = scmp.eq.s32.totalorder %s21, 0
    %p94 = por %p92, %p93
    %p95 = scmp.ne.s32.totalorder %s81, %s82
    %p96 = scmp.eq.s32.totalorder %s22, 1
    %p97 = por %p95, %p96
    %p99 = scmp.ne.s32.totalorder %s82, %s98
    %p100 = scmp.eq.s32.totalorder %s22, 0
    %p101 = por %p99, %p100
    %s103 = sadd.s32 %s102, 1
    %p106 = scmp.eq.s32.totalorder %s16, 1
    %p107 = scmp.ne.s32.totalorder %s102, %s104
    %p108 = scmp.eq.s32.totalorder %s16, 0
    %p109 = por %p107, %p108
    %p110 = scmp.ne.s32.totalorder %s102, %s104
    %p111 = scmp.eq.s32.totalorder %s21, 1
    %p112 = por %p110, %p111
    %p113 = scmp.ne.s32.totalorder %s104, %s105
    %p114 = scmp.eq.s32.totalorder %s21, 0
    %p115 = por %p113, %p114
    %p116 = scmp.ne.s32.totalorder %s104, %s105
    %p117 = scmp.eq.s32.totalorder %s22, 1
    %p118 = por %p116, %p117
    %p120 = scmp.ne.s32.totalorder %s105, %s119
    %p121 = scmp.eq.s32.totalorder %s22, 0
    %p122 = por %p120, %p121
    %s124 = sadd.s32 %s123, 1
    %p127 = scmp.eq.s32.totalorder %s16, 1
    %p128 = scmp.ne.s32.totalorder %s123, %s125
    %p129 = scmp.eq.s32.totalorder %s16, 0
    %p130 = por %p128, %p129
    %p131 = scmp.ne.s32.totalorder %s123, %s125
    %p132 = scmp.eq.s32.totalorder %s21, 1
    %p133 = por %p131, %p132
    %p134 = scmp.ne.s32.totalorder %s125, %s126
    %p135 = scmp.eq.s32.totalorder %s21, 0
    %p136 = por %p134, %p135
    %p137 = scmp.ne.s32.totalorder %s125, %s126
    %p138 = scmp.eq.s32.totalorder %s22, 1
    %p139 = por %p137, %p138
    %p141 = scmp.ne.s32.totalorder %s126, %s140
    %p142 = scmp.eq.s32.totalorder %s22, 0
    %p143 = por %p141, %p142
    %s145 = sadd.s32 %s144, 1
    %p148 = scmp.eq.s32.totalorder %s16, 1
    %p149 = scmp.ne.s32.totalorder %s144, %s146
    %p150 = scmp.eq.s32.totalorder %s16, 0
    %p151 = por %p149, %p150
    %p152 = scmp.ne.s32.totalorder %s144, %s146
    %p153 = scmp.eq.s32.totalorder %s21, 1
    %p154 = por %p152, %p153
    %p155 = scmp.ne.s32.totalorder %s146, %s147
    %p156 = scmp.eq.s32.totalorder %s21, 0
    %p157 = por %p155, %p156
    %p158 = scmp.ne.s32.totalorder %s146, %s147
    %p159 = scmp.eq.s32.totalorder %s22, 1
    %p160 = por %p158, %p159
    %p162 = scmp.ne.s32.totalorder %s147, %s161
    %p163 = scmp.eq.s32.totalorder %s22, 0
    %p164 = por %p162, %p163
    %s166 = sadd.s32 %s165, 1
    %p169 = scmp.eq.s32.totalorder %s16, 1
    %p170 = scmp.ne.s32.totalorder %s165, %s167
    %p171 = scmp.eq.s32.totalorder %s16, 0
    %p172 = por %p170, %p171
    %p173 = scmp.ne.s32.totalorder %s165, %s167
    %p174 = scmp.eq.s32.totalorder %s21, 1
    %p175 = por %p173, %p174
    %p176 = scmp.ne.s32.totalorder %s167, %s168
    %p177 = scmp.eq.s32.totalorder %s21, 0
    %p178 = por %p176, %p177
    %p179 = scmp.ne.s32.totalorder %s167, %s168
    %p180 = scmp.eq.s32.totalorder %s22, 1
    %p181 = por %p179, %p180
    %p183 = scmp.ne.s32.totalorder %s168, %s182
    %p184 = scmp.eq.s32.totalorder %s22, 0
    %p185 = por %p183, %p184
    %s187 = sadd.s32 %s186, 1
    %p190 = scmp.eq.s32.totalorder %s16, 1
    %p191 = scmp.ne.s32.totalorder %s186, %s188
    %p192 = scmp.eq.s32.totalorder %s16, 0
    %p193 = por %p191, %p192
    %p194 = scmp.ne.s32.totalorder %s186, %s188
    %p195 = scmp.eq.s32.totalorder %s21, 1
    %p196 = por %p194, %p195
    %p197 = scmp.ne.s32.totalorder %s188, %s189
    %p198 = scmp.eq.s32.totalorder %s21, 0
    %p199 = por %p197, %p198
    %p200 = scmp.ne.s32.totalorder %s188, %s189
    %p201 = scmp.eq.s32.totalorder %s22, 1
    %p202 = por %p200, %p201
    %p204 = scmp.ne.s32.totalorder %s189, %s203
    %p205 = scmp.eq.s32.totalorder %s22, 0
    %p206 = por %p204, %p205
    %s208 = sadd.s32 %s207, 1
    %p211 = scmp.eq.s32.totalorder %s16, 1
    %p212 = scmp.ne.s32.totalorder %s207, %s209
    %p213 = scmp.eq.s32.totalorder %s16, 0
    %p214 = por %p212, %p213
    %p215 = scmp.ne.s32.totalorder %s207, %s209
    %p216 = scmp.eq.s32.totalorder %s21, 1
    %p217 = por %p215, %p216
    %p218 = scmp.ne.s32.totalorder %s209, %s210
    %p219 = scmp.eq.s32.totalorder %s21, 0
    %p220 = por %p218, %p219
    %p221 = scmp.ne.s32.totalorder %s209, %s210
    %p222 = scmp.eq.s32.totalorder %s22, 1
    %p223 = por %p221, %p222
    %p225 = scmp.ne.s32.totalorder %s210, %s224
    %p226 = scmp.eq.s32.totalorder %s22, 0
    %p227 = por %p225, %p226
    %s229 = sadd.s32 %s228, 1
    %p232 = scmp.eq.s32.totalorder %s16, 1
    %p233 = scmp.ne.s32.totalorder %s228, %s230
    %p234 = scmp.eq.s32.totalorder %s16, 0
    %p235 = por %p233, %p234
    %p236 = scmp.ne.s32.totalorder %s228, %s230
    %p237 = scmp.eq.s32.totalorder %s21, 1
    %p238 = por %p236, %p237
    %p239 = scmp.ne.s32.totalorder %s230, %s231
    %p240 = scmp.eq.s32.totalorder %s21, 0
    %p241 = por %p239, %p240
    %p242 = scmp.ne.s32.totalorder %s230, %s231
    %p243 = scmp.eq.s32.totalorder %s22, 1
    %p244 = por %p242, %p243
    %p246 = scmp.ne.s32.totalorder %s231, %s245
    %p247 = scmp.eq.s32.totalorder %s22, 0
    %p248 = por %p246, %p247
    %s249 = ssub.s32 %s16, %s23
    %p250 = scmp.eq.s32.totalorder %s249, 0
    %s252 = sadd.s32 %s251, 1
    %s253 = scalar_select %p250, %s251, %s252
    %p256 = pneg %p250
    %p257 = scmp.eq.s32.totalorder %s16, 1
    %p258 = por %p256, %p257
    %p259 = scmp.ne.s32.totalorder %s251, %s254
    %p260 = scmp.eq.s32.totalorder %s16, 0
    %p261 = por %p259, %p260
    %p262 = scmp.ne.s32.totalorder %s251, %s254
    %p263 = scmp.eq.s32.totalorder %s21, 1
    %p264 = por %p262, %p263
    %p265 = scmp.ne.s32.totalorder %s254, %s255
    %p266 = scmp.eq.s32.totalorder %s21, 0
    %p267 = por %p265, %p266
    %p268 = scmp.ne.s32.totalorder %s254, %s255
    %p269 = scmp.eq.s32.totalorder %s22, 1
    %p270 = por %p268, %p269
    %p272 = scmp.ne.s32.totalorder %s255, %s271
    %p273 = scmp.eq.s32.totalorder %s22, 0
    %p274 = por %p272, %p273
    %p275 = scmp.le.s32.totalorder 1, %s16
    %p276 = scmp.lt.s32.totalorder %s16, 3
    %p277 = pnand %p275, %p276
    %p278 = pneg %p277
    // Predicated region
    $region9: #{tpu_custom_call.1} parent=5 // pred_check
      _
    $region10: #{tpu_custom_call.1} parent=5 // pred_check_branch
      %280 = sbr.rel (%p277) target = $region12
    $region11: #{tpu_custom_call.1} parent=5 // pred_region
      %s281 = ssub.s32 %s16, 1
      // Predicated region
      $region13: #{tpu_custom_call.1} parent=11 // pred_check
        %p282 = pneg %p115
      $region14: #{tpu_custom_call.1} parent=11 // pred_check_branch
        %284 = sbr.rel (%p282) target = $region16
      $region15: #{tpu_custom_call.1} parent=11 // pred_region
        _
      $region16: #{tpu_custom_call.1} parent=11 // pred_fallthru
        _
      // Predicated region
      $region17: #{tpu_custom_call.1} parent=11 // pred_check
        %p285 = pneg %p136
      $region18: #{tpu_custom_call.1} parent=11 // pred_check_branch
        %287 = sbr.rel (%p285) target = $region20
      $region19: #{tpu_custom_call.1} parent=11 // pred_region
        _
      $region20: #{tpu_custom_call.1} parent=11 // pred_fallthru
        _
      // Predicated region
      $region21: #{tpu_custom_call.1} parent=11 // pred_check
        %p288 = pneg %p157
      $region22: #{tpu_custom_call.1} parent=11 // pred_check_branch
        %290 = sbr.rel (%p288) target = $region24
      $region23: #{tpu_custom_call.1} parent=11 // pred_region
        _
      $region24: #{tpu_custom_call.1} parent=11 // pred_fallthru
        _
      // Predicated region
      $region25: #{tpu_custom_call.1} parent=11 // pred_check
        %p291 = pneg %p178
      $region26: #{tpu_custom_call.1} parent=11 // pred_check_branch
        %293 = sbr.rel (%p291) target = $region28
      $region27: #{tpu_custom_call.1} parent=11 // pred_region
        _
      $region28: #{tpu_custom_call.1} parent=11 // pred_fallthru
        _
      // Predicated region
      $region29: #{tpu_custom_call.1} parent=11 // pred_check
        %p294 = pneg %p199
      $region30: #{tpu_custom_call.1} parent=11 // pred_check_branch
        %296 = sbr.rel (%p294) target = $region32
      $region31: #{tpu_custom_call.1} parent=11 // pred_region
        _
      $region32: #{tpu_custom_call.1} parent=11 // pred_fallthru
        _
      // Predicated region
      $region33: #{tpu_custom_call.1} parent=11 // pred_check
        %p297 = pneg %p220
      $region34: #{tpu_custom_call.1} parent=11 // pred_check_branch
        %299 = sbr.rel (%p297) target = $region36
      $region35: #{tpu_custom_call.1} parent=11 // pred_region
        _
      $region36: #{tpu_custom_call.1} parent=11 // pred_fallthru
        _
      // Predicated region
      $region37: #{tpu_custom_call.1} parent=11 // pred_check
        %p300 = pneg %p241
      $region38: #{tpu_custom_call.1} parent=11 // pred_check_branch
        %302 = sbr.rel (%p300) target = $region40
      $region39: #{tpu_custom_call.1} parent=11 // pred_region
        _
      $region40: #{tpu_custom_call.1} parent=11 // pred_fallthru
        _
    $region12: #{tpu_custom_call.1} parent=5 // pred_fallthru
      _
    %p303 = scmp.lt.s32.totalorder %s16, 2
    // Predicated region
    $region41: #{tpu_custom_call.1} parent=5 // pred_check
      %p304 = pneg %p303
    $region42: #{tpu_custom_call.1} parent=5 // pred_check_branch
      %306 = sbr.rel (%p304) target = $region44
    $region43: #{tpu_custom_call.1} parent=5 // pred_region
      // Predicated region
      $region45: #{tpu_custom_call.1} parent=43 // pred_check
        %p307 = pneg %p36
      $region46: #{tpu_custom_call.1} parent=43 // pred_check_branch
        %309 = sbr.rel (%p307) target = $region48
      $region47: #{tpu_custom_call.1} parent=43 // pred_region
        %s310 = smul.u32 64, %s16
        %p311 = scmp.lt.s32.totalorder %s310, 127
        %s312 = scalar_select %p311, %s310, 127
        %s313 = smul.addr %s312, 8
        %s314 = scalar_lea.vmem %s0, %s313
        %s315 = smul.u32 64, %s16
      $region48: #{tpu_custom_call.1} parent=43 // pred_fallthru
        _
      // Predicated region
      $region49: #{tpu_custom_call.1} parent=43 // pred_check
        %p316 = pneg %p62
      $region50: #{tpu_custom_call.1} parent=43 // pred_check_branch
        %318 = sbr.rel (%p316) target = $region52
      $region51: #{tpu_custom_call.1} parent=43 // pred_region
        %s319 = smul.u32 64, %s16
        %p320 = scmp.lt.s32.totalorder %s319, 127
        %s321 = scalar_select %p320, %s319, 127
        %s322 = smul.addr %s321, 8
        %s323 = scalar_lea.vmem %s1, %s322
        %s324 = smul.u32 64, %s16
      $region52: #{tpu_custom_call.1} parent=43 // pred_fallthru
        _
      // Predicated region
      $region53: #{tpu_custom_call.1} parent=43 // pred_check
        %p325 = pneg %p88
      $region54: #{tpu_custom_call.1} parent=43 // pred_check_branch
        %327 = sbr.rel (%p325) target = $region56
      $region55: #{tpu_custom_call.1} parent=43 // pred_region
        %s328 = smul.u32 64, %s16
        %p329 = scmp.lt.s32.totalorder %s328, 127
        %s330 = scalar_select %p329, %s328, 127
        %s331 = smul.addr %s330, 8
        %s332 = scalar_lea.vmem %s2, %s331
        %s333 = smul.u32 64, %s16
      $region56: #{tpu_custom_call.1} parent=43 // pred_fallthru
        _
    $region44: #{tpu_custom_call.1} parent=5 // pred_fallthru
      _
    %p334 = scmp.le.s32.totalorder 1, %s16
    %p335 = scmp.lt.s32.totalorder %s16, 3
    %p336 = pnand %p334, %p335
    %p337 = pneg %p336
    // Predicated region
    $region57: #{tpu_custom_call.1} parent=5 // pred_check
      _
    $region58: #{tpu_custom_call.1} parent=5 // pred_check_branch
      %339 = sbr.rel (%p336) target = $region60
    $region59: #{tpu_custom_call.1} parent=5 // pred_region
      %s340 = ssub.s32 %s16, 1
      %s341 = smul.u32 64, %s21
      %p342 = scmp.lt.s32.totalorder %s341, 127
      %s343 = scalar_select %p342, %s341, 127
      %s344 = smul.addr %s343, 8
      %s345 = scalar_lea.vmem %s0, %s344
      %p346 = pneg %p42
      %p347 = pneg %p39
      %s348 = smul.u32 64, %s21
      %p349 = scmp.lt.s32.totalorder %s348, 127
      %s350 = scalar_select %p349, %s348, 127
      %s351 = smul.addr %s350, 8
      %s352 = scalar_lea.vmem %s1, %s351
      %p353 = pneg %p68
      %p354 = pneg %p65
      %s355 = smul.u32 64, %s21
      %p356 = scmp.lt.s32.totalorder %s355, 127
      %s357 = scalar_select %p356, %s355, 127
      %s358 = smul.addr %s357, 8
      %s359 = scalar_lea.vmem %s2, %s358
      %p360 = pneg %p94
      %p361 = pneg %p91
      %p362 = pneg %p115
      %p363 = pneg %p112
      %p364 = pneg %p136
      %p365 = pneg %p133
      %p366 = pneg %p157
      %p367 = pneg %p154
      %p368 = pneg %p178
      %p369 = pneg %p175
      %p370 = pneg %p199
      %p371 = pneg %p196
      %p372 = pneg %p220
      %p373 = pneg %p217
      %p374 = pneg %p241
      %p375 = pneg %p238
      %p376 = pneg %p267
      %p377 = pneg %p264
      %s378 = smul.u32 64, %s21
      %p379 = scmp.lt.s32.totalorder %s378, 127
      %s380 = scalar_select %p379, %s378, 127
      %s381 = smul.addr %s380, 8
      %s382 = scalar_lea.vmem %s10, %s381
      %s383 = smul.u32 64, %s21
      %p384 = scmp.lt.s32.totalorder %s383, 127
      %s385 = scalar_select %p384, %s383, 127
      %s386 = smul.addr %s385, 8
      %s387 = scalar_lea.vmem %s0, %s386
      %s388 = smul.u32 64, %s21
      %s389 = smul.u32 64, %s21
      %p390 = scmp.lt.s32.totalorder %s389, 127
      %s391 = scalar_select %p390, %s389, 127
      %s392 = smul.addr %s391, 8
      %s393 = scalar_lea.vmem %s1, %s392
      %s394 = smul.u32 64, %s21
      %s395 = smul.u32 64, %s21
      %p396 = scmp.lt.s32.totalorder %s395, 127
      %s397 = scalar_select %p396, %s395, 127
      %s398 = smul.addr %s397, 8
      %s399 = scalar_lea.vmem %s2, %s398
      %s400 = smul.u32 64, %s21
      %s401 = smul.u32 64, %s21
      %p402 = scmp.lt.s32.totalorder %s401, 127
      %s403 = scalar_select %p402, %s401, 127
      %s404 = smul.addr %s403, 8
      %s405 = scalar_lea.vmem %s10, %s404
      %s406 = smul.u32 64, %s21
      %v407 = vld [vmem:[%s387] sm:$0xff]
      %v408 = vld [vmem:[%s387 + $0x8] sm:$0xff]
      %v409 = vld [vmem:[%s387 + $0x10] sm:$0xff]
      %v410 = vld [vmem:[%s387 + $0x18] sm:$0xff]
      %v411 = vld [vmem:[%s387 + $0x20] sm:$0xff]
      %v412 = vld [vmem:[%s387 + $0x28] sm:$0xff]
      %v413 = vld [vmem:[%s387 + $0x30] sm:$0xff]
      %v414 = vld [vmem:[%s387 + $0x38] sm:$0xff]
      %v415 = vld [vmem:[%s387 + $0x40] sm:$0xff]
      %v416 = vld [vmem:[%s387 + $0x48] sm:$0xff]
      %v417 = vld [vmem:[%s387 + $0x50] sm:$0xff]
      %v418 = vld [vmem:[%s387 + $0x58] sm:$0xff]
      %v419 = vld [vmem:[%s387 + $0x60] sm:$0xff]
      %v420 = vld [vmem:[%s387 + $0x68] sm:$0xff]
      %v421 = vld [vmem:[%s387 + $0x70] sm:$0xff]
      %v422 = vld [vmem:[%s387 + $0x78] sm:$0xff]
      %v423 = vld [vmem:[%s387 + $0x80] sm:$0xff]
      %v424 = vld [vmem:[%s387 + $0x88] sm:$0xff]
      %v425 = vld [vmem:[%s387 + $0x90] sm:$0xff]
      %v426 = vld [vmem:[%s387 + $0x98] sm:$0xff]
      %v427 = vld [vmem:[%s387 + $0xa0] sm:$0xff]
      %v428 = vld [vmem:[%s387 + $0xa8] sm:$0xff]
      %v429 = vld [vmem:[%s387 + $0xb0] sm:$0xff]
      %v430 = vld [vmem:[%s387 + $0xb8] sm:$0xff]
      %v431 = vld [vmem:[%s387 + $0xc0] sm:$0xff]
      %v432 = vld [vmem:[%s387 + $0xc8] sm:$0xff]
      %v433 = vld [vmem:[%s387 + $0xd0] sm:$0xff]
      %v434 = vld [vmem:[%s387 + $0xd8] sm:$0xff]
      %v435 = vld [vmem:[%s387 + $0xe0] sm:$0xff]
      %v436 = vld [vmem:[%s387 + $0xe8] sm:$0xff]
      %v437 = vld [vmem:[%s387 + $0xf0] sm:$0xff]
      %v438 = vld [vmem:[%s387 + $0xf8] sm:$0xff]
      %v439 = vld [vmem:[%s387 + $0x100] sm:$0xff]
      %v440 = vld [vmem:[%s387 + $0x108] sm:$0xff]
      %v441 = vld [vmem:[%s387 + $0x110] sm:$0xff]
      %v442 = vld [vmem:[%s387 + $0x118] sm:$0xff]
      %v443 = vld [vmem:[%s387 + $0x120] sm:$0xff]
      %v444 = vld [vmem:[%s387 + $0x128] sm:$0xff]
      %v445 = vld [vmem:[%s387 + $0x130] sm:$0xff]
      %v446 = vld [vmem:[%s387 + $0x138] sm:$0xff]
      %v447 = vld [vmem:[%s387 + $0x140] sm:$0xff]
      %v448 = vld [vmem:[%s387 + $0x148] sm:$0xff]
      %v449 = vld [vmem:[%s387 + $0x150] sm:$0xff]
      %v450 = vld [vmem:[%s387 + $0x158] sm:$0xff]
      %v451 = vld [vmem:[%s387 + $0x160] sm:$0xff]
      %v452 = vld [vmem:[%s387 + $0x168] sm:$0xff]
      %v453 = vld [vmem:[%s387 + $0x170] sm:$0xff]
      %v454 = vld [vmem:[%s387 + $0x178] sm:$0xff]
      %v455 = vld [vmem:[%s387 + $0x180] sm:$0xff]
      %v456 = vld [vmem:[%s387 + $0x188] sm:$0xff]
      %v457 = vld [vmem:[%s387 + $0x190] sm:$0xff]
      %v458 = vld [vmem:[%s387 + $0x198] sm:$0xff]
      %v459 = vld [vmem:[%s387 + $0x1a0] sm:$0xff]
      %v460 = vld [vmem:[%s387 + $0x1a8] sm:$0xff]
      %v461 = vld [vmem:[%s387 + $0x1b0] sm:$0xff]
      %v462 = vld [vmem:[%s387 + $0x1b8] sm:$0xff]
      %v463 = vld [vmem:[%s387 + $0x1c0] sm:$0xff]
      %v464 = vld [vmem:[%s387 + $0x1c8] sm:$0xff]
      %v465 = vld [vmem:[%s387 + $0x1d0] sm:$0xff]
      %v466 = vld [vmem:[%s387 + $0x1d8] sm:$0xff]
      %v467 = vld [vmem:[%s387 + $0x1e0] sm:$0xff]
      %v468 = vld [vmem:[%s387 + $0x1e8] sm:$0xff]
      %v469 = vld [vmem:[%s387 + $0x1f0] sm:$0xff]
      %v470 = vld [vmem:[%s387 + $0x1f8] sm:$0xff]
      %v471 = vlaneseq
      %v472 = vand.u32 %v471, 127
      %v473 = vadd.s32 %v472, 128
      %474 = vset.pattern.permute.xlu0 0
      %475 = vperm.xlu0 %474, %v407
      %v476 = vpop.permute.xlu0 %475
      %477 = vset.pattern.permute.xlu0 0
      %478 = vperm.xlu0 %477, %v408
      %v479 = vpop.permute.xlu0 %478
      %480 = vset.pattern.permute.xlu0 0
      %481 = vperm.xlu0 %480, %v409
      %v482 = vpop.permute.xlu0 %481
      %483 = vset.pattern.permute.xlu0 0
      %484 = vperm.xlu0 %483, %v410
      %v485 = vpop.permute.xlu0 %484
      %486 = vset.pattern.permute.xlu0 0
      %487 = vperm.xlu0 %486, %v411
      %v488 = vpop.permute.xlu0 %487
      %489 = vset.pattern.permute.xlu0 0
      %490 = vperm.xlu0 %489, %v412
      %v491 = vpop.permute.xlu0 %490
      %492 = vset.pattern.permute.xlu0 0
      %493 = vperm.xlu0 %492, %v413
      %v494 = vpop.permute.xlu0 %493
      %495 = vset.pattern.permute.xlu0 0
      %496 = vperm.xlu0 %495, %v414
      %v497 = vpop.permute.xlu0 %496
      %498 = vset.pattern.permute.xlu0 0
      %499 = vperm.xlu0 %498, %v415
      %v500 = vpop.permute.xlu0 %499
      %501 = vset.pattern.permute.xlu0 0
      %502 = vperm.xlu0 %501, %v416
      %v503 = vpop.permute.xlu0 %502
      %504 = vset.pattern.permute.xlu0 0
      %505 = vperm.xlu0 %504, %v417
      %v506 = vpop.permute.xlu0 %505
      %507 = vset.pattern.permute.xlu0 0
      %508 = vperm.xlu0 %507, %v418
      %v509 = vpop.permute.xlu0 %508
      %510 = vset.pattern.permute.xlu0 0
      %511 = vperm.xlu0 %510, %v419
      %v512 = vpop.permute.xlu0 %511
      %513 = vset.pattern.permute.xlu0 0
      %514 = vperm.xlu0 %513, %v420
      %v515 = vpop.permute.xlu0 %514
      %516 = vset.pattern.permute.xlu0 0
      %517 = vperm.xlu0 %516, %v421
      %v518 = vpop.permute.xlu0 %517
      %519 = vset.pattern.permute.xlu0 0
      %520 = vperm.xlu0 %519, %v422
      %v521 = vpop.permute.xlu0 %520
      %522 = vset.pattern.permute.xlu0 0
      %523 = vperm.xlu0 %522, %v423
      %v524 = vpop.permute.xlu0 %523
      %525 = vset.pattern.permute.xlu0 0
      %526 = vperm.xlu0 %525, %v424
      %v527 = vpop.permute.xlu0 %526
      %528 = vset.pattern.permute.xlu0 0
      %529 = vperm.xlu0 %528, %v425
      %v530 = vpop.permute.xlu0 %529
      %531 = vset.pattern.permute.xlu0 0
      %532 = vperm.xlu0 %531, %v426
      %v533 = vpop.permute.xlu0 %532
      %534 = vset.pattern.permute.xlu0 0
      %535 = vperm.xlu0 %534, %v427
      %v536 = vpop.permute.xlu0 %535
      %537 = vset.pattern.permute.xlu0 0
      %538 = vperm.xlu0 %537, %v428
      %v539 = vpop.permute.xlu0 %538
      %540 = vset.pattern.permute.xlu0 0
      %541 = vperm.xlu0 %540, %v429
      %v542 = vpop.permute.xlu0 %541
      %543 = vset.pattern.permute.xlu0 0
      %544 = vperm.xlu0 %543, %v430
      %v545 = vpop.permute.xlu0 %544
      %546 = vset.pattern.permute.xlu0 0
      %547 = vperm.xlu0 %546, %v431
      %v548 = vpop.permute.xlu0 %547
      %549 = vset.pattern.permute.xlu0 0
      %550 = vperm.xlu0 %549, %v432
      %v551 = vpop.permute.xlu0 %550
      %552 = vset.pattern.permute.xlu0 0
      %553 = vperm.xlu0 %552, %v433
      %v554 = vpop.permute.xlu0 %553
      %555 = vset.pattern.permute.xlu0 0
      %556 = vperm.xlu0 %555, %v434
      %v557 = vpop.permute.xlu0 %556
      %558 = vset.pattern.permute.xlu0 0
      %559 = vperm.xlu0 %558, %v435
      %v560 = vpop.permute.xlu0 %559
      %561 = vset.pattern.permute.xlu0 0
      %562 = vperm.xlu0 %561, %v436
      %v563 = vpop.permute.xlu0 %562
      %564 = vset.pattern.permute.xlu0 0
      %565 = vperm.xlu0 %564, %v437
      %v566 = vpop.permute.xlu0 %565
      %567 = vset.pattern.permute.xlu0 0
      %568 = vperm.xlu0 %567, %v438
      %v569 = vpop.permute.xlu0 %568
      %570 = vset.pattern.permute.xlu0 0
      %571 = vperm.xlu0 %570, %v439
      %v572 = vpop.permute.xlu0 %571
      %573 = vset.pattern.permute.xlu0 0
      %574 = vperm.xlu0 %573, %v440
      %v575 = vpop.permute.xlu0 %574
      %576 = vset.pattern.permute.xlu0 0
      %577 = vperm.xlu0 %576, %v441
      %v578 = vpop.permute.xlu0 %577
      %579 = vset.pattern.permute.xlu0 0
      %580 = vperm.xlu0 %579, %v442
      %v581 = vpop.permute.xlu0 %580
      %582 = vset.pattern.permute.xlu0 0
      %583 = vperm.xlu0 %582, %v443
      %v584 = vpop.permute.xlu0 %583
      %585 = vset.pattern.permute.xlu0 0
      %586 = vperm.xlu0 %585, %v444
      %v587 = vpop.permute.xlu0 %586
      %588 = vset.pattern.permute.xlu0 0
      %589 = vperm.xlu0 %588, %v445
      %v590 = vpop.permute.xlu0 %589
      %591 = vset.pattern.permute.xlu0 0
      %592 = vperm.xlu0 %591, %v446
      %v593 = vpop.permute.xlu0 %592
      %594 = vset.pattern.permute.xlu0 0
      %595 = vperm.xlu0 %594, %v447
      %v596 = vpop.permute.xlu0 %595
      %597 = vset.pattern.permute.xlu0 0
      %598 = vperm.xlu0 %597, %v448
      %v599 = vpop.permute.xlu0 %598
      %600 = vset.pattern.permute.xlu0 0
      %601 = vperm.xlu0 %600, %v449
      %v602 = vpop.permute.xlu0 %601
      %603 = vset.pattern.permute.xlu0 0
      %604 = vperm.xlu0 %603, %v450
      %v605 = vpop.permute.xlu0 %604
      %606 = vset.pattern.permute.xlu0 0
      %607 = vperm.xlu0 %606, %v451
      %v608 = vpop.permute.xlu0 %607
      %609 = vset.pattern.permute.xlu0 0
      %610 = vperm.xlu0 %609, %v452
      %v611 = vpop.permute.xlu0 %610
      %612 = vset.pattern.permute.xlu0 0
      %613 = vperm.xlu0 %612, %v453
      %v614 = vpop.permute.xlu0 %613
      %615 = vset.pattern.permute.xlu0 0
      %616 = vperm.xlu0 %615, %v454
      %v617 = vpop.permute.xlu0 %616
      %618 = vset.pattern.permute.xlu0 0
      %619 = vperm.xlu0 %618, %v455
      %v620 = vpop.permute.xlu0 %619
      %621 = vset.pattern.permute.xlu0 0
      %622 = vperm.xlu0 %621, %v456
      %v623 = vpop.permute.xlu0 %622
      %624 = vset.pattern.permute.xlu0 0
      %625 = vperm.xlu0 %624, %v457
      %v626 = vpop.permute.xlu0 %625
      %627 = vset.pattern.permute.xlu0 0
      %628 = vperm.xlu0 %627, %v458
      %v629 = vpop.permute.xlu0 %628
      %630 = vset.pattern.permute.xlu0 0
      %631 = vperm.xlu0 %630, %v459
      %v632 = vpop.permute.xlu0 %631
      %633 = vset.pattern.permute.xlu0 0
      %634 = vperm.xlu0 %633, %v460
      %v635 = vpop.permute.xlu0 %634
      %636 = vset.pattern.permute.xlu0 0
      %637 = vperm.xlu0 %636, %v461
      %v638 = vpop.permute.xlu0 %637
      %639 = vset.pattern.permute.xlu0 0
      %640 = vperm.xlu0 %639, %v462
      %v641 = vpop.permute.xlu0 %640
      %642 = vset.pattern.permute.xlu0 0
      %643 = vperm.xlu0 %642, %v463
      %v644 = vpop.permute.xlu0 %643
      %645 = vset.pattern.permute.xlu0 0
      %646 = vperm.xlu0 %645, %v464
      %v647 = vpop.permute.xlu0 %646
      %648 = vset.pattern.permute.xlu0 0
      %649 = vperm.xlu0 %648, %v465
      %v650 = vpop.permute.xlu0 %649
      %651 = vset.pattern.permute.xlu0 0
      %652 = vperm.xlu0 %651, %v466
      %v653 = vpop.permute.xlu0 %652
      %654 = vset.pattern.permute.xlu0 0
      %655 = vperm.xlu0 %654, %v467
      %v656 = vpop.permute.xlu0 %655
      %657 = vset.pattern.permute.xlu0 0
      %658 = vperm.xlu0 %657, %v468
      %v659 = vpop.permute.xlu0 %658
      %660 = vset.pattern.permute.xlu0 0
      %661 = vperm.xlu0 %660, %v469
      %v662 = vpop.permute.xlu0 %661
      %663 = vset.pattern.permute.xlu0 0
      %664 = vperm.xlu0 %663, %v470
      %v665 = vpop.permute.xlu0 %664
      %vm666 = vcmp.eq.s32.totalorder %v472, %v476
      %vm667 = vcmp.eq.s32.totalorder %v473, %v476
      %vm668 = vcmp.eq.s32.totalorder %v472, %v479
      %vm669 = vcmp.eq.s32.totalorder %v473, %v479
      %vm670 = vcmp.eq.s32.totalorder %v472, %v482
      %vm671 = vcmp.eq.s32.totalorder %v473, %v482
      %vm672 = vcmp.eq.s32.totalorder %v472, %v485
      %vm673 = vcmp.eq.s32.totalorder %v473, %v485
      %vm674 = vcmp.eq.s32.totalorder %v472, %v488
      %vm675 = vcmp.eq.s32.totalorder %v473, %v488
      %vm676 = vcmp.eq.s32.totalorder %v472, %v491
      %vm677 = vcmp.eq.s32.totalorder %v473, %v491
      %vm678 = vcmp.eq.s32.totalorder %v472, %v494
      %vm679 = vcmp.eq.s32.totalorder %v473, %v494
      %vm680 = vcmp.eq.s32.totalorder %v472, %v497
      %vm681 = vcmp.eq.s32.totalorder %v473, %v497
      %vm682 = vcmp.eq.s32.totalorder %v472, %v500
      %vm683 = vcmp.eq.s32.totalorder %v473, %v500
      %vm684 = vcmp.eq.s32.totalorder %v472, %v503
      %vm685 = vcmp.eq.s32.totalorder %v473, %v503
      %vm686 = vcmp.eq.s32.totalorder %v472, %v506
      %vm687 = vcmp.eq.s32.totalorder %v473, %v506
      %vm688 = vcmp.eq.s32.totalorder %v472, %v509
      %vm689 = vcmp.eq.s32.totalorder %v473, %v509
      %vm690 = vcmp.eq.s32.totalorder %v472, %v512
      %vm691 = vcmp.eq.s32.totalorder %v473, %v512
      %vm692 = vcmp.eq.s32.totalorder %v472, %v515
      %vm693 = vcmp.eq.s32.totalorder %v473, %v515
      %vm694 = vcmp.eq.s32.totalorder %v472, %v518
      %vm695 = vcmp.eq.s32.totalorder %v473, %v518
      %vm696 = vcmp.eq.s32.totalorder %v472, %v521
      %vm697 = vcmp.eq.s32.totalorder %v473, %v521
      %vm698 = vcmp.eq.s32.totalorder %v472, %v524
      %vm699 = vcmp.eq.s32.totalorder %v473, %v524
      %vm700 = vcmp.eq.s32.totalorder %v472, %v527
      %vm701 = vcmp.eq.s32.totalorder %v473, %v527
      %vm702 = vcmp.eq.s32.totalorder %v472, %v530
      %vm703 = vcmp.eq.s32.totalorder %v473, %v530
      %vm704 = vcmp.eq.s32.totalorder %v472, %v533
      %vm705 = vcmp.eq.s32.totalorder %v473, %v533
      %vm706 = vcmp.eq.s32.totalorder %v472, %v536
      %vm707 = vcmp.eq.s32.totalorder %v473, %v536
      %vm708 = vcmp.eq.s32.totalorder %v472, %v539
      %vm709 = vcmp.eq.s32.totalorder %v473, %v539
      %vm710 = vcmp.eq.s32.totalorder %v472, %v542
      %vm711 = vcmp.eq.s32.totalorder %v473, %v542
      %vm712 = vcmp.eq.s32.totalorder %v472, %v545
      %vm713 = vcmp.eq.s32.totalorder %v473, %v545
      %vm714 = vcmp.eq.s32.totalorder %v472, %v548
      %vm715 = vcmp.eq.s32.totalorder %v473, %v548
      %vm716 = vcmp.eq.s32.totalorder %v472, %v551
      %vm717 = vcmp.eq.s32.totalorder %v473, %v551
      %vm718 = vcmp.eq.s32.totalorder %v472, %v554
      %vm719 = vcmp.eq.s32.totalorder %v473, %v554
      %vm720 = vcmp.eq.s32.totalorder %v472, %v557
      %vm721 = vcmp.eq.s32.totalorder %v473, %v557
      %vm722 = vcmp.eq.s32.totalorder %v472, %v560
      %vm723 = vcmp.eq.s32.totalorder %v473, %v560
      %vm724 = vcmp.eq.s32.totalorder %v472, %v563
      %vm725 = vcmp.eq.s32.totalorder %v473, %v563
      %vm726 = vcmp.eq.s32.totalorder %v472, %v566
      %vm727 = vcmp.eq.s32.totalorder %v473, %v566
      %vm728 = vcmp.eq.s32.totalorder %v472, %v569
      %vm729 = vcmp.eq.s32.totalorder %v473, %v569
      %vm730 = vcmp.eq.s32.totalorder %v472, %v572
      %vm731 = vcmp.eq.s32.totalorder %v473, %v572
      %vm732 = vcmp.eq.s32.totalorder %v472, %v575
      %vm733 = vcmp.eq.s32.totalorder %v473, %v575
      %vm734 = vcmp.eq.s32.totalorder %v472, %v578
      %vm735 = vcmp.eq.s32.totalorder %v473, %v578
      %vm736 = vcmp.eq.s32.totalorder %v472, %v581
      %vm737 = vcmp.eq.s32.totalorder %v473, %v581
      %vm738 = vcmp.eq.s32.totalorder %v472, %v584
      %vm739 = vcmp.eq.s32.totalorder %v473, %v584
      %vm740 = vcmp.eq.s32.totalorder %v472, %v587
      %vm741 = vcmp.eq.s32.totalorder %v473, %v587
      %vm742 = vcmp.eq.s32.totalorder %v472, %v590
      %vm743 = vcmp.eq.s32.totalorder %v473, %v590
      %vm744 = vcmp.eq.s32.totalorder %v472, %v593
      %vm745 = vcmp.eq.s32.totalorder %v473, %v593
      %vm746 = vcmp.eq.s32.totalorder %v472, %v596
      %vm747 = vcmp.eq.s32.totalorder %v473, %v596
      %vm748 = vcmp.eq.s32.totalorder %v472, %v599
      %vm749 = vcmp.eq.s32.totalorder %v473, %v599
      %vm750 = vcmp.eq.s32.totalorder %v472, %v602
      %vm751 = vcmp.eq.s32.totalorder %v473, %v602
      %vm752 = vcmp.eq.s32.totalorder %v472, %v605
      %vm753 = vcmp.eq.s32.totalorder %v473, %v605
      %vm754 = vcmp.eq.s32.totalorder %v472, %v608
      %vm755 = vcmp.eq.s32.totalorder %v473, %v608
      %vm756 = vcmp.eq.s32.totalorder %v472, %v611
      %vm757 = vcmp.eq.s32.totalorder %v473, %v611
      %vm758 = vcmp.eq.s32.totalorder %v472, %v614
      %vm759 = vcmp.eq.s32.totalorder %v473, %v614
      %vm760 = vcmp.eq.s32.totalorder %v472, %v617
      %vm761 = vcmp.eq.s32.totalorder %v473, %v617
      %vm762 = vcmp.eq.s32.totalorder %v472, %v620
      %vm763 = vcmp.eq.s32.totalorder %v473, %v620
      %vm764 = vcmp.eq.s32.totalorder %v472, %v623
      %vm765 = vcmp.eq.s32.totalorder %v473, %v623
      %vm766 = vcmp.eq.s32.totalorder %v472, %v626
      %vm767 = vcmp.eq.s32.totalorder %v473, %v626
      %vm768 = vcmp.eq.s32.totalorder %v472, %v629
      %vm769 = vcmp.eq.s32.totalorder %v473, %v629
      %vm770 = vcmp.eq.s32.totalorder %v472, %v632
      %vm771 = vcmp.eq.s32.totalorder %v473, %v632
      %vm772 = vcmp.eq.s32.totalorder %v472, %v635
      %vm773 = vcmp.eq.s32.totalorder %v473, %v635
      %vm774 = vcmp.eq.s32.totalorder %v472, %v638
      %vm775 = vcmp.eq.s32.totalorder %v473, %v638
      %vm776 = vcmp.eq.s32.totalorder %v472, %v641
      %vm777 = vcmp.eq.s32.totalorder %v473, %v641
      %vm778 = vcmp.eq.s32.totalorder %v472, %v644
      %vm779 = vcmp.eq.s32.totalorder %v473, %v644
      %vm780 = vcmp.eq.s32.totalorder %v472, %v647
      %vm781 = vcmp.eq.s32.totalorder %v473, %v647
      %vm782 = vcmp.eq.s32.totalorder %v472, %v650
      %vm783 = vcmp.eq.s32.totalorder %v473, %v650
      %vm784 = vcmp.eq.s32.totalorder %v472, %v653
      %vm785 = vcmp.eq.s32.totalorder %v473, %v653
      %vm786 = vcmp.eq.s32.totalorder %v472, %v656
      %vm787 = vcmp.eq.s32.totalorder %v473, %v656
      %vm788 = vcmp.eq.s32.totalorder %v472, %v659
      %vm789 = vcmp.eq.s32.totalorder %v473, %v659
      %vm790 = vcmp.eq.s32.totalorder %v472, %v662
      %vm791 = vcmp.eq.s32.totalorder %v473, %v662
      %vm792 = vcmp.eq.s32.totalorder %v472, %v665
      %vm793 = vcmp.eq.s32.totalorder %v473, %v665
      %v794 = vsel %vm666, 1, 0
      %v795 = vsel %vm667, 1, 0
      %v796 = vsel %vm668, 1, 0
      %v797 = vsel %vm669, 1, 0
      %v798 = vsel %vm670, 1, 0
      %v799 = vsel %vm671, 1, 0
      %v800 = vsel %vm672, 1, 0
      %v801 = vsel %vm673, 1, 0
      %v802 = vsel %vm674, 1, 0
      %v803 = vsel %vm675, 1, 0
      %v804 = vsel %vm676, 1, 0
      %v805 = vsel %vm677, 1, 0
      %v806 = vsel %vm678, 1, 0
      %v807 = vsel %vm679, 1, 0
      %v808 = vsel %vm680, 1, 0
      %v809 = vsel %vm681, 1, 0
      %v810 = vsel %vm682, 1, 0
      %v811 = vsel %vm683, 1, 0
      %v812 = vsel %vm684, 1, 0
      %v813 = vsel %vm685, 1, 0
      %v814 = vsel %vm686, 1, 0
      %v815 = vsel %vm687, 1, 0
      %v816 = vsel %vm688, 1, 0
      %v817 = vsel %vm689, 1, 0
      %v818 = vsel %vm690, 1, 0
      %v819 = vsel %vm691, 1, 0
      %v820 = vsel %vm692, 1, 0
      %v821 = vsel %vm693, 1, 0
      %v822 = vsel %vm694, 1, 0
      %v823 = vsel %vm695, 1, 0
      %v824 = vsel %vm696, 1, 0
      %v825 = vsel %vm697, 1, 0
      %v826 = vsel %vm698, 1, 0
      %v827 = vsel %vm699, 1, 0
      %v828 = vsel %vm700, 1, 0
      %v829 = vsel %vm701, 1, 0
      %v830 = vsel %vm702, 1, 0
      %v831 = vsel %vm703, 1, 0
      %v832 = vsel %vm704, 1, 0
      %v833 = vsel %vm705, 1, 0
      %v834 = vsel %vm706, 1, 0
      %v835 = vsel %vm707, 1, 0
      %v836 = vsel %vm708, 1, 0
      %v837 = vsel %vm709, 1, 0
      %v838 = vsel %vm710, 1, 0
      %v839 = vsel %vm711, 1, 0
      %v840 = vsel %vm712, 1, 0
      %v841 = vsel %vm713, 1, 0
      %v842 = vsel %vm714, 1, 0
      %v843 = vsel %vm715, 1, 0
      %v844 = vsel %vm716, 1, 0
      %v845 = vsel %vm717, 1, 0
      %v846 = vsel %vm718, 1, 0
      %v847 = vsel %vm719, 1, 0
      %v848 = vsel %vm720, 1, 0
      %v849 = vsel %vm721, 1, 0
      %v850 = vsel %vm722, 1, 0
      %v851 = vsel %vm723, 1, 0
      %v852 = vsel %vm724, 1, 0
      %v853 = vsel %vm725, 1, 0
      %v854 = vsel %vm726, 1, 0
      %v855 = vsel %vm727, 1, 0
      %v856 = vsel %vm728, 1, 0
      %v857 = vsel %vm729, 1, 0
      %v858 = vsel %vm730, 1, 0
      %v859 = vsel %vm731, 1, 0
      %v860 = vsel %vm732, 1, 0
      %v861 = vsel %vm733, 1, 0
      %v862 = vsel %vm734, 1, 0
      %v863 = vsel %vm735, 1, 0
      %v864 = vsel %vm736, 1, 0
      %v865 = vsel %vm737, 1, 0
      %v866 = vsel %vm738, 1, 0
      %v867 = vsel %vm739, 1, 0
      %v868 = vsel %vm740, 1, 0
      %v869 = vsel %vm741, 1, 0
      %v870 = vsel %vm742, 1, 0
      %v871 = vsel %vm743, 1, 0
      %v872 = vsel %vm744, 1, 0
      %v873 = vsel %vm745, 1, 0
      %v874 = vsel %vm746, 1, 0
      %v875 = vsel %vm747, 1, 0
      %v876 = vsel %vm748, 1, 0
      %v877 = vsel %vm749, 1, 0
      %v878 = vsel %vm750, 1, 0
      %v879 = vsel %vm751, 1, 0
      %v880 = vsel %vm752, 1, 0
      %v881 = vsel %vm753, 1, 0
      %v882 = vsel %vm754, 1, 0
      %v883 = vsel %vm755, 1, 0
      %v884 = vsel %vm756, 1, 0
      %v885 = vsel %vm757, 1, 0
      %v886 = vsel %vm758, 1, 0
      %v887 = vsel %vm759, 1, 0
      %v888 = vsel %vm760, 1, 0
      %v889 = vsel %vm761, 1, 0
      %v890 = vsel %vm762, 1, 0
      %v891 = vsel %vm763, 1, 0
      %v892 = vsel %vm764, 1, 0
      %v893 = vsel %vm765, 1, 0
      %v894 = vsel %vm766, 1, 0
      %v895 = vsel %vm767, 1, 0
      %v896 = vsel %vm768, 1, 0
      %v897 = vsel %vm769, 1, 0
      %v898 = vsel %vm770, 1, 0
      %v899 = vsel %vm771, 1, 0
      %v900 = vsel %vm772, 1, 0
      %v901 = vsel %vm773, 1, 0
      %v902 = vsel %vm774, 1, 0
      %v903 = vsel %vm775, 1, 0
      %v904 = vsel %vm776, 1, 0
      %v905 = vsel %vm777, 1, 0
      %v906 = vsel %vm778, 1, 0
      %v907 = vsel %vm779, 1, 0
      %v908 = vsel %vm780, 1, 0
      %v909 = vsel %vm781, 1, 0
      %v910 = vsel %vm782, 1, 0
      %v911 = vsel %vm783, 1, 0
      %v912 = vsel %vm784, 1, 0
      %v913 = vsel %vm785, 1, 0
      %v914 = vsel %vm786, 1, 0
      %v915 = vsel %vm787, 1, 0
      %v916 = vsel %vm788, 1, 0
      %v917 = vsel %vm789, 1, 0
      %v918 = vsel %vm790, 1, 0
      %v919 = vsel %vm791, 1, 0
      %v920 = vsel %vm792, 1, 0
      %v921 = vsel %vm793, 1, 0
      %v922 = vcvt.s32.f32 %v794
      %v923 = vcvt.s32.f32 %v795
      %v924 = vcvt.s32.f32 %v796
      %v925 = vcvt.s32.f32 %v797
      %v926 = vcvt.s32.f32 %v798
      %v927 = vcvt.s32.f32 %v799
      %v928 = vcvt.s32.f32 %v800
      %v929 = vcvt.s32.f32 %v801
      %v930 = vcvt.s32.f32 %v802
      %v931 = vcvt.s32.f32 %v803
      %v932 = vcvt.s32.f32 %v804
      %v933 = vcvt.s32.f32 %v805
      %v934 = vcvt.s32.f32 %v806
      %v935 = vcvt.s32.f32 %v807
      %v936 = vcvt.s32.f32 %v808
      %v937 = vcvt.s32.f32 %v809
      %v938 = vcvt.s32.f32 %v810
      %v939 = vcvt.s32.f32 %v811
      %v940 = vcvt.s32.f32 %v812
      %v941 = vcvt.s32.f32 %v813
      %v942 = vcvt.s32.f32 %v814
      %v943 = vcvt.s32.f32 %v815
      %v944 = vcvt.s32.f32 %v816
      %v945 = vcvt.s32.f32 %v817
      %v946 = vcvt.s32.f32 %v818
      %v947 = vcvt.s32.f32 %v819
      %v948 = vcvt.s32.f32 %v820
      %v949 = vcvt.s32.f32 %v821
      %v950 = vcvt.s32.f32 %v822
      %v951 = vcvt.s32.f32 %v823
      %v952 = vcvt.s32.f32 %v824
      %v953 = vcvt.s32.f32 %v825
      %v954 = vcvt.s32.f32 %v826
      %v955 = vcvt.s32.f32 %v827
      %v956 = vcvt.s32.f32 %v828
      %v957 = vcvt.s32.f32 %v829
      %v958 = vcvt.s32.f32 %v830
      %v959 = vcvt.s32.f32 %v831
      %v960 = vcvt.s32.f32 %v832
      %v961 = vcvt.s32.f32 %v833
      %v962 = vcvt.s32.f32 %v834
      %v963 = vcvt.s32.f32 %v835
      %v964 = vcvt.s32.f32 %v836
      %v965 = vcvt.s32.f32 %v837
      %v966 = vcvt.s32.f32 %v838
      %v967 = vcvt.s32.f32 %v839
      %v968 = vcvt.s32.f32 %v840
      %v969 = vcvt.s32.f32 %v841
      %v970 = vcvt.s32.f32 %v842
      %v971 = vcvt.s32.f32 %v843
      %v972 = vcvt.s32.f32 %v844
      %v973 = vcvt.s32.f32 %v845
      %v974 = vcvt.s32.f32 %v846
      %v975 = vcvt.s32.f32 %v847
      %v976 = vcvt.s32.f32 %v848
      %v977 = vcvt.s32.f32 %v849
      %v978 = vcvt.s32.f32 %v850
      %v979 = vcvt.s32.f32 %v851
      %v980 = vcvt.s32.f32 %v852
      %v981 = vcvt.s32.f32 %v853
      %v982 = vcvt.s32.f32 %v854
      %v983 = vcvt.s32.f32 %v855
      %v984 = vcvt.s32.f32 %v856
      %v985 = vcvt.s32.f32 %v857
      %v986 = vcvt.s32.f32 %v858
      %v987 = vcvt.s32.f32 %v859
      %v988 = vcvt.s32.f32 %v860
      %v989 = vcvt.s32.f32 %v861
      %v990 = vcvt.s32.f32 %v862
      %v991 = vcvt.s32.f32 %v863
      %v992 = vcvt.s32.f32 %v864
      %v993 = vcvt.s32.f32 %v865
      %v994 = vcvt.s32.f32 %v866
      %v995 = vcvt.s32.f32 %v867
      %v996 = vcvt.s32.f32 %v868
      %v997 = vcvt.s32.f32 %v869
      %v998 = vcvt.s32.f32 %v870
      %v999 = vcvt.s32.f32 %v871
      %v1000 = vcvt.s32.f32 %v872
      %v1001 = vcvt.s32.f32 %v873
      %v1002 = vcvt.s32.f32 %v874
      %v1003 = vcvt.s32.f32 %v875
      %v1004 = vcvt.s32.f32 %v876
      %v1005 = vcvt.s32.f32 %v877
      %v1006 = vcvt.s32.f32 %v878
      %v1007 = vcvt.s32.f32 %v879
      %v1008 = vcvt.s32.f32 %v880
      %v1009 = vcvt.s32.f32 %v881
      %v1010 = vcvt.s32.f32 %v882
      %v1011 = vcvt.s32.f32 %v883
      %v1012 = vcvt.s32.f32 %v884
      %v1013 = vcvt.s32.f32 %v885
      %v1014 = vcvt.s32.f32 %v886
      %v1015 = vcvt.s32.f32 %v887
      %v1016 = vcvt.s32.f32 %v888
      %v1017 = vcvt.s32.f32 %v889
      %v1018 = vcvt.s32.f32 %v890
      %v1019 = vcvt.s32.f32 %v891
      %v1020 = vcvt.s32.f32 %v892
      %v1021 = vcvt.s32.f32 %v893
      %v1022 = vcvt.s32.f32 %v894
      %v1023 = vcvt.s32.f32 %v895
      %v1024 = vcvt.s32.f32 %v896
      %v1025 = vcvt.s32.f32 %v897
      %v1026 = vcvt.s32.f32 %v898
      %v1027 = vcvt.s32.f32 %v899
      %v1028 = vcvt.s32.f32 %v900
      %v1029 = vcvt.s32.f32 %v901
      %v1030 = vcvt.s32.f32 %v902
      %v1031 = vcvt.s32.f32 %v903
      %v1032 = vcvt.s32.f32 %v904
      %v1033 = vcvt.s32.f32 %v905
      %v1034 = vcvt.s32.f32 %v906
      %v1035 = vcvt.s32.f32 %v907
      %v1036 = vcvt.s32.f32 %v908
      %v1037 = vcvt.s32.f32 %v909
      %v1038 = vcvt.s32.f32 %v910
      %v1039 = vcvt.s32.f32 %v911
      %v1040 = vcvt.s32.f32 %v912
      %v1041 = vcvt.s32.f32 %v913
      %v1042 = vcvt.s32.f32 %v914
      %v1043 = vcvt.s32.f32 %v915
      %v1044 = vcvt.s32.f32 %v916
      %v1045 = vcvt.s32.f32 %v917
      %v1046 = vcvt.s32.f32 %v918
      %v1047 = vcvt.s32.f32 %v919
      %v1048 = vcvt.s32.f32 %v920
      %v1049 = vcvt.s32.f32 %v921
      %v1050 = vld [vmem:[%s3] sm:$0xff]
      %v1051 = vld [vmem:[%s3 + $0x8] sm:$0xff]
      %v1052 = vld [vmem:[%s3 + $0x10] sm:$0xff]
      %v1053 = vld [vmem:[%s3 + $0x18] sm:$0xff]
      %v1054 = vld [vmem:[%s3 + $0x20] sm:$0xff]
      %v1055 = vld [vmem:[%s3 + $0x28] sm:$0xff]
      %v1056 = vld [vmem:[%s3 + $0x30] sm:$0xff]
      %v1057 = vld [vmem:[%s3 + $0x38] sm:$0xff]
      %v1058 = vld [vmem:[%s3 + $0x40] sm:$0xff]
      %v1059 = vld [vmem:[%s3 + $0x48] sm:$0xff]
      %v1060 = vld [vmem:[%s3 + $0x50] sm:$0xff]
      %v1061 = vld [vmem:[%s3 + $0x58] sm:$0xff]
      %v1062 = vld [vmem:[%s3 + $0x60] sm:$0xff]
      %v1063 = vld [vmem:[%s3 + $0x68] sm:$0xff]
      %v1064 = vld [vmem:[%s3 + $0x70] sm:$0xff]
      %v1065 = vld [vmem:[%s3 + $0x78] sm:$0xff]
      %v1066 = vld [vmem:[%s3 + $0x80] sm:$0xff]
      %v1067 = vld [vmem:[%s3 + $0x88] sm:$0xff]
      %v1068 = vld [vmem:[%s3 + $0x90] sm:$0xff]
      %v1069 = vld [vmem:[%s3 + $0x98] sm:$0xff]
      %v1070 = vld [vmem:[%s3 + $0xa0] sm:$0xff]
      %v1071 = vld [vmem:[%s3 + $0xa8] sm:$0xff]
      %v1072 = vld [vmem:[%s3 + $0xb0] sm:$0xff]
      %v1073 = vld [vmem:[%s3 + $0xb8] sm:$0xff]
      %v1074 = vld [vmem:[%s3 + $0xc0] sm:$0xff]
      %vm1075 = vcmask 588800
      %v1077 = vsel %vm1075, %v923, 0
      %v1080 = vsel %vm1075, %v925, 0
      %v1083 = vsel %vm1075, %v927, 0
      %v1086 = vsel %vm1075, %v929, 0
      %v1089 = vsel %vm1075, %v931, 0
      %v1092 = vsel %vm1075, %v933, 0
      %v1095 = vsel %vm1075, %v935, 0
      %v1098 = vsel %vm1075, %v937, 0
      %v1101 = vsel %vm1075, %v939, 0
      %v1104 = vsel %vm1075, %v941, 0
      %v1107 = vsel %vm1075, %v943, 0
      %v1110 = vsel %vm1075, %v945, 0
      %v1113 = vsel %vm1075, %v947, 0
      %v1116 = vsel %vm1075, %v949, 0
      %v1119 = vsel %vm1075, %v951, 0
      %v1122 = vsel %vm1075, %v953, 0
      %v1125 = vsel %vm1075, %v955, 0
      %v1128 = vsel %vm1075, %v957, 0
      %v1131 = vsel %vm1075, %v959, 0
      %v1134 = vsel %vm1075, %v961, 0
      %v1137 = vsel %vm1075, %v963, 0
      %v1140 = vsel %vm1075, %v965, 0
      %v1143 = vsel %vm1075, %v967, 0
      %v1146 = vsel %vm1075, %v969, 0
      %v1149 = vsel %vm1075, %v971, 0
      %v1152 = vsel %vm1075, %v973, 0
      %v1155 = vsel %vm1075, %v975, 0
      %v1158 = vsel %vm1075, %v977, 0
      %v1161 = vsel %vm1075, %v979, 0
      %v1164 = vsel %vm1075, %v981, 0
      %v1167 = vsel %vm1075, %v983, 0
      %v1170 = vsel %vm1075, %v985, 0
      %v1173 = vsel %vm1075, %v987, 0
      %v1176 = vsel %vm1075, %v989, 0
      %v1179 = vsel %vm1075, %v991, 0
      %v1182 = vsel %vm1075, %v993, 0
      %v1185 = vsel %vm1075, %v995, 0
      %v1188 = vsel %vm1075, %v997, 0
      %v1191 = vsel %vm1075, %v999, 0
      %v1194 = vsel %vm1075, %v1001, 0
      %v1197 = vsel %vm1075, %v1003, 0
      %v1200 = vsel %vm1075, %v1005, 0
      %v1203 = vsel %vm1075, %v1007, 0
      %v1206 = vsel %vm1075, %v1009, 0
      %v1209 = vsel %vm1075, %v1011, 0
      %v1212 = vsel %vm1075, %v1013, 0
      %v1215 = vsel %vm1075, %v1015, 0
      %v1218 = vsel %vm1075, %v1017, 0
      %v1221 = vsel %vm1075, %v1019, 0
      %v1224 = vsel %vm1075, %v1021, 0
      %v1227 = vsel %vm1075, %v1023, 0
      %v1230 = vsel %vm1075, %v1025, 0
      %v1233 = vsel %vm1075, %v1027, 0
      %v1236 = vsel %vm1075, %v1029, 0
      %v1239 = vsel %vm1075, %v1031, 0
      %v1242 = vsel %vm1075, %v1033, 0
      %v1245 = vsel %vm1075, %v1035, 0
      %v1248 = vsel %vm1075, %v1037, 0
      %v1251 = vsel %vm1075, %v1039, 0
      %v1254 = vsel %vm1075, %v1041, 0
      %v1257 = vsel %vm1075, %v1043, 0
      %v1260 = vsel %vm1075, %v1045, 0
      %v1263 = vsel %vm1075, %v1047, 0
      %v1266 = vsel %vm1075, %v1049, 0
      %1268 = vmatprep.subr.mxu0 0.0
      %1269 = vmatpush1.msra.mxu0 %v1065
      %1270 = vmatprep.subr.mxu0 0.0
      %1271 = vmatpush1.msra.mxu0 %v1064
      %1272 = vmatprep.subr.mxu0 0.0
      %1273 = vmatpush1.msra.mxu0 %v1063
      %1274 = vmatprep.subr.mxu0 0.0
      %1275 = vmatpush1.msra.mxu0 %v1062
      %1276 = vmatprep.subr.mxu0 0.0
      %1277 = vmatpush1.msra.mxu0 %v1061
      %1278 = vmatprep.subr.mxu0 0.0
      %1279 = vmatpush1.msra.mxu0 %v1060
      %1280 = vmatprep.subr.mxu0 0.0
      %1281 = vmatpush1.msra.mxu0 %v1059
      %1282 = vmatprep.subr.mxu0 0.0
      %1283 = vmatpush1.msra.mxu0 %v1058
      %1284 = vmatprep.subr.mxu0 0.0
      %1285 = vmatpush1.msra.mxu0 %v1057
      %1286 = vmatprep.subr.mxu0 0.0
      %1287 = vmatpush1.msra.mxu0 %v1056
      %1288 = vmatprep.subr.mxu0 0.0
      %1289 = vmatpush1.msra.mxu0 %v1055
      %1290 = vmatprep.subr.mxu0 0.0
      %1291 = vmatpush1.msra.mxu0 %v1054
      %1292 = vmatprep.subr.mxu0 0.0
      %1293 = vmatpush1.msra.mxu0 %v1053
      %1294 = vmatprep.subr.mxu0 0.0
      %1295 = vmatpush1.msra.mxu0 %v1052
      %1296 = vmatprep.subr.mxu0 0.0
      %1297 = vmatpush1.msra.mxu0 %v1051
      %1298 = vmatprep.subr.mxu0 0.0
      %1299 = vmatpush1.msra.mxu0 %v1050
      %1300 = vmatprep.subr.mxu0 0.0
      %1301 = vmatpush2.msra.mxu0 0.0
      %1302 = vmatprep.subr.mxu0 0.0
      %1303 = vmatpush2.msra.mxu0 0.0
      %1304 = vmatprep.subr.mxu0 0.0
      %1305 = vmatpush2.msra.mxu0 0.0
      %1306 = vmatprep.subr.mxu0 0.0
      %1307 = vmatpush2.msra.mxu0 0.0
      %1308 = vmatprep.subr.mxu0 0.0
      %1309 = vmatpush2.msra.mxu0 0.0
      %1310 = vmatprep.subr.mxu0 0.0
      %1311 = vmatpush2.msra.mxu0 0.0
      %1312 = vmatprep.subr.mxu0 0.0
      %1313 = vmatpush2.msra.mxu0 0.0
      %1314 = vmatprep.subr.mxu0 0.0
      %1315 = vmatpush2.msra.mxu0 %v1074
      %1316 = vmatprep.subr.mxu0 0.0
      %1317 = vmatpush2.msra.mxu0 %v1073
      %1318 = vmatprep.subr.mxu0 0.0
      %1319 = vmatpush2.msra.mxu0 %v1072
      %1320 = vmatprep.subr.mxu0 0.0
      %1321 = vmatpush2.msra.mxu0 %v1071
      %1322 = vmatprep.subr.mxu0 0.0
      %1323 = vmatpush2.msra.mxu0 %v1070
      %1324 = vmatprep.subr.mxu0 0.0
      %1325 = vmatpush2.msra.mxu0 %v1069
      %1326 = vmatprep.subr.mxu0 0.0
      %1327 = vmatpush2.msra.mxu0 %v1068
      %1328 = vmatprep.subr.mxu0 0.0
      %1329 = vmatpush2.msra.mxu0 %v1067
      %1330 = vmatprep.subr.mxu0 0.0
      %1331 = vmatpush2.msra.mxu0 %v1066
      %1332 = vmatprep.mubr.f32.mxu0 %v1077
      %1333 = vmatmul.mubr.f32.gmra.mxu0 %v922
      %v1334 = vpop.f32.mrf.mxu0
      %v1335 = vadd.f32 0.0, %v1334
      %v1336 = vpop.f32.mrf.mxu0
      %1337 = vmatprep.mubr.f32.mxu0 %v1080
      %1338 = vmatmul.mubr.f32.gmra.mxu0 %v924
      %v1339 = vpop.f32.mrf.mxu0
      %v1340 = vadd.f32 0.0, %v1339
      %v1341 = vpop.f32.mrf.mxu0
      %1342 = vmatprep.mubr.f32.mxu0 %v1083
      %1343 = vmatmul.mubr.f32.gmra.mxu0 %v926
      %v1344 = vpop.f32.mrf.mxu0
      %v1345 = vadd.f32 0.0, %v1344
      %v1346 = vpop.f32.mrf.mxu0
      %1347 = vmatprep.mubr.f32.mxu0 %v1086
      %1348 = vmatmul.mubr.f32.gmra.mxu0 %v928
      %v1349 = vpop.f32.mrf.mxu0
      %v1350 = vadd.f32 0.0, %v1349
      %v1351 = vpop.f32.mrf.mxu0
      %1352 = vmatprep.mubr.f32.mxu0 %v1089
      %1353 = vmatmul.mubr.f32.gmra.mxu0 %v930
      %v1354 = vpop.f32.mrf.mxu0
      %v1355 = vadd.f32 0.0, %v1354
      %v1356 = vpop.f32.mrf.mxu0
      %1357 = vmatprep.mubr.f32.mxu0 %v1092
      %1358 = vmatmul.mubr.f32.gmra.mxu0 %v932
      %v1359 = vpop.f32.mrf.mxu0
      %v1360 = vadd.f32 0.0, %v1359
      %v1361 = vpop.f32.mrf.mxu0
      %1362 = vmatprep.mubr.f32.mxu0 %v1095
      %1363 = vmatmul.mubr.f32.gmra.mxu0 %v934
      %v1364 = vpop.f32.mrf.mxu0
      %v1365 = vadd.f32 0.0, %v1364
      %v1366 = vpop.f32.mrf.mxu0
      %1367 = vmatprep.mubr.f32.mxu0 %v1098
      %1368 = vmatmul.mubr.f32.gmra.mxu0 %v936
      %v1369 = vpop.f32.mrf.mxu0
      %v1370 = vadd.f32 0.0, %v1369
      %v1371 = vpop.f32.mrf.mxu0
      %1372 = vmatprep.mubr.f32.mxu0 %v1101
      %1373 = vmatmul.mubr.f32.gmra.mxu0 %v938
      %v1374 = vpop.f32.mrf.mxu0
      %v1375 = vadd.f32 0.0, %v1374
      %v1376 = vpop.f32.mrf.mxu0
      %1377 = vmatprep.mubr.f32.mxu0 %v1104
      %1378 = vmatmul.mubr.f32.gmra.mxu0 %v940
      %v1379 = vpop.f32.mrf.mxu0
      %v1380 = vadd.f32 0.0, %v1379
      %v1381 = vpop.f32.mrf.mxu0
      %1382 = vmatprep.mubr.f32.mxu0 %v1107
      %1383 = vmatmul.mubr.f32.gmra.mxu0 %v942
      %v1384 = vpop.f32.mrf.mxu0
      %v1385 = vadd.f32 0.0, %v1384
      %v1386 = vpop.f32.mrf.mxu0
      %1387 = vmatprep.mubr.f32.mxu0 %v1110
      %1388 = vmatmul.mubr.f32.gmra.mxu0 %v944
      %v1389 = vpop.f32.mrf.mxu0
      %v1390 = vadd.f32 0.0, %v1389
      %v1391 = vpop.f32.mrf.mxu0
      %1392 = vmatprep.mubr.f32.mxu0 %v1113
      %1393 = vmatmul.mubr.f32.gmra.mxu0 %v946
      %v1394 = vpop.f32.mrf.mxu0
      %v1395 = vadd.f32 0.0, %v1394
      %v1396 = vpop.f32.mrf.mxu0
      %1397 = vmatprep.mubr.f32.mxu0 %v1116
      %1398 = vmatmul.mubr.f32.gmra.mxu0 %v948
      %v1399 = vpop.f32.mrf.mxu0
      %v1400 = vadd.f32 0.0, %v1399
      %v1401 = vpop.f32.mrf.mxu0
      %1402 = vmatprep.mubr.f32.mxu0 %v1119
      %1403 = vmatmul.mubr.f32.gmra.mxu0 %v950
      %v1404 = vpop.f32.mrf.mxu0
      %v1405 = vadd.f32 0.0, %v1404
      %v1406 = vpop.f32.mrf.mxu0
      %1407 = vmatprep.mubr.f32.mxu0 %v1122
      %1408 = vmatmul.mubr.f32.gmra.mxu0 %v952
      %v1409 = vpop.f32.mrf.mxu0
      %v1410 = vadd.f32 0.0, %v1409
      %v1411 = vpop.f32.mrf.mxu0
      %1412 = vmatprep.mubr.f32.mxu0 %v1125
      %1413 = vmatmul.mubr.f32.gmra.mxu0 %v954
      %v1414 = vpop.f32.mrf.mxu0
      %v1415 = vadd.f32 0.0, %v1414
      %v1416 = vpop.f32.mrf.mxu0
      %1417 = vmatprep.mubr.f32.mxu0 %v1128
      %1418 = vmatmul.mubr.f32.gmra.mxu0 %v956
      %v1419 = vpop.f32.mrf.mxu0
      %v1420 = vadd.f32 0.0, %v1419
      %v1421 = vpop.f32.mrf.mxu0
      %1422 = vmatprep.mubr.f32.mxu0 %v1131
      %1423 = vmatmul.mubr.f32.gmra.mxu0 %v958
      %v1424 = vpop.f32.mrf.mxu0
      %v1425 = vadd.f32 0.0, %v1424
      %v1426 = vpop.f32.mrf.mxu0
      %1427 = vmatprep.mubr.f32.mxu0 %v1134
      %1428 = vmatmul.mubr.f32.gmra.mxu0 %v960
      %v1429 = vpop.f32.mrf.mxu0
      %v1430 = vadd.f32 0.0, %v1429
      %v1431 = vpop.f32.mrf.mxu0
      %1432 = vmatprep.mubr.f32.mxu0 %v1137
      %1433 = vmatmul.mubr.f32.gmra.mxu0 %v962
      %v1434 = vpop.f32.mrf.mxu0
      %v1435 = vadd.f32 0.0, %v1434
      %v1436 = vpop.f32.mrf.mxu0
      %1437 = vmatprep.mubr.f32.mxu0 %v1140
      %1438 = vmatmul.mubr.f32.gmra.mxu0 %v964
      %v1439 = vpop.f32.mrf.mxu0
      %v1440 = vadd.f32 0.0, %v1439
      %v1441 = vpop.f32.mrf.mxu0
      %1442 = vmatprep.mubr.f32.mxu0 %v1143
      %1443 = vmatmul.mubr.f32.gmra.mxu0 %v966
      %v1444 = vpop.f32.mrf.mxu0
      %v1445 = vadd.f32 0.0, %v1444
      %v1446 = vpop.f32.mrf.mxu0
      %1447 = vmatprep.mubr.f32.mxu0 %v1146
      %1448 = vmatmul.mubr.f32.gmra.mxu0 %v968
      %v1449 = vpop.f32.mrf.mxu0
      %v1450 = vadd.f32 0.0, %v1449
      %v1451 = vpop.f32.mrf.mxu0
      %1452 = vmatprep.mubr.f32.mxu0 %v1149
      %1453 = vmatmul.mubr.f32.gmra.mxu0 %v970
      %v1454 = vpop.f32.mrf.mxu0
      %v1455 = vadd.f32 0.0, %v1454
      %v1456 = vpop.f32.mrf.mxu0
      %1457 = vmatprep.mubr.f32.mxu0 %v1152
      %1458 = vmatmul.mubr.f32.gmra.mxu0 %v972
      %v1459 = vpop.f32.mrf.mxu0
      %v1460 = vadd.f32 0.0, %v1459
      %v1461 = vpop.f32.mrf.mxu0
      %1462 = vmatprep.mubr.f32.mxu0 %v1155
      %1463 = vmatmul.mubr.f32.gmra.mxu0 %v974
      %v1464 = vpop.f32.mrf.mxu0
      %v1465 = vadd.f32 0.0, %v1464
      %v1466 = vpop.f32.mrf.mxu0
      %1467 = vmatprep.mubr.f32.mxu0 %v1158
      %1468 = vmatmul.mubr.f32.gmra.mxu0 %v976
      %v1469 = vpop.f32.mrf.mxu0
      %v1470 = vadd.f32 0.0, %v1469
      %v1471 = vpop.f32.mrf.mxu0
      %1472 = vmatprep.mubr.f32.mxu0 %v1161
      %1473 = vmatmul.mubr.f32.gmra.mxu0 %v978
      %v1474 = vpop.f32.mrf.mxu0
      %v1475 = vadd.f32 0.0, %v1474
      %v1476 = vpop.f32.mrf.mxu0
      %1477 = vmatprep.mubr.f32.mxu0 %v1164
      %1478 = vmatmul.mubr.f32.gmra.mxu0 %v980
      %v1479 = vpop.f32.mrf.mxu0
      %v1480 = vadd.f32 0.0, %v1479
      %v1481 = vpop.f32.mrf.mxu0
      %1482 = vmatprep.mubr.f32.mxu0 %v1167
      %1483 = vmatmul.mubr.f32.gmra.mxu0 %v982
      %v1484 = vpop.f32.mrf.mxu0
      %v1485 = vadd.f32 0.0, %v1484
      %v1486 = vpop.f32.mrf.mxu0
      %1487 = vmatprep.mubr.f32.mxu0 %v1170
      %1488 = vmatmul.mubr.f32.gmra.mxu0 %v984
      %v1489 = vpop.f32.mrf.mxu0
      %v1490 = vadd.f32 0.0, %v1489
      %v1491 = vpop.f32.mrf.mxu0
      %1492 = vmatprep.mubr.f32.mxu0 %v1173
      %1493 = vmatmul.mubr.f32.gmra.mxu0 %v986
      %v1494 = vpop.f32.mrf.mxu0
      %v1495 = vadd.f32 0.0, %v1494
      %v1496 = vpop.f32.mrf.mxu0
      %1497 = vmatprep.mubr.f32.mxu0 %v1176
      %1498 = vmatmul.mubr.f32.gmra.mxu0 %v988
      %v1499 = vpop.f32.mrf.mxu0
      %v1500 = vadd.f32 0.0, %v1499
      %v1501 = vpop.f32.mrf.mxu0
      %1502 = vmatprep.mubr.f32.mxu0 %v1179
      %1503 = vmatmul.mubr.f32.gmra.mxu0 %v990
      %v1504 = vpop.f32.mrf.mxu0
      %v1505 = vadd.f32 0.0, %v1504
      %v1506 = vpop.f32.mrf.mxu0
      %1507 = vmatprep.mubr.f32.mxu0 %v1182
      %1508 = vmatmul.mubr.f32.gmra.mxu0 %v992
      %v1509 = vpop.f32.mrf.mxu0
      %v1510 = vadd.f32 0.0, %v1509
      %v1511 = vpop.f32.mrf.mxu0
      %1512 = vmatprep.mubr.f32.mxu0 %v1185
      %1513 = vmatmul.mubr.f32.gmra.mxu0 %v994
      %v1514 = vpop.f32.mrf.mxu0
      %v1515 = vadd.f32 0.0, %v1514
      %v1516 = vpop.f32.mrf.mxu0
      %1517 = vmatprep.mubr.f32.mxu0 %v1188
      %1518 = vmatmul.mubr.f32.gmra.mxu0 %v996
      %v1519 = vpop.f32.mrf.mxu0
      %v1520 = vadd.f32 0.0, %v1519
      %v1521 = vpop.f32.mrf.mxu0
      %1522 = vmatprep.mubr.f32.mxu0 %v1191
      %1523 = vmatmul.mubr.f32.gmra.mxu0 %v998
      %v1524 = vpop.f32.mrf.mxu0
      %v1525 = vadd.f32 0.0, %v1524
      %v1526 = vpop.f32.mrf.mxu0
      %1527 = vmatprep.mubr.f32.mxu0 %v1194
      %1528 = vmatmul.mubr.f32.gmra.mxu0 %v1000
      %v1529 = vpop.f32.mrf.mxu0
      %v1530 = vadd.f32 0.0, %v1529
      %v1531 = vpop.f32.mrf.mxu0
      %1532 = vmatprep.mubr.f32.mxu0 %v1197
      %1533 = vmatmul.mubr.f32.gmra.mxu0 %v1002
      %v1534 = vpop.f32.mrf.mxu0
      %v1535 = vadd.f32 0.0, %v1534
      %v1536 = vpop.f32.mrf.mxu0
      %1537 = vmatprep.mubr.f32.mxu0 %v1200
      %1538 = vmatmul.mubr.f32.gmra.mxu0 %v1004
      %v1539 = vpop.f32.mrf.mxu0
      %v1540 = vadd.f32 0.0, %v1539
      %v1541 = vpop.f32.mrf.mxu0
      %1542 = vmatprep.mubr.f32.mxu0 %v1203
      %1543 = vmatmul.mubr.f32.gmra.mxu0 %v1006
      %v1544 = vpop.f32.mrf.mxu0
      %v1545 = vadd.f32 0.0, %v1544
      %v1546 = vpop.f32.mrf.mxu0
      %1547 = vmatprep.mubr.f32.mxu0 %v1206
      %1548 = vmatmul.mubr.f32.gmra.mxu0 %v1008
      %v1549 = vpop.f32.mrf.mxu0
      %v1550 = vadd.f32 0.0, %v1549
      %v1551 = vpop.f32.mrf.mxu0
      %1552 = vmatprep.mubr.f32.mxu0 %v1209
      %1553 = vmatmul.mubr.f32.gmra.mxu0 %v1010
      %v1554 = vpop.f32.mrf.mxu0
      %v1555 = vadd.f32 0.0, %v1554
      %v1556 = vpop.f32.mrf.mxu0
      %1557 = vmatprep.mubr.f32.mxu0 %v1212
      %1558 = vmatmul.mubr.f32.gmra.mxu0 %v1012
      %v1559 = vpop.f32.mrf.mxu0
      %v1560 = vadd.f32 0.0, %v1559
      %v1561 = vpop.f32.mrf.mxu0
      %1562 = vmatprep.mubr.f32.mxu0 %v1215
      %1563 = vmatmul.mubr.f32.gmra.mxu0 %v1014
      %v1564 = vpop.f32.mrf.mxu0
      %v1565 = vadd.f32 0.0, %v1564
      %v1566 = vpop.f32.mrf.mxu0
      %1567 = vmatprep.mubr.f32.mxu0 %v1218
      %1568 = vmatmul.mubr.f32.gmra.mxu0 %v1016
      %v1569 = vpop.f32.mrf.mxu0
      %v1570 = vadd.f32 0.0, %v1569
      %v1571 = vpop.f32.mrf.mxu0
      %1572 = vmatprep.mubr.f32.mxu0 %v1221
      %1573 = vmatmul.mubr.f32.gmra.mxu0 %v1018
      %v1574 = vpop.f32.mrf.mxu0
      %v1575 = vadd.f32 0.0, %v1574
      %v1576 = vpop.f32.mrf.mxu0
      %1577 = vmatprep.mubr.f32.mxu0 %v1224
      %1578 = vmatmul.mubr.f32.gmra.mxu0 %v1020
      %v1579 = vpop.f32.mrf.mxu0
      %v1580 = vadd.f32 0.0, %v1579
      %v1581 = vpop.f32.mrf.mxu0
      %1582 = vmatprep.mubr.f32.mxu0 %v1227
      %1583 = vmatmul.mubr.f32.gmra.mxu0 %v1022
      %v1584 = vpop.f32.mrf.mxu0
      %v1585 = vadd.f32 0.0, %v1584
      %v1586 = vpop.f32.mrf.mxu0
      %1587 = vmatprep.mubr.f32.mxu0 %v1230
      %1588 = vmatmul.mubr.f32.gmra.mxu0 %v1024
      %v1589 = vpop.f32.mrf.mxu0
      %v1590 = vadd.f32 0.0, %v1589
      %v1591 = vpop.f32.mrf.mxu0
      %1592 = vmatprep.mubr.f32.mxu0 %v1233
      %1593 = vmatmul.mubr.f32.gmra.mxu0 %v1026
      %v1594 = vpop.f32.mrf.mxu0
      %v1595 = vadd.f32 0.0, %v1594
      %v1596 = vpop.f32.mrf.mxu0
      %1597 = vmatprep.mubr.f32.mxu0 %v1236
      %1598 = vmatmul.mubr.f32.gmra.mxu0 %v1028
      %v1599 = vpop.f32.mrf.mxu0
      %v1600 = vadd.f32 0.0, %v1599
      %v1601 = vpop.f32.mrf.mxu0
      %1602 = vmatprep.mubr.f32.mxu0 %v1239
      %1603 = vmatmul.mubr.f32.gmra.mxu0 %v1030
      %v1604 = vpop.f32.mrf.mxu0
      %v1605 = vadd.f32 0.0, %v1604
      %v1606 = vpop.f32.mrf.mxu0
      %1607 = vmatprep.mubr.f32.mxu0 %v1242
      %1608 = vmatmul.mubr.f32.gmra.mxu0 %v1032
      %v1609 = vpop.f32.mrf.mxu0
      %v1610 = vadd.f32 0.0, %v1609
      %v1611 = vpop.f32.mrf.mxu0
      %1612 = vmatprep.mubr.f32.mxu0 %v1245
      %1613 = vmatmul.mubr.f32.gmra.mxu0 %v1034
      %v1614 = vpop.f32.mrf.mxu0
      %v1615 = vadd.f32 0.0, %v1614
      %v1616 = vpop.f32.mrf.mxu0
      %1617 = vmatprep.mubr.f32.mxu0 %v1248
      %1618 = vmatmul.mubr.f32.gmra.mxu0 %v1036
      %v1619 = vpop.f32.mrf.mxu0
      %v1620 = vadd.f32 0.0, %v1619
      %v1621 = vpop.f32.mrf.mxu0
      %1622 = vmatprep.mubr.f32.mxu0 %v1251
      %1623 = vmatmul.mubr.f32.gmra.mxu0 %v1038
      %v1624 = vpop.f32.mrf.mxu0
      %v1625 = vadd.f32 0.0, %v1624
      %v1626 = vpop.f32.mrf.mxu0
      %1627 = vmatprep.mubr.f32.mxu0 %v1254
      %1628 = vmatmul.mubr.f32.gmra.mxu0 %v1040
      %v1629 = vpop.f32.mrf.mxu0
      %v1630 = vadd.f32 0.0, %v1629
      %v1631 = vpop.f32.mrf.mxu0
      %1632 = vmatprep.mubr.f32.mxu0 %v1257
      %1633 = vmatmul.mubr.f32.gmra.mxu0 %v1042
      %v1634 = vpop.f32.mrf.mxu0
      %v1635 = vadd.f32 0.0, %v1634
      %v1636 = vpop.f32.mrf.mxu0
      %1637 = vmatprep.mubr.f32.mxu0 %v1260
      %1638 = vmatmul.mubr.f32.gmra.mxu0 %v1044
      %v1639 = vpop.f32.mrf.mxu0
      %v1640 = vadd.f32 0.0, %v1639
      %v1641 = vpop.f32.mrf.mxu0
      %1642 = vmatprep.mubr.f32.mxu0 %v1263
      %1643 = vmatmul.mubr.f32.gmra.mxu0 %v1046
      %v1644 = vpop.f32.mrf.mxu0
      %v1645 = vadd.f32 0.0, %v1644
      %v1646 = vpop.f32.mrf.mxu0
      %1647 = vmatprep.mubr.f32.mxu0 %v1266
      %1648 = vmatmul.mubr.f32.gmra.mxu0 %v1048
      %v1649 = vpop.f32.mrf.mxu0
      %v1650 = vadd.f32 0.0, %v1649
      %v1651 = vpop.f32.mrf.mxu0
      %1652 = vdwg.mxu0
      %v1653 = vld [vmem:[%s4] sm:$0xff]
      %v1654 = vld [vmem:[%s4 + $0x8] sm:$0xff]
      %v1655 = vld [vmem:[%s4 + $0x10] sm:$0xff]
      %v1656 = vld [vmem:[%s4 + $0x18] sm:$0xff]
      %v1657 = vld [vmem:[%s4 + $0x20] sm:$0xff]
      %v1658 = vld [vmem:[%s4 + $0x28] sm:$0xff]
      %v1659 = vld [vmem:[%s4 + $0x30] sm:$0xff]
      %v1660 = vld [vmem:[%s4 + $0x38] sm:$0xff]
      %v1661 = vld [vmem:[%s4 + $0x40] sm:$0xff]
      %v1662 = vld [vmem:[%s4 + $0x48] sm:$0xff]
      %v1663 = vld [vmem:[%s4 + $0x50] sm:$0xff]
      %v1664 = vld [vmem:[%s4 + $0x58] sm:$0xff]
      %v1665 = vld [vmem:[%s4 + $0x60] sm:$0xff]
      %v1666 = vld [vmem:[%s4 + $0x68] sm:$0xff]
      %v1667 = vld [vmem:[%s4 + $0x70] sm:$0xff]
      %v1668 = vld [vmem:[%s4 + $0x78] sm:$0xff]
      %v1669 = vld [vmem:[%s4 + $0x80] sm:$0xff]
      %v1670 = vld [vmem:[%s4 + $0x88] sm:$0xff]
      %v1671 = vld [vmem:[%s4 + $0x90] sm:$0xff]
      %v1672 = vld [vmem:[%s4 + $0x98] sm:$0xff]
      %v1673 = vld [vmem:[%s4 + $0xa0] sm:$0xff]
      %v1674 = vld [vmem:[%s4 + $0xa8] sm:$0xff]
      %v1675 = vld [vmem:[%s4 + $0xb0] sm:$0xff]
      %v1676 = vld [vmem:[%s4 + $0xb8] sm:$0xff]
      %v1677 = vld [vmem:[%s4 + $0xc0] sm:$0xff]
      %1678 = vmatprep.subr.mxu0 0.0
      %1679 = vmatpush1.msra.mxu0 %v1668
      %1680 = vmatprep.subr.mxu0 0.0
      %1681 = vmatpush1.msra.mxu0 %v1667
      %1682 = vmatprep.subr.mxu0 0.0
      %1683 = vmatpush1.msra.mxu0 %v1666
      %1684 = vmatprep.subr.mxu0 0.0
      %1685 = vmatpush1.msra.mxu0 %v1665
      %1686 = vmatprep.subr.mxu0 0.0
      %1687 = vmatpush1.msra.mxu0 %v1664
      %1688 = vmatprep.subr.mxu0 0.0
      %1689 = vmatpush1.msra.mxu0 %v1663
      %1690 = vmatprep.subr.mxu0 0.0
      %1691 = vmatpush1.msra.mxu0 %v1662
      %1692 = vmatprep.subr.mxu0 0.0
      %1693 = vmatpush1.msra.mxu0 %v1661
      %1694 = vmatprep.subr.mxu0 0.0
      %1695 = vmatpush1.msra.mxu0 %v1660
      %1696 = vmatprep.subr.mxu0 0.0
      %1697 = vmatpush1.msra.mxu0 %v1659
      %1698 = vmatprep.subr.mxu0 0.0
      %1699 = vmatpush1.msra.mxu0 %v1658
      %1700 = vmatprep.subr.mxu0 0.0
      %1701 = vmatpush1.msra.mxu0 %v1657
      %1702 = vmatprep.subr.mxu0 0.0
      %1703 = vmatpush1.msra.mxu0 %v1656
      %1704 = vmatprep.subr.mxu0 0.0
      %1705 = vmatpush1.msra.mxu0 %v1655
      %1706 = vmatprep.subr.mxu0 0.0
      %1707 = vmatpush1.msra.mxu0 %v1654
      %1708 = vmatprep.subr.mxu0 0.0
      %1709 = vmatpush1.msra.mxu0 %v1653
      %1710 = vmatprep.subr.mxu0 0.0
      %1711 = vmatpush2.msra.mxu0 0.0
      %1712 = vmatprep.subr.mxu0 0.0
      %1713 = vmatpush2.msra.mxu0 0.0
      %1714 = vmatprep.subr.mxu0 0.0
      %1715 = vmatpush2.msra.mxu0 0.0
      %1716 = vmatprep.subr.mxu0 0.0
      %1717 = vmatpush2.msra.mxu0 0.0
      %1718 = vmatprep.subr.mxu0 0.0
      %1719 = vmatpush2.msra.mxu0 0.0
      %1720 = vmatprep.subr.mxu0 0.0
      %1721 = vmatpush2.msra.mxu0 0.0
      %1722 = vmatprep.subr.mxu0 0.0
      %1723 = vmatpush2.msra.mxu0 0.0
      %1724 = vmatprep.subr.mxu0 0.0
      %1725 = vmatpush2.msra.mxu0 %v1677
      %1726 = vmatprep.subr.mxu0 0.0
      %1727 = vmatpush2.msra.mxu0 %v1676
      %1728 = vmatprep.subr.mxu0 0.0
      %1729 = vmatpush2.msra.mxu0 %v1675
      %1730 = vmatprep.subr.mxu0 0.0
      %1731 = vmatpush2.msra.mxu0 %v1674
      %1732 = vmatprep.subr.mxu0 0.0
      %1733 = vmatpush2.msra.mxu0 %v1673
      %1734 = vmatprep.subr.mxu0 0.0
      %1735 = vmatpush2.msra.mxu0 %v1672
      %1736 = vmatprep.subr.mxu0 0.0
      %1737 = vmatpush2.msra.mxu0 %v1671
      %1738 = vmatprep.subr.mxu0 0.0
      %1739 = vmatpush2.msra.mxu0 %v1670
      %1740 = vmatprep.subr.mxu0 0.0
      %1741 = vmatpush2.msra.mxu0 %v1669
      %1742 = vmatprep.mubr.f32.mxu0 %v1077
      %1743 = vmatmul.mubr.f32.gmra.mxu0 %v922
      %v1744 = vpop.f32.mrf.mxu0
      %v1745 = vadd.f32 0.0, %v1744
      %v1746 = vpop.f32.mrf.mxu0
      %1747 = vmatprep.mubr.f32.mxu0 %v1080
      %1748 = vmatmul.mubr.f32.gmra.mxu0 %v924
      %v1749 = vpop.f32.mrf.mxu0
      %v1750 = vadd.f32 0.0, %v1749
      %v1751 = vpop.f32.mrf.mxu0
      %1752 = vmatprep.mubr.f32.mxu0 %v1083
      %1753 = vmatmul.mubr.f32.gmra.mxu0 %v926
      %v1754 = vpop.f32.mrf.mxu0
      %v1755 = vadd.f32 0.0, %v1754
      %v1756 = vpop.f32.mrf.mxu0
      %1757 = vmatprep.mubr.f32.mxu0 %v1086
      %1758 = vmatmul.mubr.f32.gmra.mxu0 %v928
      %v1759 = vpop.f32.mrf.mxu0
      %v1760 = vadd.f32 0.0, %v1759
      %v1761 = vpop.f32.mrf.mxu0
      %1762 = vmatprep.mubr.f32.mxu0 %v1089
      %1763 = vmatmul.mubr.f32.gmra.mxu0 %v930
      %v1764 = vpop.f32.mrf.mxu0
      %v1765 = vadd.f32 0.0, %v1764
      %v1766 = vpop.f32.mrf.mxu0
      %1767 = vmatprep.mubr.f32.mxu0 %v1092
      %1768 = vmatmul.mubr.f32.gmra.mxu0 %v932
      %v1769 = vpop.f32.mrf.mxu0
      %v1770 = vadd.f32 0.0, %v1769
      %v1771 = vpop.f32.mrf.mxu0
      %1772 = vmatprep.mubr.f32.mxu0 %v1095
      %1773 = vmatmul.mubr.f32.gmra.mxu0 %v934
      %v1774 = vpop.f32.mrf.mxu0
      %v1775 = vadd.f32 0.0, %v1774
      %v1776 = vpop.f32.mrf.mxu0
      %1777 = vmatprep.mubr.f32.mxu0 %v1098
      %1778 = vmatmul.mubr.f32.gmra.mxu0 %v936
      %v1779 = vpop.f32.mrf.mxu0
      %v1780 = vadd.f32 0.0, %v1779
      %v1781 = vpop.f32.mrf.mxu0
      %1782 = vmatprep.mubr.f32.mxu0 %v1101
      %1783 = vmatmul.mubr.f32.gmra.mxu0 %v938
      %v1784 = vpop.f32.mrf.mxu0
      %v1785 = vadd.f32 0.0, %v1784
      %v1786 = vpop.f32.mrf.mxu0
      %1787 = vmatprep.mubr.f32.mxu0 %v1104
      %1788 = vmatmul.mubr.f32.gmra.mxu0 %v940
      %v1789 = vpop.f32.mrf.mxu0
      %v1790 = vadd.f32 0.0, %v1789
      %v1791 = vpop.f32.mrf.mxu0
      %1792 = vmatprep.mubr.f32.mxu0 %v1107
      %1793 = vmatmul.mubr.f32.gmra.mxu0 %v942
      %v1794 = vpop.f32.mrf.mxu0
      %v1795 = vadd.f32 0.0, %v1794
      %v1796 = vpop.f32.mrf.mxu0
      %1797 = vmatprep.mubr.f32.mxu0 %v1110
      %1798 = vmatmul.mubr.f32.gmra.mxu0 %v944
      %v1799 = vpop.f32.mrf.mxu0
      %v1800 = vadd.f32 0.0, %v1799
      %v1801 = vpop.f32.mrf.mxu0
      %1802 = vmatprep.mubr.f32.mxu0 %v1113
      %1803 = vmatmul.mubr.f32.gmra.mxu0 %v946
      %v1804 = vpop.f32.mrf.mxu0
      %v1805 = vadd.f32 0.0, %v1804
      %v1806 = vpop.f32.mrf.mxu0
      %1807 = vmatprep.mubr.f32.mxu0 %v1116
      %1808 = vmatmul.mubr.f32.gmra.mxu0 %v948
      %v1809 = vpop.f32.mrf.mxu0
      %v1810 = vadd.f32 0.0, %v1809
      %v1811 = vpop.f32.mrf.mxu0
      %1812 = vmatprep.mubr.f32.mxu0 %v1119
      %1813 = vmatmul.mubr.f32.gmra.mxu0 %v950
      %v1814 = vpop.f32.mrf.mxu0
      %v1815 = vadd.f32 0.0, %v1814
      %v1816 = vpop.f32.mrf.mxu0
      %1817 = vmatprep.mubr.f32.mxu0 %v1122
      %1818 = vmatmul.mubr.f32.gmra.mxu0 %v952
      %v1819 = vpop.f32.mrf.mxu0
      %v1820 = vadd.f32 0.0, %v1819
      %v1821 = vpop.f32.mrf.mxu0
      %1822 = vmatprep.mubr.f32.mxu0 %v1125
      %1823 = vmatmul.mubr.f32.gmra.mxu0 %v954
      %v1824 = vpop.f32.mrf.mxu0
      %v1825 = vadd.f32 0.0, %v1824
      %v1826 = vpop.f32.mrf.mxu0
      %1827 = vmatprep.mubr.f32.mxu0 %v1128
      %1828 = vmatmul.mubr.f32.gmra.mxu0 %v956
      %v1829 = vpop.f32.mrf.mxu0
      %v1830 = vadd.f32 0.0, %v1829
      %v1831 = vpop.f32.mrf.mxu0
      %1832 = vmatprep.mubr.f32.mxu0 %v1131
      %1833 = vmatmul.mubr.f32.gmra.mxu0 %v958
      %v1834 = vpop.f32.mrf.mxu0
      %v1835 = vadd.f32 0.0, %v1834
      %v1836 = vpop.f32.mrf.mxu0
      %1837 = vmatprep.mubr.f32.mxu0 %v1134
      %1838 = vmatmul.mubr.f32.gmra.mxu0 %v960
      %v1839 = vpop.f32.mrf.mxu0
      %v1840 = vadd.f32 0.0, %v1839
      %v1841 = vpop.f32.mrf.mxu0
      %1842 = vmatprep.mubr.f32.mxu0 %v1137
      %1843 = vmatmul.mubr.f32.gmra.mxu0 %v962
      %v1844 = vpop.f32.mrf.mxu0
      %v1845 = vadd.f32 0.0, %v1844
      %v1846 = vpop.f32.mrf.mxu0
      %1847 = vmatprep.mubr.f32.mxu0 %v1140
      %1848 = vmatmul.mubr.f32.gmra.mxu0 %v964
      %v1849 = vpop.f32.mrf.mxu0
      %v1850 = vadd.f32 0.0, %v1849
      %v1851 = vpop.f32.mrf.mxu0
      %1852 = vmatprep.mubr.f32.mxu0 %v1143
      %1853 = vmatmul.mubr.f32.gmra.mxu0 %v966
      %v1854 = vpop.f32.mrf.mxu0
      %v1855 = vadd.f32 0.0, %v1854
      %v1856 = vpop.f32.mrf.mxu0
      %1857 = vmatprep.mubr.f32.mxu0 %v1146
      %1858 = vmatmul.mubr.f32.gmra.mxu0 %v968
      %v1859 = vpop.f32.mrf.mxu0
      %v1860 = vadd.f32 0.0, %v1859
      %v1861 = vpop.f32.mrf.mxu0
      %1862 = vmatprep.mubr.f32.mxu0 %v1149
      %1863 = vmatmul.mubr.f32.gmra.mxu0 %v970
      %v1864 = vpop.f32.mrf.mxu0
      %v1865 = vadd.f32 0.0, %v1864
      %v1866 = vpop.f32.mrf.mxu0
      %1867 = vmatprep.mubr.f32.mxu0 %v1152
      %1868 = vmatmul.mubr.f32.gmra.mxu0 %v972
      %v1869 = vpop.f32.mrf.mxu0
      %v1870 = vadd.f32 0.0, %v1869
      %v1871 = vpop.f32.mrf.mxu0
      %1872 = vmatprep.mubr.f32.mxu0 %v1155
      %1873 = vmatmul.mubr.f32.gmra.mxu0 %v974
      %v1874 = vpop.f32.mrf.mxu0
      %v1875 = vadd.f32 0.0, %v1874
      %v1876 = vpop.f32.mrf.mxu0
      %1877 = vmatprep.mubr.f32.mxu0 %v1158
      %1878 = vmatmul.mubr.f32.gmra.mxu0 %v976
      %v1879 = vpop.f32.mrf.mxu0
      %v1880 = vadd.f32 0.0, %v1879
      %v1881 = vpop.f32.mrf.mxu0
      %1882 = vmatprep.mubr.f32.mxu0 %v1161
      %1883 = vmatmul.mubr.f32.gmra.mxu0 %v978
      %v1884 = vpop.f32.mrf.mxu0
      %v1885 = vadd.f32 0.0, %v1884
      %v1886 = vpop.f32.mrf.mxu0
      %1887 = vmatprep.mubr.f32.mxu0 %v1164
      %1888 = vmatmul.mubr.f32.gmra.mxu0 %v980
      %v1889 = vpop.f32.mrf.mxu0
      %v1890 = vadd.f32 0.0, %v1889
      %v1891 = vpop.f32.mrf.mxu0
      %1892 = vmatprep.mubr.f32.mxu0 %v1167
      %1893 = vmatmul.mubr.f32.gmra.mxu0 %v982
      %v1894 = vpop.f32.mrf.mxu0
      %v1895 = vadd.f32 0.0, %v1894
      %v1896 = vpop.f32.mrf.mxu0
      %1897 = vmatprep.mubr.f32.mxu0 %v1170
      %1898 = vmatmul.mubr.f32.gmra.mxu0 %v984
      %v1899 = vpop.f32.mrf.mxu0
      %v1900 = vadd.f32 0.0, %v1899
      %v1901 = vpop.f32.mrf.mxu0
      %1902 = vmatprep.mubr.f32.mxu0 %v1173
      %1903 = vmatmul.mubr.f32.gmra.mxu0 %v986
      %v1904 = vpop.f32.mrf.mxu0
      %v1905 = vadd.f32 0.0, %v1904
      %v1906 = vpop.f32.mrf.mxu0
      %1907 = vmatprep.mubr.f32.mxu0 %v1176
      %1908 = vmatmul.mubr.f32.gmra.mxu0 %v988
      %v1909 = vpop.f32.mrf.mxu0
      %v1910 = vadd.f32 0.0, %v1909
      %v1911 = vpop.f32.mrf.mxu0
      %1912 = vmatprep.mubr.f32.mxu0 %v1179
      %1913 = vmatmul.mubr.f32.gmra.mxu0 %v990
      %v1914 = vpop.f32.mrf.mxu0
      %v1915 = vadd.f32 0.0, %v1914
      %v1916 = vpop.f32.mrf.mxu0
      %1917 = vmatprep.mubr.f32.mxu0 %v1182
      %1918 = vmatmul.mubr.f32.gmra.mxu0 %v992
      %v1919 = vpop.f32.mrf.mxu0
      %v1920 = vadd.f32 0.0, %v1919
      %v1921 = vpop.f32.mrf.mxu0
      %1922 = vmatprep.mubr.f32.mxu0 %v1185
      %1923 = vmatmul.mubr.f32.gmra.mxu0 %v994
      %v1924 = vpop.f32.mrf.mxu0
      %v1925 = vadd.f32 0.0, %v1924
      %v1926 = vpop.f32.mrf.mxu0
      %1927 = vmatprep.mubr.f32.mxu0 %v1188
      %1928 = vmatmul.mubr.f32.gmra.mxu0 %v996
      %v1929 = vpop.f32.mrf.mxu0
      %v1930 = vadd.f32 0.0, %v1929
      %v1931 = vpop.f32.mrf.mxu0
      %1932 = vmatprep.mubr.f32.mxu0 %v1191
      %1933 = vmatmul.mubr.f32.gmra.mxu0 %v998
      %v1934 = vpop.f32.mrf.mxu0
      %v1935 = vadd.f32 0.0, %v1934
      %v1936 = vpop.f32.mrf.mxu0
      %1937 = vmatprep.mubr.f32.mxu0 %v1194
      %1938 = vmatmul.mubr.f32.gmra.mxu0 %v1000
      %v1939 = vpop.f32.mrf.mxu0
      %v1940 = vadd.f32 0.0, %v1939
      %v1941 = vpop.f32.mrf.mxu0
      %1942 = vmatprep.mubr.f32.mxu0 %v1197
      %1943 = vmatmul.mubr.f32.gmra.mxu0 %v1002
      %v1944 = vpop.f32.mrf.mxu0
      %v1945 = vadd.f32 0.0, %v1944
      %v1946 = vpop.f32.mrf.mxu0
      %1947 = vmatprep.mubr.f32.mxu0 %v1200
      %1948 = vmatmul.mubr.f32.gmra.mxu0 %v1004
      %v1949 = vpop.f32.mrf.mxu0
      %v1950 = vadd.f32 0.0, %v1949
      %v1951 = vpop.f32.mrf.mxu0
      %1952 = vmatprep.mubr.f32.mxu0 %v1203
      %1953 = vmatmul.mubr.f32.gmra.mxu0 %v1006
      %v1954 = vpop.f32.mrf.mxu0
      %v1955 = vadd.f32 0.0, %v1954
      %v1956 = vpop.f32.mrf.mxu0
      %1957 = vmatprep.mubr.f32.mxu0 %v1206
      %1958 = vmatmul.mubr.f32.gmra.mxu0 %v1008
      %v1959 = vpop.f32.mrf.mxu0
      %v1960 = vadd.f32 0.0, %v1959
      %v1961 = vpop.f32.mrf.mxu0
      %1962 = vmatprep.mubr.f32.mxu0 %v1209
      %1963 = vmatmul.mubr.f32.gmra.mxu0 %v1010
      %v1964 = vpop.f32.mrf.mxu0
      %v1965 = vadd.f32 0.0, %v1964
      %v1966 = vpop.f32.mrf.mxu0
      %1967 = vmatprep.mubr.f32.mxu0 %v1212
      %1968 = vmatmul.mubr.f32.gmra.mxu0 %v1012
      %v1969 = vpop.f32.mrf.mxu0
      %v1970 = vadd.f32 0.0, %v1969
      %v1971 = vpop.f32.mrf.mxu0
      %1972 = vmatprep.mubr.f32.mxu0 %v1215
      %1973 = vmatmul.mubr.f32.gmra.mxu0 %v1014
      %v1974 = vpop.f32.mrf.mxu0
      %v1975 = vadd.f32 0.0, %v1974
      %v1976 = vpop.f32.mrf.mxu0
      %1977 = vmatprep.mubr.f32.mxu0 %v1218
      %1978 = vmatmul.mubr.f32.gmra.mxu0 %v1016
      %v1979 = vpop.f32.mrf.mxu0
      %v1980 = vadd.f32 0.0, %v1979
      %v1981 = vpop.f32.mrf.mxu0
      %1982 = vmatprep.mubr.f32.mxu0 %v1221
      %1983 = vmatmul.mubr.f32.gmra.mxu0 %v1018
      %v1984 = vpop.f32.mrf.mxu0
      %v1985 = vadd.f32 0.0, %v1984
      %v1986 = vpop.f32.mrf.mxu0
      %1987 = vmatprep.mubr.f32.mxu0 %v1224
      %1988 = vmatmul.mubr.f32.gmra.mxu0 %v1020
      %v1989 = vpop.f32.mrf.mxu0
      %v1990 = vadd.f32 0.0, %v1989
      %v1991 = vpop.f32.mrf.mxu0
      %1992 = vmatprep.mubr.f32.mxu0 %v1227
      %1993 = vmatmul.mubr.f32.gmra.mxu0 %v1022
      %v1994 = vpop.f32.mrf.mxu0
      %v1995 = vadd.f32 0.0, %v1994
      %v1996 = vpop.f32.mrf.mxu0
      %1997 = vmatprep.mubr.f32.mxu0 %v1230
      %1998 = vmatmul.mubr.f32.gmra.mxu0 %v1024
      %v1999 = vpop.f32.mrf.mxu0
      %v2000 = vadd.f32 0.0, %v1999
      %v2001 = vpop.f32.mrf.mxu0
      %2002 = vmatprep.mubr.f32.mxu0 %v1233
      %2003 = vmatmul.mubr.f32.gmra.mxu0 %v1026
      %v2004 = vpop.f32.mrf.mxu0
      %v2005 = vadd.f32 0.0, %v2004
      %v2006 = vpop.f32.mrf.mxu0
      %2007 = vmatprep.mubr.f32.mxu0 %v1236
      %2008 = vmatmul.mubr.f32.gmra.mxu0 %v1028
      %v2009 = vpop.f32.mrf.mxu0
      %v2010 = vadd.f32 0.0, %v2009
      %v2011 = vpop.f32.mrf.mxu0
      %2012 = vmatprep.mubr.f32.mxu0 %v1239
      %2013 = vmatmul.mubr.f32.gmra.mxu0 %v1030
      %v2014 = vpop.f32.mrf.mxu0
      %v2015 = vadd.f32 0.0, %v2014
      %v2016 = vpop.f32.mrf.mxu0
      %2017 = vmatprep.mubr.f32.mxu0 %v1242
      %2018 = vmatmul.mubr.f32.gmra.mxu0 %v1032
      %v2019 = vpop.f32.mrf.mxu0
      %v2020 = vadd.f32 0.0, %v2019
      %v2021 = vpop.f32.mrf.mxu0
      %2022 = vmatprep.mubr.f32.mxu0 %v1245
      %2023 = vmatmul.mubr.f32.gmra.mxu0 %v1034
      %v2024 = vpop.f32.mrf.mxu0
      %v2025 = vadd.f32 0.0, %v2024
      %v2026 = vpop.f32.mrf.mxu0
      %2027 = vmatprep.mubr.f32.mxu0 %v1248
      %2028 = vmatmul.mubr.f32.gmra.mxu0 %v1036
      %v2029 = vpop.f32.mrf.mxu0
      %v2030 = vadd.f32 0.0, %v2029
      %v2031 = vpop.f32.mrf.mxu0
      %2032 = vmatprep.mubr.f32.mxu0 %v1251
      %2033 = vmatmul.mubr.f32.gmra.mxu0 %v1038
      %v2034 = vpop.f32.mrf.mxu0
      %v2035 = vadd.f32 0.0, %v2034
      %v2036 = vpop.f32.mrf.mxu0
      %2037 = vmatprep.mubr.f32.mxu0 %v1254
      %2038 = vmatmul.mubr.f32.gmra.mxu0 %v1040
      %v2039 = vpop.f32.mrf.mxu0
      %v2040 = vadd.f32 0.0, %v2039
      %v2041 = vpop.f32.mrf.mxu0
      %2042 = vmatprep.mubr.f32.mxu0 %v1257
      %2043 = vmatmul.mubr.f32.gmra.mxu0 %v1042
      %v2044 = vpop.f32.mrf.mxu0
      %v2045 = vadd.f32 0.0, %v2044
      %v2046 = vpop.f32.mrf.mxu0
      %2047 = vmatprep.mubr.f32.mxu0 %v1260
      %2048 = vmatmul.mubr.f32.gmra.mxu0 %v1044
      %v2049 = vpop.f32.mrf.mxu0
      %v2050 = vadd.f32 0.0, %v2049
      %v2051 = vpop.f32.mrf.mxu0
      %2052 = vmatprep.mubr.f32.mxu0 %v1263
      %2053 = vmatmul.mubr.f32.gmra.mxu0 %v1046
      %v2054 = vpop.f32.mrf.mxu0
      %v2055 = vadd.f32 0.0, %v2054
      %v2056 = vpop.f32.mrf.mxu0
      %2057 = vmatprep.mubr.f32.mxu0 %v1266
      %2058 = vmatmul.mubr.f32.gmra.mxu0 %v1048
      %v2059 = vpop.f32.mrf.mxu0
      %v2060 = vadd.f32 0.0, %v2059
      %v2061 = vpop.f32.mrf.mxu0
      %2062 = vdwg.mxu0
      %v2063 = vld [vmem:[%s5] sm:$0xff]
      %v2064 = vld [vmem:[%s5 + $0x8] sm:$0xff]
      %v2065 = vld [vmem:[%s5 + $0x10] sm:$0xff]
      %v2066 = vld [vmem:[%s5 + $0x18] sm:$0xff]
      %vm2067 = vcmask 261120
      %v2069 = vsel %vm2067, %v1745, 0
      %v2072 = vsel %vm2067, %v1750, 0
      %v2075 = vsel %vm2067, %v1755, 0
      %v2078 = vsel %vm2067, %v1760, 0
      %v2081 = vsel %vm2067, %v1765, 0
      %v2084 = vsel %vm2067, %v1770, 0
      %v2087 = vsel %vm2067, %v1775, 0
      %v2090 = vsel %vm2067, %v1780, 0
      %v2093 = vsel %vm2067, %v1785, 0
      %v2096 = vsel %vm2067, %v1790, 0
      %v2099 = vsel %vm2067, %v1795, 0
      %v2102 = vsel %vm2067, %v1800, 0
      %v2105 = vsel %vm2067, %v1805, 0
      %v2108 = vsel %vm2067, %v1810, 0
      %v2111 = vsel %vm2067, %v1815, 0
      %v2114 = vsel %vm2067, %v1820, 0
      %v2117 = vsel %vm2067, %v1825, 0
      %v2120 = vsel %vm2067, %v1830, 0
      %v2123 = vsel %vm2067, %v1835, 0
      %v2126 = vsel %vm2067, %v1840, 0
      %v2129 = vsel %vm2067, %v1845, 0
      %v2132 = vsel %vm2067, %v1850, 0
      %v2135 = vsel %vm2067, %v1855, 0
      %v2138 = vsel %vm2067, %v1860, 0
      %v2141 = vsel %vm2067, %v1865, 0
      %v2144 = vsel %vm2067, %v1870, 0
      %v2147 = vsel %vm2067, %v1875, 0
      %v2150 = vsel %vm2067, %v1880, 0
      %v2153 = vsel %vm2067, %v1885, 0
      %v2156 = vsel %vm2067, %v1890, 0
      %v2159 = vsel %vm2067, %v1895, 0
      %v2162 = vsel %vm2067, %v1900, 0
      %v2165 = vsel %vm2067, %v1905, 0
      %v2168 = vsel %vm2067, %v1910, 0
      %v2171 = vsel %vm2067, %v1915, 0
      %v2174 = vsel %vm2067, %v1920, 0
      %v2177 = vsel %vm2067, %v1925, 0
      %v2180 = vsel %vm2067, %v1930, 0
      %v2183 = vsel %vm2067, %v1935, 0
      %v2186 = vsel %vm2067, %v1940, 0
      %v2189 = vsel %vm2067, %v1945, 0
      %v2192 = vsel %vm2067, %v1950, 0
      %v2195 = vsel %vm2067, %v1955, 0
      %v2198 = vsel %vm2067, %v1960, 0
      %v2201 = vsel %vm2067, %v1965, 0
      %v2204 = vsel %vm2067, %v1970, 0
      %v2207 = vsel %vm2067, %v1975, 0
      %v2210 = vsel %vm2067, %v1980, 0
      %v2213 = vsel %vm2067, %v1985, 0
      %v2216 = vsel %vm2067, %v1990, 0
      %v2219 = vsel %vm2067, %v1995, 0
      %v2222 = vsel %vm2067, %v2000, 0
      %v2225 = vsel %vm2067, %v2005, 0
      %v2228 = vsel %vm2067, %v2010, 0
      %v2231 = vsel %vm2067, %v2015, 0
      %v2234 = vsel %vm2067, %v2020, 0
      %v2237 = vsel %vm2067, %v2025, 0
      %v2240 = vsel %vm2067, %v2030, 0
      %v2243 = vsel %vm2067, %v2035, 0
      %v2246 = vsel %vm2067, %v2040, 0
      %v2249 = vsel %vm2067, %v2045, 0
      %v2252 = vsel %vm2067, %v2050, 0
      %v2255 = vsel %vm2067, %v2055, 0
      %v2258 = vsel %vm2067, %v2060, 0
      %2260 = vmatprep.subr.mxu0 0.0
      %2261 = vmatpush1.msra.mxu0 0.0
      %2262 = vmatprep.subr.mxu0 0.0
      %2263 = vmatpush1.msra.mxu0 0.0
      %2264 = vmatprep.subr.mxu0 0.0
      %2265 = vmatpush1.msra.mxu0 0.0
      %2266 = vmatprep.subr.mxu0 0.0
      %2267 = vmatpush1.msra.mxu0 0.0
      %2268 = vmatprep.subr.mxu0 0.0
      %2269 = vmatpush1.msra.mxu0 0.0
      %2270 = vmatprep.subr.mxu0 0.0
      %2271 = vmatpush1.msra.mxu0 0.0
      %2272 = vmatprep.subr.mxu0 0.0
      %2273 = vmatpush1.msra.mxu0 0.0
      %2274 = vmatprep.subr.mxu0 0.0
      %2275 = vmatpush1.msra.mxu0 0.0
      %2276 = vmatprep.subr.mxu0 0.0
      %2277 = vmatpush1.msra.mxu0 0.0
      %2278 = vmatprep.subr.mxu0 0.0
      %2279 = vmatpush1.msra.mxu0 0.0
      %2280 = vmatprep.subr.mxu0 0.0
      %2281 = vmatpush1.msra.mxu0 0.0
      %2282 = vmatprep.subr.mxu0 0.0
      %2283 = vmatpush1.msra.mxu0 0.0
      %2284 = vmatprep.subr.mxu0 0.0
      %2285 = vmatpush1.msra.mxu0 %v2066
      %2286 = vmatprep.subr.mxu0 0.0
      %2287 = vmatpush1.msra.mxu0 %v2065
      %2288 = vmatprep.subr.mxu0 0.0
      %2289 = vmatpush1.msra.mxu0 %v2064
      %2290 = vmatprep.subr.mxu0 0.0
      %2291 = vmatpush1.msra.mxu0 %v2063
      %2292 = vmatprep.subr.mxu0 0.0
      %2293 = vmatpush2.msra.mxu0 0.0
      %2294 = vmatprep.subr.mxu0 0.0
      %2295 = vmatpush2.msra.mxu0 0.0
      %2296 = vmatprep.subr.mxu0 0.0
      %2297 = vmatpush2.msra.mxu0 0.0
      %2298 = vmatprep.subr.mxu0 0.0
      %2299 = vmatpush2.msra.mxu0 0.0
      %2300 = vmatprep.subr.mxu0 0.0
      %2301 = vmatpush2.msra.mxu0 0.0
      %2302 = vmatprep.subr.mxu0 0.0
      %2303 = vmatpush2.msra.mxu0 0.0
      %2304 = vmatprep.subr.mxu0 0.0
      %2305 = vmatpush2.msra.mxu0 0.0
      %2306 = vmatprep.subr.mxu0 0.0
      %2307 = vmatpush2.msra.mxu0 0.0
      %2308 = vmatprep.subr.mxu0 0.0
      %2309 = vmatpush2.msra.mxu0 0.0
      %2310 = vmatprep.subr.mxu0 0.0
      %2311 = vmatpush2.msra.mxu0 0.0
      %2312 = vmatprep.subr.mxu0 0.0
      %2313 = vmatpush2.msra.mxu0 0.0
      %2314 = vmatprep.subr.mxu0 0.0
      %2315 = vmatpush2.msra.mxu0 0.0
      %2316 = vmatprep.subr.mxu0 0.0
      %2317 = vmatpush2.msra.mxu0 0.0
      %2318 = vmatprep.subr.mxu0 0.0
      %2319 = vmatpush2.msra.mxu0 0.0
      %2320 = vmatprep.subr.mxu0 0.0
      %2321 = vmatpush2.msra.mxu0 0.0
      %2322 = vmatprep.subr.mxu0 0.0
      %2323 = vmatpush2.msra.mxu0 0.0
      %2324 = vmatprep.mubr.f32.mxu0 0.0
      %2325 = vmatmul.mubr.f32.gmra.mxu0 %v2069
      %v2326 = vpop.f32.mrf.mxu0
      %v2327 = vadd.f32 0.0, %v2326
      %v2328 = vpop.f32.mrf.mxu0
      %2329 = vmatprep.mubr.f32.mxu0 0.0
      %2330 = vmatmul.mubr.f32.gmra.mxu0 %v2072
      %v2331 = vpop.f32.mrf.mxu0
      %v2332 = vadd.f32 0.0, %v2331
      %v2333 = vpop.f32.mrf.mxu0
      %2334 = vmatprep.mubr.f32.mxu0 0.0
      %2335 = vmatmul.mubr.f32.gmra.mxu0 %v2075
      %v2336 = vpop.f32.mrf.mxu0
      %v2337 = vadd.f32 0.0, %v2336
      %v2338 = vpop.f32.mrf.mxu0
      %2339 = vmatprep.mubr.f32.mxu0 0.0
      %2340 = vmatmul.mubr.f32.gmra.mxu0 %v2078
      %v2341 = vpop.f32.mrf.mxu0
      %v2342 = vadd.f32 0.0, %v2341
      %v2343 = vpop.f32.mrf.mxu0
      %2344 = vmatprep.mubr.f32.mxu0 0.0
      %2345 = vmatmul.mubr.f32.gmra.mxu0 %v2081
      %v2346 = vpop.f32.mrf.mxu0
      %v2347 = vadd.f32 0.0, %v2346
      %v2348 = vpop.f32.mrf.mxu0
      %2349 = vmatprep.mubr.f32.mxu0 0.0
      %2350 = vmatmul.mubr.f32.gmra.mxu0 %v2084
      %v2351 = vpop.f32.mrf.mxu0
      %v2352 = vadd.f32 0.0, %v2351
      %v2353 = vpop.f32.mrf.mxu0
      %2354 = vmatprep.mubr.f32.mxu0 0.0
      %2355 = vmatmul.mubr.f32.gmra.mxu0 %v2087
      %v2356 = vpop.f32.mrf.mxu0
      %v2357 = vadd.f32 0.0, %v2356
      %v2358 = vpop.f32.mrf.mxu0
      %2359 = vmatprep.mubr.f32.mxu0 0.0
      %2360 = vmatmul.mubr.f32.gmra.mxu0 %v2090
      %v2361 = vpop.f32.mrf.mxu0
      %v2362 = vadd.f32 0.0, %v2361
      %v2363 = vpop.f32.mrf.mxu0
      %2364 = vmatprep.mubr.f32.mxu0 0.0
      %2365 = vmatmul.mubr.f32.gmra.mxu0 %v2093
      %v2366 = vpop.f32.mrf.mxu0
      %v2367 = vadd.f32 0.0, %v2366
      %v2368 = vpop.f32.mrf.mxu0
      %2369 = vmatprep.mubr.f32.mxu0 0.0
      %2370 = vmatmul.mubr.f32.gmra.mxu0 %v2096
      %v2371 = vpop.f32.mrf.mxu0
      %v2372 = vadd.f32 0.0, %v2371
      %v2373 = vpop.f32.mrf.mxu0
      %2374 = vmatprep.mubr.f32.mxu0 0.0
      %2375 = vmatmul.mubr.f32.gmra.mxu0 %v2099
      %v2376 = vpop.f32.mrf.mxu0
      %v2377 = vadd.f32 0.0, %v2376
      %v2378 = vpop.f32.mrf.mxu0
      %2379 = vmatprep.mubr.f32.mxu0 0.0
      %2380 = vmatmul.mubr.f32.gmra.mxu0 %v2102
      %v2381 = vpop.f32.mrf.mxu0
      %v2382 = vadd.f32 0.0, %v2381
      %v2383 = vpop.f32.mrf.mxu0
      %2384 = vmatprep.mubr.f32.mxu0 0.0
      %2385 = vmatmul.mubr.f32.gmra.mxu0 %v2105
      %v2386 = vpop.f32.mrf.mxu0
      %v2387 = vadd.f32 0.0, %v2386
      %v2388 = vpop.f32.mrf.mxu0
      %2389 = vmatprep.mubr.f32.mxu0 0.0
      %2390 = vmatmul.mubr.f32.gmra.mxu0 %v2108
      %v2391 = vpop.f32.mrf.mxu0
      %v2392 = vadd.f32 0.0, %v2391
      %v2393 = vpop.f32.mrf.mxu0
      %2394 = vmatprep.mubr.f32.mxu0 0.0
      %2395 = vmatmul.mubr.f32.gmra.mxu0 %v2111
      %v2396 = vpop.f32.mrf.mxu0
      %v2397 = vadd.f32 0.0, %v2396
      %v2398 = vpop.f32.mrf.mxu0
      %2399 = vmatprep.mubr.f32.mxu0 0.0
      %2400 = vmatmul.mubr.f32.gmra.mxu0 %v2114
      %v2401 = vpop.f32.mrf.mxu0
      %v2402 = vadd.f32 0.0, %v2401
      %v2403 = vpop.f32.mrf.mxu0
      %2404 = vmatprep.mubr.f32.mxu0 0.0
      %2405 = vmatmul.mubr.f32.gmra.mxu0 %v2117
      %v2406 = vpop.f32.mrf.mxu0
      %v2407 = vadd.f32 0.0, %v2406
      %v2408 = vpop.f32.mrf.mxu0
      %2409 = vmatprep.mubr.f32.mxu0 0.0
      %2410 = vmatmul.mubr.f32.gmra.mxu0 %v2120
      %v2411 = vpop.f32.mrf.mxu0
      %v2412 = vadd.f32 0.0, %v2411
      %v2413 = vpop.f32.mrf.mxu0
      %2414 = vmatprep.mubr.f32.mxu0 0.0
      %2415 = vmatmul.mubr.f32.gmra.mxu0 %v2123
      %v2416 = vpop.f32.mrf.mxu0
      %v2417 = vadd.f32 0.0, %v2416
      %v2418 = vpop.f32.mrf.mxu0
      %2419 = vmatprep.mubr.f32.mxu0 0.0
      %2420 = vmatmul.mubr.f32.gmra.mxu0 %v2126
      %v2421 = vpop.f32.mrf.mxu0
      %v2422 = vadd.f32 0.0, %v2421
      %v2423 = vpop.f32.mrf.mxu0
      %2424 = vmatprep.mubr.f32.mxu0 0.0
      %2425 = vmatmul.mubr.f32.gmra.mxu0 %v2129
      %v2426 = vpop.f32.mrf.mxu0
      %v2427 = vadd.f32 0.0, %v2426
      %v2428 = vpop.f32.mrf.mxu0
      %2429 = vmatprep.mubr.f32.mxu0 0.0
      %2430 = vmatmul.mubr.f32.gmra.mxu0 %v2132
      %v2431 = vpop.f32.mrf.mxu0
      %v2432 = vadd.f32 0.0, %v2431
      %v2433 = vpop.f32.mrf.mxu0
      %2434 = vmatprep.mubr.f32.mxu0 0.0
      %2435 = vmatmul.mubr.f32.gmra.mxu0 %v2135
      %v2436 = vpop.f32.mrf.mxu0
      %v2437 = vadd.f32 0.0, %v2436
      %v2438 = vpop.f32.mrf.mxu0
      %2439 = vmatprep.mubr.f32.mxu0 0.0
      %2440 = vmatmul.mubr.f32.gmra.mxu0 %v2138
      %v2441 = vpop.f32.mrf.mxu0
      %v2442 = vadd.f32 0.0, %v2441
      %v2443 = vpop.f32.mrf.mxu0
      %2444 = vmatprep.mubr.f32.mxu0 0.0
      %2445 = vmatmul.mubr.f32.gmra.mxu0 %v2141
      %v2446 = vpop.f32.mrf.mxu0
      %v2447 = vadd.f32 0.0, %v2446
      %v2448 = vpop.f32.mrf.mxu0
      %2449 = vmatprep.mubr.f32.mxu0 0.0
      %2450 = vmatmul.mubr.f32.gmra.mxu0 %v2144
      %v2451 = vpop.f32.mrf.mxu0
      %v2452 = vadd.f32 0.0, %v2451
      %v2453 = vpop.f32.mrf.mxu0
      %2454 = vmatprep.mubr.f32.mxu0 0.0
      %2455 = vmatmul.mubr.f32.gmra.mxu0 %v2147
      %v2456 = vpop.f32.mrf.mxu0
      %v2457 = vadd.f32 0.0, %v2456
      %v2458 = vpop.f32.mrf.mxu0
      %2459 = vmatprep.mubr.f32.mxu0 0.0
      %2460 = vmatmul.mubr.f32.gmra.mxu0 %v2150
      %v2461 = vpop.f32.mrf.mxu0
      %v2462 = vadd.f32 0.0, %v2461
      %v2463 = vpop.f32.mrf.mxu0
      %2464 = vmatprep.mubr.f32.mxu0 0.0
      %2465 = vmatmul.mubr.f32.gmra.mxu0 %v2153
      %v2466 = vpop.f32.mrf.mxu0
      %v2467 = vadd.f32 0.0, %v2466
      %v2468 = vpop.f32.mrf.mxu0
      %2469 = vmatprep.mubr.f32.mxu0 0.0
      %2470 = vmatmul.mubr.f32.gmra.mxu0 %v2156
      %v2471 = vpop.f32.mrf.mxu0
      %v2472 = vadd.f32 0.0, %v2471
      %v2473 = vpop.f32.mrf.mxu0
      %2474 = vmatprep.mubr.f32.mxu0 0.0
      %2475 = vmatmul.mubr.f32.gmra.mxu0 %v2159
      %v2476 = vpop.f32.mrf.mxu0
      %v2477 = vadd.f32 0.0, %v2476
      %v2478 = vpop.f32.mrf.mxu0
      %2479 = vmatprep.mubr.f32.mxu0 0.0
      %2480 = vmatmul.mubr.f32.gmra.mxu0 %v2162
      %v2481 = vpop.f32.mrf.mxu0
      %v2482 = vadd.f32 0.0, %v2481
      %v2483 = vpop.f32.mrf.mxu0
      %2484 = vmatprep.mubr.f32.mxu0 0.0
      %2485 = vmatmul.mubr.f32.gmra.mxu0 %v2165
      %v2486 = vpop.f32.mrf.mxu0
      %v2487 = vadd.f32 0.0, %v2486
      %v2488 = vpop.f32.mrf.mxu0
      %2489 = vmatprep.mubr.f32.mxu0 0.0
      %2490 = vmatmul.mubr.f32.gmra.mxu0 %v2168
      %v2491 = vpop.f32.mrf.mxu0
      %v2492 = vadd.f32 0.0, %v2491
      %v2493 = vpop.f32.mrf.mxu0
      %2494 = vmatprep.mubr.f32.mxu0 0.0
      %2495 = vmatmul.mubr.f32.gmra.mxu0 %v2171
      %v2496 = vpop.f32.mrf.mxu0
      %v2497 = vadd.f32 0.0, %v2496
      %v2498 = vpop.f32.mrf.mxu0
      %2499 = vmatprep.mubr.f32.mxu0 0.0
      %2500 = vmatmul.mubr.f32.gmra.mxu0 %v2174
      %v2501 = vpop.f32.mrf.mxu0
      %v2502 = vadd.f32 0.0, %v2501
      %v2503 = vpop.f32.mrf.mxu0
      %2504 = vmatprep.mubr.f32.mxu0 0.0
      %2505 = vmatmul.mubr.f32.gmra.mxu0 %v2177
      %v2506 = vpop.f32.mrf.mxu0
      %v2507 = vadd.f32 0.0, %v2506
      %v2508 = vpop.f32.mrf.mxu0
      %2509 = vmatprep.mubr.f32.mxu0 0.0
      %2510 = vmatmul.mubr.f32.gmra.mxu0 %v2180
      %v2511 = vpop.f32.mrf.mxu0
      %v2512 = vadd.f32 0.0, %v2511
      %v2513 = vpop.f32.mrf.mxu0
      %2514 = vmatprep.mubr.f32.mxu0 0.0
      %2515 = vmatmul.mubr.f32.gmra.mxu0 %v2183
      %v2516 = vpop.f32.mrf.mxu0
      %v2517 = vadd.f32 0.0, %v2516
      %v2518 = vpop.f32.mrf.mxu0
      %2519 = vmatprep.mubr.f32.mxu0 0.0
      %2520 = vmatmul.mubr.f32.gmra.mxu0 %v2186
      %v2521 = vpop.f32.mrf.mxu0
      %v2522 = vadd.f32 0.0, %v2521
      %v2523 = vpop.f32.mrf.mxu0
      %2524 = vmatprep.mubr.f32.mxu0 0.0
      %2525 = vmatmul.mubr.f32.gmra.mxu0 %v2189
      %v2526 = vpop.f32.mrf.mxu0
      %v2527 = vadd.f32 0.0, %v2526
      %v2528 = vpop.f32.mrf.mxu0
      %2529 = vmatprep.mubr.f32.mxu0 0.0
      %2530 = vmatmul.mubr.f32.gmra.mxu0 %v2192
      %v2531 = vpop.f32.mrf.mxu0
      %v2532 = vadd.f32 0.0, %v2531
      %v2533 = vpop.f32.mrf.mxu0
      %2534 = vmatprep.mubr.f32.mxu0 0.0
      %2535 = vmatmul.mubr.f32.gmra.mxu0 %v2195
      %v2536 = vpop.f32.mrf.mxu0
      %v2537 = vadd.f32 0.0, %v2536
      %v2538 = vpop.f32.mrf.mxu0
      %2539 = vmatprep.mubr.f32.mxu0 0.0
      %2540 = vmatmul.mubr.f32.gmra.mxu0 %v2198
      %v2541 = vpop.f32.mrf.mxu0
      %v2542 = vadd.f32 0.0, %v2541
      %v2543 = vpop.f32.mrf.mxu0
      %2544 = vmatprep.mubr.f32.mxu0 0.0
      %2545 = vmatmul.mubr.f32.gmra.mxu0 %v2201
      %v2546 = vpop.f32.mrf.mxu0
      %v2547 = vadd.f32 0.0, %v2546
      %v2548 = vpop.f32.mrf.mxu0
      %2549 = vmatprep.mubr.f32.mxu0 0.0
      %2550 = vmatmul.mubr.f32.gmra.mxu0 %v2204
      %v2551 = vpop.f32.mrf.mxu0
      %v2552 = vadd.f32 0.0, %v2551
      %v2553 = vpop.f32.mrf.mxu0
      %2554 = vmatprep.mubr.f32.mxu0 0.0
      %2555 = vmatmul.mubr.f32.gmra.mxu0 %v2207
      %v2556 = vpop.f32.mrf.mxu0
      %v2557 = vadd.f32 0.0, %v2556
      %v2558 = vpop.f32.mrf.mxu0
      %2559 = vmatprep.mubr.f32.mxu0 0.0
      %2560 = vmatmul.mubr.f32.gmra.mxu0 %v2210
      %v2561 = vpop.f32.mrf.mxu0
      %v2562 = vadd.f32 0.0, %v2561
      %v2563 = vpop.f32.mrf.mxu0
      %2564 = vmatprep.mubr.f32.mxu0 0.0
      %2565 = vmatmul.mubr.f32.gmra.mxu0 %v2213
      %v2566 = vpop.f32.mrf.mxu0
      %v2567 = vadd.f32 0.0, %v2566
      %v2568 = vpop.f32.mrf.mxu0
      %2569 = vmatprep.mubr.f32.mxu0 0.0
      %2570 = vmatmul.mubr.f32.gmra.mxu0 %v2216
      %v2571 = vpop.f32.mrf.mxu0
      %v2572 = vadd.f32 0.0, %v2571
      %v2573 = vpop.f32.mrf.mxu0
      %2574 = vmatprep.mubr.f32.mxu0 0.0
      %2575 = vmatmul.mubr.f32.gmra.mxu0 %v2219
      %v2576 = vpop.f32.mrf.mxu0
      %v2577 = vadd.f32 0.0, %v2576
      %v2578 = vpop.f32.mrf.mxu0
      %2579 = vmatprep.mubr.f32.mxu0 0.0
      %2580 = vmatmul.mubr.f32.gmra.mxu0 %v2222
      %v2581 = vpop.f32.mrf.mxu0
      %v2582 = vadd.f32 0.0, %v2581
      %v2583 = vpop.f32.mrf.mxu0
      %2584 = vmatprep.mubr.f32.mxu0 0.0
      %2585 = vmatmul.mubr.f32.gmra.mxu0 %v2225
      %v2586 = vpop.f32.mrf.mxu0
      %v2587 = vadd.f32 0.0, %v2586
      %v2588 = vpop.f32.mrf.mxu0
      %2589 = vmatprep.mubr.f32.mxu0 0.0
      %2590 = vmatmul.mubr.f32.gmra.mxu0 %v2228
      %v2591 = vpop.f32.mrf.mxu0
      %v2592 = vadd.f32 0.0, %v2591
      %v2593 = vpop.f32.mrf.mxu0
      %2594 = vmatprep.mubr.f32.mxu0 0.0
      %2595 = vmatmul.mubr.f32.gmra.mxu0 %v2231
      %v2596 = vpop.f32.mrf.mxu0
      %v2597 = vadd.f32 0.0, %v2596
      %v2598 = vpop.f32.mrf.mxu0
      %2599 = vmatprep.mubr.f32.mxu0 0.0
      %2600 = vmatmul.mubr.f32.gmra.mxu0 %v2234
      %v2601 = vpop.f32.mrf.mxu0
      %v2602 = vadd.f32 0.0, %v2601
      %v2603 = vpop.f32.mrf.mxu0
      %2604 = vmatprep.mubr.f32.mxu0 0.0
      %2605 = vmatmul.mubr.f32.gmra.mxu0 %v2237
      %v2606 = vpop.f32.mrf.mxu0
      %v2607 = vadd.f32 0.0, %v2606
      %v2608 = vpop.f32.mrf.mxu0
      %2609 = vmatprep.mubr.f32.mxu0 0.0
      %2610 = vmatmul.mubr.f32.gmra.mxu0 %v2240
      %v2611 = vpop.f32.mrf.mxu0
      %v2612 = vadd.f32 0.0, %v2611
      %v2613 = vpop.f32.mrf.mxu0
      %2614 = vmatprep.mubr.f32.mxu0 0.0
      %2615 = vmatmul.mubr.f32.gmra.mxu0 %v2243
      %v2616 = vpop.f32.mrf.mxu0
      %v2617 = vadd.f32 0.0, %v2616
      %v2618 = vpop.f32.mrf.mxu0
      %2619 = vmatprep.mubr.f32.mxu0 0.0
      %2620 = vmatmul.mubr.f32.gmra.mxu0 %v2246
      %v2621 = vpop.f32.mrf.mxu0
      %v2622 = vadd.f32 0.0, %v2621
      %v2623 = vpop.f32.mrf.mxu0
      %2624 = vmatprep.mubr.f32.mxu0 0.0
      %2625 = vmatmul.mubr.f32.gmra.mxu0 %v2249
      %v2626 = vpop.f32.mrf.mxu0
      %v2627 = vadd.f32 0.0, %v2626
      %v2628 = vpop.f32.mrf.mxu0
      %2629 = vmatprep.mubr.f32.mxu0 0.0
      %2630 = vmatmul.mubr.f32.gmra.mxu0 %v2252
      %v2631 = vpop.f32.mrf.mxu0
      %v2632 = vadd.f32 0.0, %v2631
      %v2633 = vpop.f32.mrf.mxu0
      %2634 = vmatprep.mubr.f32.mxu0 0.0
      %2635 = vmatmul.mubr.f32.gmra.mxu0 %v2255
      %v2636 = vpop.f32.mrf.mxu0
      %v2637 = vadd.f32 0.0, %v2636
      %v2638 = vpop.f32.mrf.mxu0
      %2639 = vmatprep.mubr.f32.mxu0 0.0
      %2640 = vmatmul.mubr.f32.gmra.mxu0 %v2258
      %v2641 = vpop.f32.mrf.mxu0
      %v2642 = vadd.f32 0.0, %v2641
      %v2643 = vpop.f32.mrf.mxu0
      %2644 = vdwg.mxu0
      %v2645 = vld [vmem:[%s399] sm:$0xff]
      %v2646 = vld [vmem:[%s399 + $0x8] sm:$0xff]
      %v2647 = vld [vmem:[%s399 + $0x10] sm:$0xff]
      %v2648 = vld [vmem:[%s399 + $0x18] sm:$0xff]
      %v2649 = vld [vmem:[%s399 + $0x20] sm:$0xff]
      %v2650 = vld [vmem:[%s399 + $0x28] sm:$0xff]
      %v2651 = vld [vmem:[%s399 + $0x30] sm:$0xff]
      %v2652 = vld [vmem:[%s399 + $0x38] sm:$0xff]
      %v2653 = vld [vmem:[%s399 + $0x40] sm:$0xff]
      %v2654 = vld [vmem:[%s399 + $0x48] sm:$0xff]
      %v2655 = vld [vmem:[%s399 + $0x50] sm:$0xff]
      %v2656 = vld [vmem:[%s399 + $0x58] sm:$0xff]
      %v2657 = vld [vmem:[%s399 + $0x60] sm:$0xff]
      %v2658 = vld [vmem:[%s399 + $0x68] sm:$0xff]
      %v2659 = vld [vmem:[%s399 + $0x70] sm:$0xff]
      %v2660 = vld [vmem:[%s399 + $0x78] sm:$0xff]
      %v2661 = vld [vmem:[%s399 + $0x80] sm:$0xff]
      %v2662 = vld [vmem:[%s399 + $0x88] sm:$0xff]
      %v2663 = vld [vmem:[%s399 + $0x90] sm:$0xff]
      %v2664 = vld [vmem:[%s399 + $0x98] sm:$0xff]
      %v2665 = vld [vmem:[%s399 + $0xa0] sm:$0xff]
      %v2666 = vld [vmem:[%s399 + $0xa8] sm:$0xff]
      %v2667 = vld [vmem:[%s399 + $0xb0] sm:$0xff]
      %v2668 = vld [vmem:[%s399 + $0xb8] sm:$0xff]
      %v2669 = vld [vmem:[%s399 + $0xc0] sm:$0xff]
      %v2670 = vld [vmem:[%s399 + $0xc8] sm:$0xff]
      %v2671 = vld [vmem:[%s399 + $0xd0] sm:$0xff]
      %v2672 = vld [vmem:[%s399 + $0xd8] sm:$0xff]
      %v2673 = vld [vmem:[%s399 + $0xe0] sm:$0xff]
      %v2674 = vld [vmem:[%s399 + $0xe8] sm:$0xff]
      %v2675 = vld [vmem:[%s399 + $0xf0] sm:$0xff]
      %v2676 = vld [vmem:[%s399 + $0xf8] sm:$0xff]
      %v2677 = vld [vmem:[%s399 + $0x100] sm:$0xff]
      %v2678 = vld [vmem:[%s399 + $0x108] sm:$0xff]
      %v2679 = vld [vmem:[%s399 + $0x110] sm:$0xff]
      %v2680 = vld [vmem:[%s399 + $0x118] sm:$0xff]
      %v2681 = vld [vmem:[%s399 + $0x120] sm:$0xff]
      %v2682 = vld [vmem:[%s399 + $0x128] sm:$0xff]
      %v2683 = vld [vmem:[%s399 + $0x130] sm:$0xff]
      %v2684 = vld [vmem:[%s399 + $0x138] sm:$0xff]
      %v2685 = vld [vmem:[%s399 + $0x140] sm:$0xff]
      %v2686 = vld [vmem:[%s399 + $0x148] sm:$0xff]
      %v2687 = vld [vmem:[%s399 + $0x150] sm:$0xff]
      %v2688 = vld [vmem:[%s399 + $0x158] sm:$0xff]
      %v2689 = vld [vmem:[%s399 + $0x160] sm:$0xff]
      %v2690 = vld [vmem:[%s399 + $0x168] sm:$0xff]
      %v2691 = vld [vmem:[%s399 + $0x170] sm:$0xff]
      %v2692 = vld [vmem:[%s399 + $0x178] sm:$0xff]
      %v2693 = vld [vmem:[%s399 + $0x180] sm:$0xff]
      %v2694 = vld [vmem:[%s399 + $0x188] sm:$0xff]
      %v2695 = vld [vmem:[%s399 + $0x190] sm:$0xff]
      %v2696 = vld [vmem:[%s399 + $0x198] sm:$0xff]
      %v2697 = vld [vmem:[%s399 + $0x1a0] sm:$0xff]
      %v2698 = vld [vmem:[%s399 + $0x1a8] sm:$0xff]
      %v2699 = vld [vmem:[%s399 + $0x1b0] sm:$0xff]
      %v2700 = vld [vmem:[%s399 + $0x1b8] sm:$0xff]
      %v2701 = vld [vmem:[%s399 + $0x1c0] sm:$0xff]
      %v2702 = vld [vmem:[%s399 + $0x1c8] sm:$0xff]
      %v2703 = vld [vmem:[%s399 + $0x1d0] sm:$0xff]
      %v2704 = vld [vmem:[%s399 + $0x1d8] sm:$0xff]
      %v2705 = vld [vmem:[%s399 + $0x1e0] sm:$0xff]
      %v2706 = vld [vmem:[%s399 + $0x1e8] sm:$0xff]
      %v2707 = vld [vmem:[%s399 + $0x1f0] sm:$0xff]
      %v2708 = vld [vmem:[%s399 + $0x1f8] sm:$0xff]
      %v2709 = vld [vmem:[%s6] sm:$0xff]
      %v2710 = vld [vmem:[%s6 + $0x8] sm:$0xff]
      %v2711 = vld [vmem:[%s6 + $0x10] sm:$0xff]
      %v2712 = vld [vmem:[%s6 + $0x18] sm:$0xff]
      %v2714 = vsel %vm2067, %v2645, 0
      %v2717 = vsel %vm2067, %v2646, 0
      %v2720 = vsel %vm2067, %v2647, 0
      %v2723 = vsel %vm2067, %v2648, 0
      %v2726 = vsel %vm2067, %v2649, 0
      %v2729 = vsel %vm2067, %v2650, 0
      %v2732 = vsel %vm2067, %v2651, 0
      %v2735 = vsel %vm2067, %v2652, 0
      %v2738 = vsel %vm2067, %v2653, 0
      %v2741 = vsel %vm2067, %v2654, 0
      %v2744 = vsel %vm2067, %v2655, 0
      %v2747 = vsel %vm2067, %v2656, 0
      %v2750 = vsel %vm2067, %v2657, 0
      %v2753 = vsel %vm2067, %v2658, 0
      %v2756 = vsel %vm2067, %v2659, 0
      %v2759 = vsel %vm2067, %v2660, 0
      %v2762 = vsel %vm2067, %v2661, 0
      %v2765 = vsel %vm2067, %v2662, 0
      %v2768 = vsel %vm2067, %v2663, 0
      %v2771 = vsel %vm2067, %v2664, 0
      %v2774 = vsel %vm2067, %v2665, 0
      %v2777 = vsel %vm2067, %v2666, 0
      %v2780 = vsel %vm2067, %v2667, 0
      %v2783 = vsel %vm2067, %v2668, 0
      %v2786 = vsel %vm2067, %v2669, 0
      %v2789 = vsel %vm2067, %v2670, 0
      %v2792 = vsel %vm2067, %v2671, 0
      %v2795 = vsel %vm2067, %v2672, 0
      %v2798 = vsel %vm2067, %v2673, 0
      %v2801 = vsel %vm2067, %v2674, 0
      %v2804 = vsel %vm2067, %v2675, 0
      %v2807 = vsel %vm2067, %v2676, 0
      %v2810 = vsel %vm2067, %v2677, 0
      %v2813 = vsel %vm2067, %v2678, 0
      %v2816 = vsel %vm2067, %v2679, 0
      %v2819 = vsel %vm2067, %v2680, 0
      %v2822 = vsel %vm2067, %v2681, 0
      %v2825 = vsel %vm2067, %v2682, 0
      %v2828 = vsel %vm2067, %v2683, 0
      %v2831 = vsel %vm2067, %v2684, 0
      %v2834 = vsel %vm2067, %v2685, 0
      %v2837 = vsel %vm2067, %v2686, 0
      %v2840 = vsel %vm2067, %v2687, 0
      %v2843 = vsel %vm2067, %v2688, 0
      %v2846 = vsel %vm2067, %v2689, 0
      %v2849 = vsel %vm2067, %v2690, 0
      %v2852 = vsel %vm2067, %v2691, 0
      %v2855 = vsel %vm2067, %v2692, 0
      %v2858 = vsel %vm2067, %v2693, 0
      %v2861 = vsel %vm2067, %v2694, 0
      %v2864 = vsel %vm2067, %v2695, 0
      %v2867 = vsel %vm2067, %v2696, 0
      %v2870 = vsel %vm2067, %v2697, 0
      %v2873 = vsel %vm2067, %v2698, 0
      %v2876 = vsel %vm2067, %v2699, 0
      %v2879 = vsel %vm2067, %v2700, 0
      %v2882 = vsel %vm2067, %v2701, 0
      %v2885 = vsel %vm2067, %v2702, 0
      %v2888 = vsel %vm2067, %v2703, 0
      %v2891 = vsel %vm2067, %v2704, 0
      %v2894 = vsel %vm2067, %v2705, 0
      %v2897 = vsel %vm2067, %v2706, 0
      %v2900 = vsel %vm2067, %v2707, 0
      %v2903 = vsel %vm2067, %v2708, 0
      %2905 = vmatprep.subr.mxu0 0.0
      %2906 = vmatpush1.msra.mxu0 0.0
      %2907 = vmatprep.subr.mxu0 0.0
      %2908 = vmatpush1.msra.mxu0 0.0
      %2909 = vmatprep.subr.mxu0 0.0
      %2910 = vmatpush1.msra.mxu0 0.0
      %2911 = vmatprep.subr.mxu0 0.0
      %2912 = vmatpush1.msra.mxu0 0.0
      %2913 = vmatprep.subr.mxu0 0.0
      %2914 = vmatpush1.msra.mxu0 0.0
      %2915 = vmatprep.subr.mxu0 0.0
      %2916 = vmatpush1.msra.mxu0 0.0
      %2917 = vmatprep.subr.mxu0 0.0
      %2918 = vmatpush1.msra.mxu0 0.0
      %2919 = vmatprep.subr.mxu0 0.0
      %2920 = vmatpush1.msra.mxu0 0.0
      %2921 = vmatprep.subr.mxu0 0.0
      %2922 = vmatpush1.msra.mxu0 0.0
      %2923 = vmatprep.subr.mxu0 0.0
      %2924 = vmatpush1.msra.mxu0 0.0
      %2925 = vmatprep.subr.mxu0 0.0
      %2926 = vmatpush1.msra.mxu0 0.0
      %2927 = vmatprep.subr.mxu0 0.0
      %2928 = vmatpush1.msra.mxu0 0.0
      %2929 = vmatprep.subr.mxu0 0.0
      %2930 = vmatpush1.msra.mxu0 %v2712
      %2931 = vmatprep.subr.mxu0 0.0
      %2932 = vmatpush1.msra.mxu0 %v2711
      %2933 = vmatprep.subr.mxu0 0.0
      %2934 = vmatpush1.msra.mxu0 %v2710
      %2935 = vmatprep.subr.mxu0 0.0
      %2936 = vmatpush1.msra.mxu0 %v2709
      %2937 = vmatprep.subr.mxu0 0.0
      %2938 = vmatpush2.msra.mxu0 0.0
      %2939 = vmatprep.subr.mxu0 0.0
      %2940 = vmatpush2.msra.mxu0 0.0
      %2941 = vmatprep.subr.mxu0 0.0
      %2942 = vmatpush2.msra.mxu0 0.0
      %2943 = vmatprep.subr.mxu0 0.0
      %2944 = vmatpush2.msra.mxu0 0.0
      %2945 = vmatprep.subr.mxu0 0.0
      %2946 = vmatpush2.msra.mxu0 0.0
      %2947 = vmatprep.subr.mxu0 0.0
      %2948 = vmatpush2.msra.mxu0 0.0
      %2949 = vmatprep.subr.mxu0 0.0
      %2950 = vmatpush2.msra.mxu0 0.0
      %2951 = vmatprep.subr.mxu0 0.0
      %2952 = vmatpush2.msra.mxu0 0.0
      %2953 = vmatprep.subr.mxu0 0.0
      %2954 = vmatpush2.msra.mxu0 0.0
      %2955 = vmatprep.subr.mxu0 0.0
      %2956 = vmatpush2.msra.mxu0 0.0
      %2957 = vmatprep.subr.mxu0 0.0
      %2958 = vmatpush2.msra.mxu0 0.0
      %2959 = vmatprep.subr.mxu0 0.0
      %2960 = vmatpush2.msra.mxu0 0.0
      %2961 = vmatprep.subr.mxu0 0.0
      %2962 = vmatpush2.msra.mxu0 0.0
      %2963 = vmatprep.subr.mxu0 0.0
      %2964 = vmatpush2.msra.mxu0 0.0
      %2965 = vmatprep.subr.mxu0 0.0
      %2966 = vmatpush2.msra.mxu0 0.0
      %2967 = vmatprep.subr.mxu0 0.0
      %2968 = vmatpush2.msra.mxu0 0.0
      %2969 = vmatprep.mubr.f32.mxu0 0.0
      %2970 = vmatmul.mubr.f32.gmra.mxu0 %v2714
      %v2971 = vpop.f32.mrf.mxu0
      %v2972 = vadd.f32 0.0, %v2971
      %v2973 = vpop.f32.mrf.mxu0
      %2974 = vmatprep.mubr.f32.mxu0 0.0
      %2975 = vmatmul.mubr.f32.gmra.mxu0 %v2717
      %v2976 = vpop.f32.mrf.mxu0
      %v2977 = vadd.f32 0.0, %v2976
      %v2978 = vpop.f32.mrf.mxu0
      %2979 = vmatprep.mubr.f32.mxu0 0.0
      %2980 = vmatmul.mubr.f32.gmra.mxu0 %v2720
      %v2981 = vpop.f32.mrf.mxu0
      %v2982 = vadd.f32 0.0, %v2981
      %v2983 = vpop.f32.mrf.mxu0
      %2984 = vmatprep.mubr.f32.mxu0 0.0
      %2985 = vmatmul.mubr.f32.gmra.mxu0 %v2723
      %v2986 = vpop.f32.mrf.mxu0
      %v2987 = vadd.f32 0.0, %v2986
      %v2988 = vpop.f32.mrf.mxu0
      %2989 = vmatprep.mubr.f32.mxu0 0.0
      %2990 = vmatmul.mubr.f32.gmra.mxu0 %v2726
      %v2991 = vpop.f32.mrf.mxu0
      %v2992 = vadd.f32 0.0, %v2991
      %v2993 = vpop.f32.mrf.mxu0
      %2994 = vmatprep.mubr.f32.mxu0 0.0
      %2995 = vmatmul.mubr.f32.gmra.mxu0 %v2729
      %v2996 = vpop.f32.mrf.mxu0
      %v2997 = vadd.f32 0.0, %v2996
      %v2998 = vpop.f32.mrf.mxu0
      %2999 = vmatprep.mubr.f32.mxu0 0.0
      %3000 = vmatmul.mubr.f32.gmra.mxu0 %v2732
      %v3001 = vpop.f32.mrf.mxu0
      %v3002 = vadd.f32 0.0, %v3001
      %v3003 = vpop.f32.mrf.mxu0
      %3004 = vmatprep.mubr.f32.mxu0 0.0
      %3005 = vmatmul.mubr.f32.gmra.mxu0 %v2735
      %v3006 = vpop.f32.mrf.mxu0
      %v3007 = vadd.f32 0.0, %v3006
      %v3008 = vpop.f32.mrf.mxu0
      %3009 = vmatprep.mubr.f32.mxu0 0.0
      %3010 = vmatmul.mubr.f32.gmra.mxu0 %v2738
      %v3011 = vpop.f32.mrf.mxu0
      %v3012 = vadd.f32 0.0, %v3011
      %v3013 = vpop.f32.mrf.mxu0
      %3014 = vmatprep.mubr.f32.mxu0 0.0
      %3015 = vmatmul.mubr.f32.gmra.mxu0 %v2741
      %v3016 = vpop.f32.mrf.mxu0
      %v3017 = vadd.f32 0.0, %v3016
      %v3018 = vpop.f32.mrf.mxu0
      %3019 = vmatprep.mubr.f32.mxu0 0.0
      %3020 = vmatmul.mubr.f32.gmra.mxu0 %v2744
      %v3021 = vpop.f32.mrf.mxu0
      %v3022 = vadd.f32 0.0, %v3021
      %v3023 = vpop.f32.mrf.mxu0
      %3024 = vmatprep.mubr.f32.mxu0 0.0
      %3025 = vmatmul.mubr.f32.gmra.mxu0 %v2747
      %v3026 = vpop.f32.mrf.mxu0
      %v3027 = vadd.f32 0.0, %v3026
      %v3028 = vpop.f32.mrf.mxu0
      %3029 = vmatprep.mubr.f32.mxu0 0.0
      %3030 = vmatmul.mubr.f32.gmra.mxu0 %v2750
      %v3031 = vpop.f32.mrf.mxu0
      %v3032 = vadd.f32 0.0, %v3031
      %v3033 = vpop.f32.mrf.mxu0
      %3034 = vmatprep.mubr.f32.mxu0 0.0
      %3035 = vmatmul.mubr.f32.gmra.mxu0 %v2753
      %v3036 = vpop.f32.mrf.mxu0
      %v3037 = vadd.f32 0.0, %v3036
      %v3038 = vpop.f32.mrf.mxu0
      %3039 = vmatprep.mubr.f32.mxu0 0.0
      %3040 = vmatmul.mubr.f32.gmra.mxu0 %v2756
      %v3041 = vpop.f32.mrf.mxu0
      %v3042 = vadd.f32 0.0, %v3041
      %v3043 = vpop.f32.mrf.mxu0
      %3044 = vmatprep.mubr.f32.mxu0 0.0
      %3045 = vmatmul.mubr.f32.gmra.mxu0 %v2759
      %v3046 = vpop.f32.mrf.mxu0
      %v3047 = vadd.f32 0.0, %v3046
      %v3048 = vpop.f32.mrf.mxu0
      %3049 = vmatprep.mubr.f32.mxu0 0.0
      %3050 = vmatmul.mubr.f32.gmra.mxu0 %v2762
      %v3051 = vpop.f32.mrf.mxu0
      %v3052 = vadd.f32 0.0, %v3051
      %v3053 = vpop.f32.mrf.mxu0
      %3054 = vmatprep.mubr.f32.mxu0 0.0
      %3055 = vmatmul.mubr.f32.gmra.mxu0 %v2765
      %v3056 = vpop.f32.mrf.mxu0
      %v3057 = vadd.f32 0.0, %v3056
      %v3058 = vpop.f32.mrf.mxu0
      %3059 = vmatprep.mubr.f32.mxu0 0.0
      %3060 = vmatmul.mubr.f32.gmra.mxu0 %v2768
      %v3061 = vpop.f32.mrf.mxu0
      %v3062 = vadd.f32 0.0, %v3061
      %v3063 = vpop.f32.mrf.mxu0
      %3064 = vmatprep.mubr.f32.mxu0 0.0
      %3065 = vmatmul.mubr.f32.gmra.mxu0 %v2771
      %v3066 = vpop.f32.mrf.mxu0
      %v3067 = vadd.f32 0.0, %v3066
      %v3068 = vpop.f32.mrf.mxu0
      %3069 = vmatprep.mubr.f32.mxu0 0.0
      %3070 = vmatmul.mubr.f32.gmra.mxu0 %v2774
      %v3071 = vpop.f32.mrf.mxu0
      %v3072 = vadd.f32 0.0, %v3071
      %v3073 = vpop.f32.mrf.mxu0
      %3074 = vmatprep.mubr.f32.mxu0 0.0
      %3075 = vmatmul.mubr.f32.gmra.mxu0 %v2777
      %v3076 = vpop.f32.mrf.mxu0
      %v3077 = vadd.f32 0.0, %v3076
      %v3078 = vpop.f32.mrf.mxu0
      %3079 = vmatprep.mubr.f32.mxu0 0.0
      %3080 = vmatmul.mubr.f32.gmra.mxu0 %v2780
      %v3081 = vpop.f32.mrf.mxu0
      %v3082 = vadd.f32 0.0, %v3081
      %v3083 = vpop.f32.mrf.mxu0
      %3084 = vmatprep.mubr.f32.mxu0 0.0
      %3085 = vmatmul.mubr.f32.gmra.mxu0 %v2783
      %v3086 = vpop.f32.mrf.mxu0
      %v3087 = vadd.f32 0.0, %v3086
      %v3088 = vpop.f32.mrf.mxu0
      %3089 = vmatprep.mubr.f32.mxu0 0.0
      %3090 = vmatmul.mubr.f32.gmra.mxu0 %v2786
      %v3091 = vpop.f32.mrf.mxu0
      %v3092 = vadd.f32 0.0, %v3091
      %v3093 = vpop.f32.mrf.mxu0
      %3094 = vmatprep.mubr.f32.mxu0 0.0
      %3095 = vmatmul.mubr.f32.gmra.mxu0 %v2789
      %v3096 = vpop.f32.mrf.mxu0
      %v3097 = vadd.f32 0.0, %v3096
      %v3098 = vpop.f32.mrf.mxu0
      %3099 = vmatprep.mubr.f32.mxu0 0.0
      %3100 = vmatmul.mubr.f32.gmra.mxu0 %v2792
      %v3101 = vpop.f32.mrf.mxu0
      %v3102 = vadd.f32 0.0, %v3101
      %v3103 = vpop.f32.mrf.mxu0
      %3104 = vmatprep.mubr.f32.mxu0 0.0
      %3105 = vmatmul.mubr.f32.gmra.mxu0 %v2795
      %v3106 = vpop.f32.mrf.mxu0
      %v3107 = vadd.f32 0.0, %v3106
      %v3108 = vpop.f32.mrf.mxu0
      %3109 = vmatprep.mubr.f32.mxu0 0.0
      %3110 = vmatmul.mubr.f32.gmra.mxu0 %v2798
      %v3111 = vpop.f32.mrf.mxu0
      %v3112 = vadd.f32 0.0, %v3111
      %v3113 = vpop.f32.mrf.mxu0
      %3114 = vmatprep.mubr.f32.mxu0 0.0
      %3115 = vmatmul.mubr.f32.gmra.mxu0 %v2801
      %v3116 = vpop.f32.mrf.mxu0
      %v3117 = vadd.f32 0.0, %v3116
      %v3118 = vpop.f32.mrf.mxu0
      %3119 = vmatprep.mubr.f32.mxu0 0.0
      %3120 = vmatmul.mubr.f32.gmra.mxu0 %v2804
      %v3121 = vpop.f32.mrf.mxu0
      %v3122 = vadd.f32 0.0, %v3121
      %v3123 = vpop.f32.mrf.mxu0
      %3124 = vmatprep.mubr.f32.mxu0 0.0
      %3125 = vmatmul.mubr.f32.gmra.mxu0 %v2807
      %v3126 = vpop.f32.mrf.mxu0
      %v3127 = vadd.f32 0.0, %v3126
      %v3128 = vpop.f32.mrf.mxu0
      %3129 = vmatprep.mubr.f32.mxu0 0.0
      %3130 = vmatmul.mubr.f32.gmra.mxu0 %v2810
      %v3131 = vpop.f32.mrf.mxu0
      %v3132 = vadd.f32 0.0, %v3131
      %v3133 = vpop.f32.mrf.mxu0
      %3134 = vmatprep.mubr.f32.mxu0 0.0
      %3135 = vmatmul.mubr.f32.gmra.mxu0 %v2813
      %v3136 = vpop.f32.mrf.mxu0
      %v3137 = vadd.f32 0.0, %v3136
      %v3138 = vpop.f32.mrf.mxu0
      %3139 = vmatprep.mubr.f32.mxu0 0.0
      %3140 = vmatmul.mubr.f32.gmra.mxu0 %v2816
      %v3141 = vpop.f32.mrf.mxu0
      %v3142 = vadd.f32 0.0, %v3141
      %v3143 = vpop.f32.mrf.mxu0
      %3144 = vmatprep.mubr.f32.mxu0 0.0
      %3145 = vmatmul.mubr.f32.gmra.mxu0 %v2819
      %v3146 = vpop.f32.mrf.mxu0
      %v3147 = vadd.f32 0.0, %v3146
      %v3148 = vpop.f32.mrf.mxu0
      %3149 = vmatprep.mubr.f32.mxu0 0.0
      %3150 = vmatmul.mubr.f32.gmra.mxu0 %v2822
      %v3151 = vpop.f32.mrf.mxu0
      %v3152 = vadd.f32 0.0, %v3151
      %v3153 = vpop.f32.mrf.mxu0
      %3154 = vmatprep.mubr.f32.mxu0 0.0
      %3155 = vmatmul.mubr.f32.gmra.mxu0 %v2825
      %v3156 = vpop.f32.mrf.mxu0
      %v3157 = vadd.f32 0.0, %v3156
      %v3158 = vpop.f32.mrf.mxu0
      %3159 = vmatprep.mubr.f32.mxu0 0.0
      %3160 = vmatmul.mubr.f32.gmra.mxu0 %v2828
      %v3161 = vpop.f32.mrf.mxu0
      %v3162 = vadd.f32 0.0, %v3161
      %v3163 = vpop.f32.mrf.mxu0
      %3164 = vmatprep.mubr.f32.mxu0 0.0
      %3165 = vmatmul.mubr.f32.gmra.mxu0 %v2831
      %v3166 = vpop.f32.mrf.mxu0
      %v3167 = vadd.f32 0.0, %v3166
      %v3168 = vpop.f32.mrf.mxu0
      %3169 = vmatprep.mubr.f32.mxu0 0.0
      %3170 = vmatmul.mubr.f32.gmra.mxu0 %v2834
      %v3171 = vpop.f32.mrf.mxu0
      %v3172 = vadd.f32 0.0, %v3171
      %v3173 = vpop.f32.mrf.mxu0
      %3174 = vmatprep.mubr.f32.mxu0 0.0
      %3175 = vmatmul.mubr.f32.gmra.mxu0 %v2837
      %v3176 = vpop.f32.mrf.mxu0
      %v3177 = vadd.f32 0.0, %v3176
      %v3178 = vpop.f32.mrf.mxu0
      %3179 = vmatprep.mubr.f32.mxu0 0.0
      %3180 = vmatmul.mubr.f32.gmra.mxu0 %v2840
      %v3181 = vpop.f32.mrf.mxu0
      %v3182 = vadd.f32 0.0, %v3181
      %v3183 = vpop.f32.mrf.mxu0
      %3184 = vmatprep.mubr.f32.mxu0 0.0
      %3185 = vmatmul.mubr.f32.gmra.mxu0 %v2843
      %v3186 = vpop.f32.mrf.mxu0
      %v3187 = vadd.f32 0.0, %v3186
      %v3188 = vpop.f32.mrf.mxu0
      %3189 = vmatprep.mubr.f32.mxu0 0.0
      %3190 = vmatmul.mubr.f32.gmra.mxu0 %v2846
      %v3191 = vpop.f32.mrf.mxu0
      %v3192 = vadd.f32 0.0, %v3191
      %v3193 = vpop.f32.mrf.mxu0
      %3194 = vmatprep.mubr.f32.mxu0 0.0
      %3195 = vmatmul.mubr.f32.gmra.mxu0 %v2849
      %v3196 = vpop.f32.mrf.mxu0
      %v3197 = vadd.f32 0.0, %v3196
      %v3198 = vpop.f32.mrf.mxu0
      %3199 = vmatprep.mubr.f32.mxu0 0.0
      %3200 = vmatmul.mubr.f32.gmra.mxu0 %v2852
      %v3201 = vpop.f32.mrf.mxu0
      %v3202 = vadd.f32 0.0, %v3201
      %v3203 = vpop.f32.mrf.mxu0
      %3204 = vmatprep.mubr.f32.mxu0 0.0
      %3205 = vmatmul.mubr.f32.gmra.mxu0 %v2855
      %v3206 = vpop.f32.mrf.mxu0
      %v3207 = vadd.f32 0.0, %v3206
      %v3208 = vpop.f32.mrf.mxu0
      %3209 = vmatprep.mubr.f32.mxu0 0.0
      %3210 = vmatmul.mubr.f32.gmra.mxu0 %v2858
      %v3211 = vpop.f32.mrf.mxu0
      %v3212 = vadd.f32 0.0, %v3211
      %v3213 = vpop.f32.mrf.mxu0
      %3214 = vmatprep.mubr.f32.mxu0 0.0
      %3215 = vmatmul.mubr.f32.gmra.mxu0 %v2861
      %v3216 = vpop.f32.mrf.mxu0
      %v3217 = vadd.f32 0.0, %v3216
      %v3218 = vpop.f32.mrf.mxu0
      %3219 = vmatprep.mubr.f32.mxu0 0.0
      %3220 = vmatmul.mubr.f32.gmra.mxu0 %v2864
      %v3221 = vpop.f32.mrf.mxu0
      %v3222 = vadd.f32 0.0, %v3221
      %v3223 = vpop.f32.mrf.mxu0
      %3224 = vmatprep.mubr.f32.mxu0 0.0
      %3225 = vmatmul.mubr.f32.gmra.mxu0 %v2867
      %v3226 = vpop.f32.mrf.mxu0
      %v3227 = vadd.f32 0.0, %v3226
      %v3228 = vpop.f32.mrf.mxu0
      %3229 = vmatprep.mubr.f32.mxu0 0.0
      %3230 = vmatmul.mubr.f32.gmra.mxu0 %v2870
      %v3231 = vpop.f32.mrf.mxu0
      %v3232 = vadd.f32 0.0, %v3231
      %v3233 = vpop.f32.mrf.mxu0
      %3234 = vmatprep.mubr.f32.mxu0 0.0
      %3235 = vmatmul.mubr.f32.gmra.mxu0 %v2873
      %v3236 = vpop.f32.mrf.mxu0
      %v3237 = vadd.f32 0.0, %v3236
      %v3238 = vpop.f32.mrf.mxu0
      %3239 = vmatprep.mubr.f32.mxu0 0.0
      %3240 = vmatmul.mubr.f32.gmra.mxu0 %v2876
      %v3241 = vpop.f32.mrf.mxu0
      %v3242 = vadd.f32 0.0, %v3241
      %v3243 = vpop.f32.mrf.mxu0
      %3244 = vmatprep.mubr.f32.mxu0 0.0
      %3245 = vmatmul.mubr.f32.gmra.mxu0 %v2879
      %v3246 = vpop.f32.mrf.mxu0
      %v3247 = vadd.f32 0.0, %v3246
      %v3248 = vpop.f32.mrf.mxu0
      %3249 = vmatprep.mubr.f32.mxu0 0.0
      %3250 = vmatmul.mubr.f32.gmra.mxu0 %v2882
      %v3251 = vpop.f32.mrf.mxu0
      %v3252 = vadd.f32 0.0, %v3251
      %v3253 = vpop.f32.mrf.mxu0
      %3254 = vmatprep.mubr.f32.mxu0 0.0
      %3255 = vmatmul.mubr.f32.gmra.mxu0 %v2885
      %v3256 = vpop.f32.mrf.mxu0
      %v3257 = vadd.f32 0.0, %v3256
      %v3258 = vpop.f32.mrf.mxu0
      %3259 = vmatprep.mubr.f32.mxu0 0.0
      %3260 = vmatmul.mubr.f32.gmra.mxu0 %v2888
      %v3261 = vpop.f32.mrf.mxu0
      %v3262 = vadd.f32 0.0, %v3261
      %v3263 = vpop.f32.mrf.mxu0
      %3264 = vmatprep.mubr.f32.mxu0 0.0
      %3265 = vmatmul.mubr.f32.gmra.mxu0 %v2891
      %v3266 = vpop.f32.mrf.mxu0
      %v3267 = vadd.f32 0.0, %v3266
      %v3268 = vpop.f32.mrf.mxu0
      %3269 = vmatprep.mubr.f32.mxu0 0.0
      %3270 = vmatmul.mubr.f32.gmra.mxu0 %v2894
      %v3271 = vpop.f32.mrf.mxu0
      %v3272 = vadd.f32 0.0, %v3271
      %v3273 = vpop.f32.mrf.mxu0
      %3274 = vmatprep.mubr.f32.mxu0 0.0
      %3275 = vmatmul.mubr.f32.gmra.mxu0 %v2897
      %v3276 = vpop.f32.mrf.mxu0
      %v3277 = vadd.f32 0.0, %v3276
      %v3278 = vpop.f32.mrf.mxu0
      %3279 = vmatprep.mubr.f32.mxu0 0.0
      %3280 = vmatmul.mubr.f32.gmra.mxu0 %v2900
      %v3281 = vpop.f32.mrf.mxu0
      %v3282 = vadd.f32 0.0, %v3281
      %v3283 = vpop.f32.mrf.mxu0
      %3284 = vmatprep.mubr.f32.mxu0 0.0
      %3285 = vmatmul.mubr.f32.gmra.mxu0 %v2903
      %v3286 = vpop.f32.mrf.mxu0
      %v3287 = vadd.f32 0.0, %v3286
      %v3288 = vpop.f32.mrf.mxu0
      %3289 = vdwg.mxu0
      %v3290 = vmul.f32 %v2327, %v2972
      %v3291 = vmul.f32 %v2332, %v2977
      %v3292 = vmul.f32 %v2337, %v2982
      %v3293 = vmul.f32 %v2342, %v2987
      %v3294 = vmul.f32 %v2347, %v2992
      %v3295 = vmul.f32 %v2352, %v2997
      %v3296 = vmul.f32 %v2357, %v3002
      %v3297 = vmul.f32 %v2362, %v3007
      %v3298 = vmul.f32 %v2367, %v3012
      %v3299 = vmul.f32 %v2372, %v3017
      %v3300 = vmul.f32 %v2377, %v3022
      %v3301 = vmul.f32 %v2382, %v3027
      %v3302 = vmul.f32 %v2387, %v3032
      %v3303 = vmul.f32 %v2392, %v3037
      %v3304 = vmul.f32 %v2397, %v3042
      %v3305 = vmul.f32 %v2402, %v3047
      %v3306 = vmul.f32 %v2407, %v3052
      %v3307 = vmul.f32 %v2412, %v3057
      %v3308 = vmul.f32 %v2417, %v3062
      %v3309 = vmul.f32 %v2422, %v3067
      %v3310 = vmul.f32 %v2427, %v3072
      %v3311 = vmul.f32 %v2432, %v3077
      %v3312 = vmul.f32 %v2437, %v3082
      %v3313 = vmul.f32 %v2442, %v3087
      %v3314 = vmul.f32 %v2447, %v3092
      %v3315 = vmul.f32 %v2452, %v3097
      %v3316 = vmul.f32 %v2457, %v3102
      %v3317 = vmul.f32 %v2462, %v3107
      %v3318 = vmul.f32 %v2467, %v3112
      %v3319 = vmul.f32 %v2472, %v3117
      %v3320 = vmul.f32 %v2477, %v3122
      %v3321 = vmul.f32 %v2482, %v3127
      %v3322 = vmul.f32 %v2487, %v3132
      %v3323 = vmul.f32 %v2492, %v3137
      %v3324 = vmul.f32 %v2497, %v3142
      %v3325 = vmul.f32 %v2502, %v3147
      %v3326 = vmul.f32 %v2507, %v3152
      %v3327 = vmul.f32 %v2512, %v3157
      %v3328 = vmul.f32 %v2517, %v3162
      %v3329 = vmul.f32 %v2522, %v3167
      %v3330 = vmul.f32 %v2527, %v3172
      %v3331 = vmul.f32 %v2532, %v3177
      %v3332 = vmul.f32 %v2537, %v3182
      %v3333 = vmul.f32 %v2542, %v3187
      %v3334 = vmul.f32 %v2547, %v3192
      %v3335 = vmul.f32 %v2552, %v3197
      %v3336 = vmul.f32 %v2557, %v3202
      %v3337 = vmul.f32 %v2562, %v3207
      %v3338 = vmul.f32 %v2567, %v3212
      %v3339 = vmul.f32 %v2572, %v3217
      %v3340 = vmul.f32 %v2577, %v3222
      %v3341 = vmul.f32 %v2582, %v3227
      %v3342 = vmul.f32 %v2587, %v3232
      %v3343 = vmul.f32 %v2592, %v3237
      %v3344 = vmul.f32 %v2597, %v3242
      %v3345 = vmul.f32 %v2602, %v3247
      %v3346 = vmul.f32 %v2607, %v3252
      %v3347 = vmul.f32 %v2612, %v3257
      %v3348 = vmul.f32 %v2617, %v3262
      %v3349 = vmul.f32 %v2622, %v3267
      %v3350 = vmul.f32 %v2627, %v3272
      %v3351 = vmul.f32 %v2632, %v3277
      %v3352 = vmul.f32 %v2637, %v3282
      %v3353 = vmul.f32 %v2642, %v3287
      %v3354 = vld [vmem:[%s7] sm:$0xff]
      %v3355 = vld [vmem:[%s7 + $0x8] sm:$0xff]
      %v3356 = vld [vmem:[%s393] sm:$0xff]
      %v3357 = vld [vmem:[%s393 + $0x8] sm:$0xff]
      %v3358 = vld [vmem:[%s393 + $0x10] sm:$0xff]
      %v3359 = vld [vmem:[%s393 + $0x18] sm:$0xff]
      %v3360 = vld [vmem:[%s393 + $0x20] sm:$0xff]
      %v3361 = vld [vmem:[%s393 + $0x28] sm:$0xff]
      %v3362 = vld [vmem:[%s393 + $0x30] sm:$0xff]
      %v3363 = vld [vmem:[%s393 + $0x38] sm:$0xff]
      %v3364 = vld [vmem:[%s393 + $0x40] sm:$0xff]
      %v3365 = vld [vmem:[%s393 + $0x48] sm:$0xff]
      %v3366 = vld [vmem:[%s393 + $0x50] sm:$0xff]
      %v3367 = vld [vmem:[%s393 + $0x58] sm:$0xff]
      %v3368 = vld [vmem:[%s393 + $0x60] sm:$0xff]
      %v3369 = vld [vmem:[%s393 + $0x68] sm:$0xff]
      %v3370 = vld [vmem:[%s393 + $0x70] sm:$0xff]
      %v3371 = vld [vmem:[%s393 + $0x78] sm:$0xff]
      %v3372 = vld [vmem:[%s393 + $0x80] sm:$0xff]
      %v3373 = vld [vmem:[%s393 + $0x88] sm:$0xff]
      %v3374 = vld [vmem:[%s393 + $0x90] sm:$0xff]
      %v3375 = vld [vmem:[%s393 + $0x98] sm:$0xff]
      %v3376 = vld [vmem:[%s393 + $0xa0] sm:$0xff]
      %v3377 = vld [vmem:[%s393 + $0xa8] sm:$0xff]
      %v3378 = vld [vmem:[%s393 + $0xb0] sm:$0xff]
      %v3379 = vld [vmem:[%s393 + $0xb8] sm:$0xff]
      %v3380 = vld [vmem:[%s393 + $0xc0] sm:$0xff]
      %v3381 = vld [vmem:[%s393 + $0xc8] sm:$0xff]
      %v3382 = vld [vmem:[%s393 + $0xd0] sm:$0xff]
      %v3383 = vld [vmem:[%s393 + $0xd8] sm:$0xff]
      %v3384 = vld [vmem:[%s393 + $0xe0] sm:$0xff]
      %v3385 = vld [vmem:[%s393 + $0xe8] sm:$0xff]
      %v3386 = vld [vmem:[%s393 + $0xf0] sm:$0xff]
      %v3387 = vld [vmem:[%s393 + $0xf8] sm:$0xff]
      %v3388 = vld [vmem:[%s393 + $0x100] sm:$0xff]
      %v3389 = vld [vmem:[%s393 + $0x108] sm:$0xff]
      %v3390 = vld [vmem:[%s393 + $0x110] sm:$0xff]
      %v3391 = vld [vmem:[%s393 + $0x118] sm:$0xff]
      %v3392 = vld [vmem:[%s393 + $0x120] sm:$0xff]
      %v3393 = vld [vmem:[%s393 + $0x128] sm:$0xff]
      %v3394 = vld [vmem:[%s393 + $0x130] sm:$0xff]
      %v3395 = vld [vmem:[%s393 + $0x138] sm:$0xff]
      %v3396 = vld [vmem:[%s393 + $0x140] sm:$0xff]
      %v3397 = vld [vmem:[%s393 + $0x148] sm:$0xff]
      %v3398 = vld [vmem:[%s393 + $0x150] sm:$0xff]
      %v3399 = vld [vmem:[%s393 + $0x158] sm:$0xff]
      %v3400 = vld [vmem:[%s393 + $0x160] sm:$0xff]
      %v3401 = vld [vmem:[%s393 + $0x168] sm:$0xff]
      %v3402 = vld [vmem:[%s393 + $0x170] sm:$0xff]
      %v3403 = vld [vmem:[%s393 + $0x178] sm:$0xff]
      %v3404 = vld [vmem:[%s393 + $0x180] sm:$0xff]
      %v3405 = vld [vmem:[%s393 + $0x188] sm:$0xff]
      %v3406 = vld [vmem:[%s393 + $0x190] sm:$0xff]
      %v3407 = vld [vmem:[%s393 + $0x198] sm:$0xff]
      %v3408 = vld [vmem:[%s393 + $0x1a0] sm:$0xff]
      %v3409 = vld [vmem:[%s393 + $0x1a8] sm:$0xff]
      %v3410 = vld [vmem:[%s393 + $0x1b0] sm:$0xff]
      %v3411 = vld [vmem:[%s393 + $0x1b8] sm:$0xff]
      %v3412 = vld [vmem:[%s393 + $0x1c0] sm:$0xff]
      %v3413 = vld [vmem:[%s393 + $0x1c8] sm:$0xff]
      %v3414 = vld [vmem:[%s393 + $0x1d0] sm:$0xff]
      %v3415 = vld [vmem:[%s393 + $0x1d8] sm:$0xff]
      %v3416 = vld [vmem:[%s393 + $0x1e0] sm:$0xff]
      %v3417 = vld [vmem:[%s393 + $0x1e8] sm:$0xff]
      %v3418 = vld [vmem:[%s393 + $0x1f0] sm:$0xff]
      %v3419 = vld [vmem:[%s393 + $0x1f8] sm:$0xff]
      %v3420 = vld [vmem:[%s8] sm:$0xff]
      %v3421 = vld [vmem:[%s8 + $0x8] sm:$0xff]
      %vm3422 = vcmask 130048
      %v3424 = vsel %vm3422, %v3356, 0
      %v3427 = vsel %vm3422, %v3357, 0
      %v3430 = vsel %vm3422, %v3358, 0
      %v3433 = vsel %vm3422, %v3359, 0
      %v3436 = vsel %vm3422, %v3360, 0
      %v3439 = vsel %vm3422, %v3361, 0
      %v3442 = vsel %vm3422, %v3362, 0
      %v3445 = vsel %vm3422, %v3363, 0
      %v3448 = vsel %vm3422, %v3364, 0
      %v3451 = vsel %vm3422, %v3365, 0
      %v3454 = vsel %vm3422, %v3366, 0
      %v3457 = vsel %vm3422, %v3367, 0
      %v3460 = vsel %vm3422, %v3368, 0
      %v3463 = vsel %vm3422, %v3369, 0
      %v3466 = vsel %vm3422, %v3370, 0
      %v3469 = vsel %vm3422, %v3371, 0
      %v3472 = vsel %vm3422, %v3372, 0
      %v3475 = vsel %vm3422, %v3373, 0
      %v3478 = vsel %vm3422, %v3374, 0
      %v3481 = vsel %vm3422, %v3375, 0
      %v3484 = vsel %vm3422, %v3376, 0
      %v3487 = vsel %vm3422, %v3377, 0
      %v3490 = vsel %vm3422, %v3378, 0
      %v3493 = vsel %vm3422, %v3379, 0
      %v3496 = vsel %vm3422, %v3380, 0
      %v3499 = vsel %vm3422, %v3381, 0
      %v3502 = vsel %vm3422, %v3382, 0
      %v3505 = vsel %vm3422, %v3383, 0
      %v3508 = vsel %vm3422, %v3384, 0
      %v3511 = vsel %vm3422, %v3385, 0
      %v3514 = vsel %vm3422, %v3386, 0
      %v3517 = vsel %vm3422, %v3387, 0
      %v3520 = vsel %vm3422, %v3388, 0
      %v3523 = vsel %vm3422, %v3389, 0
      %v3526 = vsel %vm3422, %v3390, 0
      %v3529 = vsel %vm3422, %v3391, 0
      %v3532 = vsel %vm3422, %v3392, 0
      %v3535 = vsel %vm3422, %v3393, 0
      %v3538 = vsel %vm3422, %v3394, 0
      %v3541 = vsel %vm3422, %v3395, 0
      %v3544 = vsel %vm3422, %v3396, 0
      %v3547 = vsel %vm3422, %v3397, 0
      %v3550 = vsel %vm3422, %v3398, 0
      %v3553 = vsel %vm3422, %v3399, 0
      %v3556 = vsel %vm3422, %v3400, 0
      %v3559 = vsel %vm3422, %v3401, 0
      %v3562 = vsel %vm3422, %v3402, 0
      %v3565 = vsel %vm3422, %v3403, 0
      %v3568 = vsel %vm3422, %v3404, 0
      %v3571 = vsel %vm3422, %v3405, 0
      %v3574 = vsel %vm3422, %v3406, 0
      %v3577 = vsel %vm3422, %v3407, 0
      %v3580 = vsel %vm3422, %v3408, 0
      %v3583 = vsel %vm3422, %v3409, 0
      %v3586 = vsel %vm3422, %v3410, 0
      %v3589 = vsel %vm3422, %v3411, 0
      %v3592 = vsel %vm3422, %v3412, 0
      %v3595 = vsel %vm3422, %v3413, 0
      %v3598 = vsel %vm3422, %v3414, 0
      %v3601 = vsel %vm3422, %v3415, 0
      %v3604 = vsel %vm3422, %v3416, 0
      %v3607 = vsel %vm3422, %v3417, 0
      %v3610 = vsel %vm3422, %v3418, 0
      %v3613 = vsel %vm3422, %v3419, 0
      %3615 = vmatprep.subr.mxu0 0.0
      %3616 = vmatpush1.msra.mxu0 0.0
      %3617 = vmatprep.subr.mxu0 0.0
      %3618 = vmatpush1.msra.mxu0 0.0
      %3619 = vmatprep.subr.mxu0 0.0
      %3620 = vmatpush1.msra.mxu0 0.0
      %3621 = vmatprep.subr.mxu0 0.0
      %3622 = vmatpush1.msra.mxu0 0.0
      %3623 = vmatprep.subr.mxu0 0.0
      %3624 = vmatpush1.msra.mxu0 0.0
      %3625 = vmatprep.subr.mxu0 0.0
      %3626 = vmatpush1.msra.mxu0 0.0
      %3627 = vmatprep.subr.mxu0 0.0
      %3628 = vmatpush1.msra.mxu0 0.0
      %3629 = vmatprep.subr.mxu0 0.0
      %3630 = vmatpush1.msra.mxu0 0.0
      %3631 = vmatprep.subr.mxu0 0.0
      %3632 = vmatpush1.msra.mxu0 0.0
      %3633 = vmatprep.subr.mxu0 0.0
      %3634 = vmatpush1.msra.mxu0 0.0
      %3635 = vmatprep.subr.mxu0 0.0
      %3636 = vmatpush1.msra.mxu0 0.0
      %3637 = vmatprep.subr.mxu0 0.0
      %3638 = vmatpush1.msra.mxu0 0.0
      %3639 = vmatprep.subr.mxu0 0.0
      %3640 = vmatpush1.msra.mxu0 0.0
      %3641 = vmatprep.subr.mxu0 0.0
      %3642 = vmatpush1.msra.mxu0 0.0
      %3643 = vmatprep.subr.mxu0 0.0
      %3644 = vmatpush1.msra.mxu0 %v3421
      %3645 = vmatprep.subr.mxu0 0.0
      %3646 = vmatpush1.msra.mxu0 %v3420
      %3647 = vmatprep.subr.mxu0 0.0
      %3648 = vmatpush2.msra.mxu0 0.0
      %3649 = vmatprep.subr.mxu0 0.0
      %3650 = vmatpush2.msra.mxu0 0.0
      %3651 = vmatprep.subr.mxu0 0.0
      %3652 = vmatpush2.msra.mxu0 0.0
      %3653 = vmatprep.subr.mxu0 0.0
      %3654 = vmatpush2.msra.mxu0 0.0
      %3655 = vmatprep.subr.mxu0 0.0
      %3656 = vmatpush2.msra.mxu0 0.0
      %3657 = vmatprep.subr.mxu0 0.0
      %3658 = vmatpush2.msra.mxu0 0.0
      %3659 = vmatprep.subr.mxu0 0.0
      %3660 = vmatpush2.msra.mxu0 0.0
      %3661 = vmatprep.subr.mxu0 0.0
      %3662 = vmatpush2.msra.mxu0 0.0
      %3663 = vmatprep.subr.mxu0 0.0
      %3664 = vmatpush2.msra.mxu0 0.0
      %3665 = vmatprep.subr.mxu0 0.0
      %3666 = vmatpush2.msra.mxu0 0.0
      %3667 = vmatprep.subr.mxu0 0.0
      %3668 = vmatpush2.msra.mxu0 0.0
      %3669 = vmatprep.subr.mxu0 0.0
      %3670 = vmatpush2.msra.mxu0 0.0
      %3671 = vmatprep.subr.mxu0 0.0
      %3672 = vmatpush2.msra.mxu0 0.0
      %3673 = vmatprep.subr.mxu0 0.0
      %3674 = vmatpush2.msra.mxu0 0.0
      %3675 = vmatprep.subr.mxu0 0.0
      %3676 = vmatpush2.msra.mxu0 0.0
      %3677 = vmatprep.subr.mxu0 0.0
      %3678 = vmatpush2.msra.mxu0 0.0
      %3679 = vmatprep.mubr.f32.mxu0 0.0
      %3680 = vmatmul.mubr.f32.gmra.mxu0 %v3424
      %v3681 = vpop.f32.mrf.mxu0
      %v3682 = vadd.f32 0.0, %v3681
      %v3683 = vpop.f32.mrf.mxu0
      %3684 = vmatprep.mubr.f32.mxu0 0.0
      %3685 = vmatmul.mubr.f32.gmra.mxu0 %v3427
      %v3686 = vpop.f32.mrf.mxu0
      %v3687 = vadd.f32 0.0, %v3686
      %v3688 = vpop.f32.mrf.mxu0
      %3689 = vmatprep.mubr.f32.mxu0 0.0
      %3690 = vmatmul.mubr.f32.gmra.mxu0 %v3430
      %v3691 = vpop.f32.mrf.mxu0
      %v3692 = vadd.f32 0.0, %v3691
      %v3693 = vpop.f32.mrf.mxu0
      %3694 = vmatprep.mubr.f32.mxu0 0.0
      %3695 = vmatmul.mubr.f32.gmra.mxu0 %v3433
      %v3696 = vpop.f32.mrf.mxu0
      %v3697 = vadd.f32 0.0, %v3696
      %v3698 = vpop.f32.mrf.mxu0
      %3699 = vmatprep.mubr.f32.mxu0 0.0
      %3700 = vmatmul.mubr.f32.gmra.mxu0 %v3436
      %v3701 = vpop.f32.mrf.mxu0
      %v3702 = vadd.f32 0.0, %v3701
      %v3703 = vpop.f32.mrf.mxu0
      %3704 = vmatprep.mubr.f32.mxu0 0.0
      %3705 = vmatmul.mubr.f32.gmra.mxu0 %v3439
      %v3706 = vpop.f32.mrf.mxu0
      %v3707 = vadd.f32 0.0, %v3706
      %v3708 = vpop.f32.mrf.mxu0
      %3709 = vmatprep.mubr.f32.mxu0 0.0
      %3710 = vmatmul.mubr.f32.gmra.mxu0 %v3442
      %v3711 = vpop.f32.mrf.mxu0
      %v3712 = vadd.f32 0.0, %v3711
      %v3713 = vpop.f32.mrf.mxu0
      %3714 = vmatprep.mubr.f32.mxu0 0.0
      %3715 = vmatmul.mubr.f32.gmra.mxu0 %v3445
      %v3716 = vpop.f32.mrf.mxu0
      %v3717 = vadd.f32 0.0, %v3716
      %v3718 = vpop.f32.mrf.mxu0
      %3719 = vmatprep.mubr.f32.mxu0 0.0
      %3720 = vmatmul.mubr.f32.gmra.mxu0 %v3448
      %v3721 = vpop.f32.mrf.mxu0
      %v3722 = vadd.f32 0.0, %v3721
      %v3723 = vpop.f32.mrf.mxu0
      %3724 = vmatprep.mubr.f32.mxu0 0.0
      %3725 = vmatmul.mubr.f32.gmra.mxu0 %v3451
      %v3726 = vpop.f32.mrf.mxu0
      %v3727 = vadd.f32 0.0, %v3726
      %v3728 = vpop.f32.mrf.mxu0
      %3729 = vmatprep.mubr.f32.mxu0 0.0
      %3730 = vmatmul.mubr.f32.gmra.mxu0 %v3454
      %v3731 = vpop.f32.mrf.mxu0
      %v3732 = vadd.f32 0.0, %v3731
      %v3733 = vpop.f32.mrf.mxu0
      %3734 = vmatprep.mubr.f32.mxu0 0.0
      %3735 = vmatmul.mubr.f32.gmra.mxu0 %v3457
      %v3736 = vpop.f32.mrf.mxu0
      %v3737 = vadd.f32 0.0, %v3736
      %v3738 = vpop.f32.mrf.mxu0
      %3739 = vmatprep.mubr.f32.mxu0 0.0
      %3740 = vmatmul.mubr.f32.gmra.mxu0 %v3460
      %v3741 = vpop.f32.mrf.mxu0
      %v3742 = vadd.f32 0.0, %v3741
      %v3743 = vpop.f32.mrf.mxu0
      %3744 = vmatprep.mubr.f32.mxu0 0.0
      %3745 = vmatmul.mubr.f32.gmra.mxu0 %v3463
      %v3746 = vpop.f32.mrf.mxu0
      %v3747 = vadd.f32 0.0, %v3746
      %v3748 = vpop.f32.mrf.mxu0
      %3749 = vmatprep.mubr.f32.mxu0 0.0
      %3750 = vmatmul.mubr.f32.gmra.mxu0 %v3466
      %v3751 = vpop.f32.mrf.mxu0
      %v3752 = vadd.f32 0.0, %v3751
      %v3753 = vpop.f32.mrf.mxu0
      %3754 = vmatprep.mubr.f32.mxu0 0.0
      %3755 = vmatmul.mubr.f32.gmra.mxu0 %v3469
      %v3756 = vpop.f32.mrf.mxu0
      %v3757 = vadd.f32 0.0, %v3756
      %v3758 = vpop.f32.mrf.mxu0
      %3759 = vmatprep.mubr.f32.mxu0 0.0
      %3760 = vmatmul.mubr.f32.gmra.mxu0 %v3472
      %v3761 = vpop.f32.mrf.mxu0
      %v3762 = vadd.f32 0.0, %v3761
      %v3763 = vpop.f32.mrf.mxu0
      %3764 = vmatprep.mubr.f32.mxu0 0.0
      %3765 = vmatmul.mubr.f32.gmra.mxu0 %v3475
      %v3766 = vpop.f32.mrf.mxu0
      %v3767 = vadd.f32 0.0, %v3766
      %v3768 = vpop.f32.mrf.mxu0
      %3769 = vmatprep.mubr.f32.mxu0 0.0
      %3770 = vmatmul.mubr.f32.gmra.mxu0 %v3478
      %v3771 = vpop.f32.mrf.mxu0
      %v3772 = vadd.f32 0.0, %v3771
      %v3773 = vpop.f32.mrf.mxu0
      %3774 = vmatprep.mubr.f32.mxu0 0.0
      %3775 = vmatmul.mubr.f32.gmra.mxu0 %v3481
      %v3776 = vpop.f32.mrf.mxu0
      %v3777 = vadd.f32 0.0, %v3776
      %v3778 = vpop.f32.mrf.mxu0
      %3779 = vmatprep.mubr.f32.mxu0 0.0
      %3780 = vmatmul.mubr.f32.gmra.mxu0 %v3484
      %v3781 = vpop.f32.mrf.mxu0
      %v3782 = vadd.f32 0.0, %v3781
      %v3783 = vpop.f32.mrf.mxu0
      %3784 = vmatprep.mubr.f32.mxu0 0.0
      %3785 = vmatmul.mubr.f32.gmra.mxu0 %v3487
      %v3786 = vpop.f32.mrf.mxu0
      %v3787 = vadd.f32 0.0, %v3786
      %v3788 = vpop.f32.mrf.mxu0
      %3789 = vmatprep.mubr.f32.mxu0 0.0
      %3790 = vmatmul.mubr.f32.gmra.mxu0 %v3490
      %v3791 = vpop.f32.mrf.mxu0
      %v3792 = vadd.f32 0.0, %v3791
      %v3793 = vpop.f32.mrf.mxu0
      %3794 = vmatprep.mubr.f32.mxu0 0.0
      %3795 = vmatmul.mubr.f32.gmra.mxu0 %v3493
      %v3796 = vpop.f32.mrf.mxu0
      %v3797 = vadd.f32 0.0, %v3796
      %v3798 = vpop.f32.mrf.mxu0
      %3799 = vmatprep.mubr.f32.mxu0 0.0
      %3800 = vmatmul.mubr.f32.gmra.mxu0 %v3496
      %v3801 = vpop.f32.mrf.mxu0
      %v3802 = vadd.f32 0.0, %v3801
      %v3803 = vpop.f32.mrf.mxu0
      %3804 = vmatprep.mubr.f32.mxu0 0.0
      %3805 = vmatmul.mubr.f32.gmra.mxu0 %v3499
      %v3806 = vpop.f32.mrf.mxu0
      %v3807 = vadd.f32 0.0, %v3806
      %v3808 = vpop.f32.mrf.mxu0
      %3809 = vmatprep.mubr.f32.mxu0 0.0
      %3810 = vmatmul.mubr.f32.gmra.mxu0 %v3502
      %v3811 = vpop.f32.mrf.mxu0
      %v3812 = vadd.f32 0.0, %v3811
      %v3813 = vpop.f32.mrf.mxu0
      %3814 = vmatprep.mubr.f32.mxu0 0.0
      %3815 = vmatmul.mubr.f32.gmra.mxu0 %v3505
      %v3816 = vpop.f32.mrf.mxu0
      %v3817 = vadd.f32 0.0, %v3816
      %v3818 = vpop.f32.mrf.mxu0
      %3819 = vmatprep.mubr.f32.mxu0 0.0
      %3820 = vmatmul.mubr.f32.gmra.mxu0 %v3508
      %v3821 = vpop.f32.mrf.mxu0
      %v3822 = vadd.f32 0.0, %v3821
      %v3823 = vpop.f32.mrf.mxu0
      %3824 = vmatprep.mubr.f32.mxu0 0.0
      %3825 = vmatmul.mubr.f32.gmra.mxu0 %v3511
      %v3826 = vpop.f32.mrf.mxu0
      %v3827 = vadd.f32 0.0, %v3826
      %v3828 = vpop.f32.mrf.mxu0
      %3829 = vmatprep.mubr.f32.mxu0 0.0
      %3830 = vmatmul.mubr.f32.gmra.mxu0 %v3514
      %v3831 = vpop.f32.mrf.mxu0
      %v3832 = vadd.f32 0.0, %v3831
      %v3833 = vpop.f32.mrf.mxu0
      %3834 = vmatprep.mubr.f32.mxu0 0.0
      %3835 = vmatmul.mubr.f32.gmra.mxu0 %v3517
      %v3836 = vpop.f32.mrf.mxu0
      %v3837 = vadd.f32 0.0, %v3836
      %v3838 = vpop.f32.mrf.mxu0
      %3839 = vmatprep.mubr.f32.mxu0 0.0
      %3840 = vmatmul.mubr.f32.gmra.mxu0 %v3520
      %v3841 = vpop.f32.mrf.mxu0
      %v3842 = vadd.f32 0.0, %v3841
      %v3843 = vpop.f32.mrf.mxu0
      %3844 = vmatprep.mubr.f32.mxu0 0.0
      %3845 = vmatmul.mubr.f32.gmra.mxu0 %v3523
      %v3846 = vpop.f32.mrf.mxu0
      %v3847 = vadd.f32 0.0, %v3846
      %v3848 = vpop.f32.mrf.mxu0
      %3849 = vmatprep.mubr.f32.mxu0 0.0
      %3850 = vmatmul.mubr.f32.gmra.mxu0 %v3526
      %v3851 = vpop.f32.mrf.mxu0
      %v3852 = vadd.f32 0.0, %v3851
      %v3853 = vpop.f32.mrf.mxu0
      %3854 = vmatprep.mubr.f32.mxu0 0.0
      %3855 = vmatmul.mubr.f32.gmra.mxu0 %v3529
      %v3856 = vpop.f32.mrf.mxu0
      %v3857 = vadd.f32 0.0, %v3856
      %v3858 = vpop.f32.mrf.mxu0
      %3859 = vmatprep.mubr.f32.mxu0 0.0
      %3860 = vmatmul.mubr.f32.gmra.mxu0 %v3532
      %v3861 = vpop.f32.mrf.mxu0
      %v3862 = vadd.f32 0.0, %v3861
      %v3863 = vpop.f32.mrf.mxu0
      %3864 = vmatprep.mubr.f32.mxu0 0.0
      %3865 = vmatmul.mubr.f32.gmra.mxu0 %v3535
      %v3866 = vpop.f32.mrf.mxu0
      %v3867 = vadd.f32 0.0, %v3866
      %v3868 = vpop.f32.mrf.mxu0
      %3869 = vmatprep.mubr.f32.mxu0 0.0
      %3870 = vmatmul.mubr.f32.gmra.mxu0 %v3538
      %v3871 = vpop.f32.mrf.mxu0
      %v3872 = vadd.f32 0.0, %v3871
      %v3873 = vpop.f32.mrf.mxu0
      %3874 = vmatprep.mubr.f32.mxu0 0.0
      %3875 = vmatmul.mubr.f32.gmra.mxu0 %v3541
      %v3876 = vpop.f32.mrf.mxu0
      %v3877 = vadd.f32 0.0, %v3876
      %v3878 = vpop.f32.mrf.mxu0
      %3879 = vmatprep.mubr.f32.mxu0 0.0
      %3880 = vmatmul.mubr.f32.gmra.mxu0 %v3544
      %v3881 = vpop.f32.mrf.mxu0
      %v3882 = vadd.f32 0.0, %v3881
      %v3883 = vpop.f32.mrf.mxu0
      %3884 = vmatprep.mubr.f32.mxu0 0.0
      %3885 = vmatmul.mubr.f32.gmra.mxu0 %v3547
      %v3886 = vpop.f32.mrf.mxu0
      %v3887 = vadd.f32 0.0, %v3886
      %v3888 = vpop.f32.mrf.mxu0
      %3889 = vmatprep.mubr.f32.mxu0 0.0
      %3890 = vmatmul.mubr.f32.gmra.mxu0 %v3550
      %v3891 = vpop.f32.mrf.mxu0
      %v3892 = vadd.f32 0.0, %v3891
      %v3893 = vpop.f32.mrf.mxu0
      %3894 = vmatprep.mubr.f32.mxu0 0.0
      %3895 = vmatmul.mubr.f32.gmra.mxu0 %v3553
      %v3896 = vpop.f32.mrf.mxu0
      %v3897 = vadd.f32 0.0, %v3896
      %v3898 = vpop.f32.mrf.mxu0
      %3899 = vmatprep.mubr.f32.mxu0 0.0
      %3900 = vmatmul.mubr.f32.gmra.mxu0 %v3556
      %v3901 = vpop.f32.mrf.mxu0
      %v3902 = vadd.f32 0.0, %v3901
      %v3903 = vpop.f32.mrf.mxu0
      %3904 = vmatprep.mubr.f32.mxu0 0.0
      %3905 = vmatmul.mubr.f32.gmra.mxu0 %v3559
      %v3906 = vpop.f32.mrf.mxu0
      %v3907 = vadd.f32 0.0, %v3906
      %v3908 = vpop.f32.mrf.mxu0
      %3909 = vmatprep.mubr.f32.mxu0 0.0
      %3910 = vmatmul.mubr.f32.gmra.mxu0 %v3562
      %v3911 = vpop.f32.mrf.mxu0
      %v3912 = vadd.f32 0.0, %v3911
      %v3913 = vpop.f32.mrf.mxu0
      %3914 = vmatprep.mubr.f32.mxu0 0.0
      %3915 = vmatmul.mubr.f32.gmra.mxu0 %v3565
      %v3916 = vpop.f32.mrf.mxu0
      %v3917 = vadd.f32 0.0, %v3916
      %v3918 = vpop.f32.mrf.mxu0
      %3919 = vmatprep.mubr.f32.mxu0 0.0
      %3920 = vmatmul.mubr.f32.gmra.mxu0 %v3568
      %v3921 = vpop.f32.mrf.mxu0
      %v3922 = vadd.f32 0.0, %v3921
      %v3923 = vpop.f32.mrf.mxu0
      %3924 = vmatprep.mubr.f32.mxu0 0.0
      %3925 = vmatmul.mubr.f32.gmra.mxu0 %v3571
      %v3926 = vpop.f32.mrf.mxu0
      %v3927 = vadd.f32 0.0, %v3926
      %v3928 = vpop.f32.mrf.mxu0
      %3929 = vmatprep.mubr.f32.mxu0 0.0
      %3930 = vmatmul.mubr.f32.gmra.mxu0 %v3574
      %v3931 = vpop.f32.mrf.mxu0
      %v3932 = vadd.f32 0.0, %v3931
      %v3933 = vpop.f32.mrf.mxu0
      %3934 = vmatprep.mubr.f32.mxu0 0.0
      %3935 = vmatmul.mubr.f32.gmra.mxu0 %v3577
      %v3936 = vpop.f32.mrf.mxu0
      %v3937 = vadd.f32 0.0, %v3936
      %v3938 = vpop.f32.mrf.mxu0
      %3939 = vmatprep.mubr.f32.mxu0 0.0
      %3940 = vmatmul.mubr.f32.gmra.mxu0 %v3580
      %v3941 = vpop.f32.mrf.mxu0
      %v3942 = vadd.f32 0.0, %v3941
      %v3943 = vpop.f32.mrf.mxu0
      %3944 = vmatprep.mubr.f32.mxu0 0.0
      %3945 = vmatmul.mubr.f32.gmra.mxu0 %v3583
      %v3946 = vpop.f32.mrf.mxu0
      %v3947 = vadd.f32 0.0, %v3946
      %v3948 = vpop.f32.mrf.mxu0
      %3949 = vmatprep.mubr.f32.mxu0 0.0
      %3950 = vmatmul.mubr.f32.gmra.mxu0 %v3586
      %v3951 = vpop.f32.mrf.mxu0
      %v3952 = vadd.f32 0.0, %v3951
      %v3953 = vpop.f32.mrf.mxu0
      %3954 = vmatprep.mubr.f32.mxu0 0.0
      %3955 = vmatmul.mubr.f32.gmra.mxu0 %v3589
      %v3956 = vpop.f32.mrf.mxu0
      %v3957 = vadd.f32 0.0, %v3956
      %v3958 = vpop.f32.mrf.mxu0
      %3959 = vmatprep.mubr.f32.mxu0 0.0
      %3960 = vmatmul.mubr.f32.gmra.mxu0 %v3592
      %v3961 = vpop.f32.mrf.mxu0
      %v3962 = vadd.f32 0.0, %v3961
      %v3963 = vpop.f32.mrf.mxu0
      %3964 = vmatprep.mubr.f32.mxu0 0.0
      %3965 = vmatmul.mubr.f32.gmra.mxu0 %v3595
      %v3966 = vpop.f32.mrf.mxu0
      %v3967 = vadd.f32 0.0, %v3966
      %v3968 = vpop.f32.mrf.mxu0
      %3969 = vmatprep.mubr.f32.mxu0 0.0
      %3970 = vmatmul.mubr.f32.gmra.mxu0 %v3598
      %v3971 = vpop.f32.mrf.mxu0
      %v3972 = vadd.f32 0.0, %v3971
      %v3973 = vpop.f32.mrf.mxu0
      %3974 = vmatprep.mubr.f32.mxu0 0.0
      %3975 = vmatmul.mubr.f32.gmra.mxu0 %v3601
      %v3976 = vpop.f32.mrf.mxu0
      %v3977 = vadd.f32 0.0, %v3976
      %v3978 = vpop.f32.mrf.mxu0
      %3979 = vmatprep.mubr.f32.mxu0 0.0
      %3980 = vmatmul.mubr.f32.gmra.mxu0 %v3604
      %v3981 = vpop.f32.mrf.mxu0
      %v3982 = vadd.f32 0.0, %v3981
      %v3983 = vpop.f32.mrf.mxu0
      %3984 = vmatprep.mubr.f32.mxu0 0.0
      %3985 = vmatmul.mubr.f32.gmra.mxu0 %v3607
      %v3986 = vpop.f32.mrf.mxu0
      %v3987 = vadd.f32 0.0, %v3986
      %v3988 = vpop.f32.mrf.mxu0
      %3989 = vmatprep.mubr.f32.mxu0 0.0
      %3990 = vmatmul.mubr.f32.gmra.mxu0 %v3610
      %v3991 = vpop.f32.mrf.mxu0
      %v3992 = vadd.f32 0.0, %v3991
      %v3993 = vpop.f32.mrf.mxu0
      %3994 = vmatprep.mubr.f32.mxu0 0.0
      %3995 = vmatmul.mubr.f32.gmra.mxu0 %v3613
      %v3996 = vpop.f32.mrf.mxu0
      %v3997 = vadd.f32 0.0, %v3996
      %v3998 = vpop.f32.mrf.mxu0
      %3999 = vdwg.mxu0
      %v4001 = vsel %vm3422, %v1335, 0
      %v4004 = vsel %vm3422, %v1340, 0
      %v4007 = vsel %vm3422, %v1345, 0
      %v4010 = vsel %vm3422, %v1350, 0
      %v4013 = vsel %vm3422, %v1355, 0
      %v4016 = vsel %vm3422, %v1360, 0
      %v4019 = vsel %vm3422, %v1365, 0
      %v4022 = vsel %vm3422, %v1370, 0
      %v4025 = vsel %vm3422, %v1375, 0
      %v4028 = vsel %vm3422, %v1380, 0
      %v4031 = vsel %vm3422, %v1385, 0
      %v4034 = vsel %vm3422, %v1390, 0
      %v4037 = vsel %vm3422, %v1395, 0
      %v4040 = vsel %vm3422, %v1400, 0
      %v4043 = vsel %vm3422, %v1405, 0
      %v4046 = vsel %vm3422, %v1410, 0
      %v4049 = vsel %vm3422, %v1415, 0
      %v4052 = vsel %vm3422, %v1420, 0
      %v4055 = vsel %vm3422, %v1425, 0
      %v4058 = vsel %vm3422, %v1430, 0
      %v4061 = vsel %vm3422, %v1435, 0
      %v4064 = vsel %vm3422, %v1440, 0
      %v4067 = vsel %vm3422, %v1445, 0
      %v4070 = vsel %vm3422, %v1450, 0
      %v4073 = vsel %vm3422, %v1455, 0
      %v4076 = vsel %vm3422, %v1460, 0
      %v4079 = vsel %vm3422, %v1465, 0
      %v4082 = vsel %vm3422, %v1470, 0
      %v4085 = vsel %vm3422, %v1475, 0
      %v4088 = vsel %vm3422, %v1480, 0
      %v4091 = vsel %vm3422, %v1485, 0
      %v4094 = vsel %vm3422, %v1490, 0
      %v4097 = vsel %vm3422, %v1495, 0
      %v4100 = vsel %vm3422, %v1500, 0
      %v4103 = vsel %vm3422, %v1505, 0
      %v4106 = vsel %vm3422, %v1510, 0
      %v4109 = vsel %vm3422, %v1515, 0
      %v4112 = vsel %vm3422, %v1520, 0
      %v4115 = vsel %vm3422, %v1525, 0
      %v4118 = vsel %vm3422, %v1530, 0
      %v4121 = vsel %vm3422, %v1535, 0
      %v4124 = vsel %vm3422, %v1540, 0
      %v4127 = vsel %vm3422, %v1545, 0
      %v4130 = vsel %vm3422, %v1550, 0
      %v4133 = vsel %vm3422, %v1555, 0
      %v4136 = vsel %vm3422, %v1560, 0
      %v4139 = vsel %vm3422, %v1565, 0
      %v4142 = vsel %vm3422, %v1570, 0
      %v4145 = vsel %vm3422, %v1575, 0
      %v4148 = vsel %vm3422, %v1580, 0
      %v4151 = vsel %vm3422, %v1585, 0
      %v4154 = vsel %vm3422, %v1590, 0
      %v4157 = vsel %vm3422, %v1595, 0
      %v4160 = vsel %vm3422, %v1600, 0
      %v4163 = vsel %vm3422, %v1605, 0
      %v4166 = vsel %vm3422, %v1610, 0
      %v4169 = vsel %vm3422, %v1615, 0
      %v4172 = vsel %vm3422, %v1620, 0
      %v4175 = vsel %vm3422, %v1625, 0
      %v4178 = vsel %vm3422, %v1630, 0
      %v4181 = vsel %vm3422, %v1635, 0
      %v4184 = vsel %vm3422, %v1640, 0
      %v4187 = vsel %vm3422, %v1645, 0
      %v4190 = vsel %vm3422, %v1650, 0
      %4192 = vmatprep.subr.mxu0 0.0
      %4193 = vmatpush1.msra.mxu0 0.0
      %4194 = vmatprep.subr.mxu0 0.0
      %4195 = vmatpush1.msra.mxu0 0.0
      %4196 = vmatprep.subr.mxu0 0.0
      %4197 = vmatpush1.msra.mxu0 0.0
      %4198 = vmatprep.subr.mxu0 0.0
      %4199 = vmatpush1.msra.mxu0 0.0
      %4200 = vmatprep.subr.mxu0 0.0
      %4201 = vmatpush1.msra.mxu0 0.0
      %4202 = vmatprep.subr.mxu0 0.0
      %4203 = vmatpush1.msra.mxu0 0.0
      %4204 = vmatprep.subr.mxu0 0.0
      %4205 = vmatpush1.msra.mxu0 0.0
      %4206 = vmatprep.subr.mxu0 0.0
      %4207 = vmatpush1.msra.mxu0 0.0
      %4208 = vmatprep.subr.mxu0 0.0
      %4209 = vmatpush1.msra.mxu0 0.0
      %4210 = vmatprep.subr.mxu0 0.0
      %4211 = vmatpush1.msra.mxu0 0.0
      %4212 = vmatprep.subr.mxu0 0.0
      %4213 = vmatpush1.msra.mxu0 0.0
      %4214 = vmatprep.subr.mxu0 0.0
      %4215 = vmatpush1.msra.mxu0 0.0
      %4216 = vmatprep.subr.mxu0 0.0
      %4217 = vmatpush1.msra.mxu0 0.0
      %4218 = vmatprep.subr.mxu0 0.0
      %4219 = vmatpush1.msra.mxu0 0.0
      %4220 = vmatprep.subr.mxu0 0.0
      %4221 = vmatpush1.msra.mxu0 %v3355
      %4222 = vmatprep.subr.mxu0 0.0
      %4223 = vmatpush1.msra.mxu0 %v3354
      %4224 = vmatprep.subr.mxu0 0.0
      %4225 = vmatpush2.msra.mxu0 0.0
      %4226 = vmatprep.subr.mxu0 0.0
      %4227 = vmatpush2.msra.mxu0 0.0
      %4228 = vmatprep.subr.mxu0 0.0
      %4229 = vmatpush2.msra.mxu0 0.0
      %4230 = vmatprep.subr.mxu0 0.0
      %4231 = vmatpush2.msra.mxu0 0.0
      %4232 = vmatprep.subr.mxu0 0.0
      %4233 = vmatpush2.msra.mxu0 0.0
      %4234 = vmatprep.subr.mxu0 0.0
      %4235 = vmatpush2.msra.mxu0 0.0
      %4236 = vmatprep.subr.mxu0 0.0
      %4237 = vmatpush2.msra.mxu0 0.0
      %4238 = vmatprep.subr.mxu0 0.0
      %4239 = vmatpush2.msra.mxu0 0.0
      %4240 = vmatprep.subr.mxu0 0.0
      %4241 = vmatpush2.msra.mxu0 0.0
      %4242 = vmatprep.subr.mxu0 0.0
      %4243 = vmatpush2.msra.mxu0 0.0
      %4244 = vmatprep.subr.mxu0 0.0
      %4245 = vmatpush2.msra.mxu0 0.0
      %4246 = vmatprep.subr.mxu0 0.0
      %4247 = vmatpush2.msra.mxu0 0.0
      %4248 = vmatprep.subr.mxu0 0.0
      %4249 = vmatpush2.msra.mxu0 0.0
      %4250 = vmatprep.subr.mxu0 0.0
      %4251 = vmatpush2.msra.mxu0 0.0
      %4252 = vmatprep.subr.mxu0 0.0
      %4253 = vmatpush2.msra.mxu0 0.0
      %4254 = vmatprep.subr.mxu0 0.0
      %4255 = vmatpush2.msra.mxu0 0.0
      %4256 = vmatprep.mubr.f32.mxu0 0.0
      %4257 = vmatmul.mubr.f32.gmra.mxu0 %v4001
      %v4258 = vpop.f32.mrf.mxu0
      %v4259 = vadd.f32 %v3682, %v4258
      %v4260 = vpop.f32.mrf.mxu0
      %4261 = vmatprep.mubr.f32.mxu0 0.0
      %4262 = vmatmul.mubr.f32.gmra.mxu0 %v4004
      %v4263 = vpop.f32.mrf.mxu0
      %v4264 = vadd.f32 %v3687, %v4263
      %v4265 = vpop.f32.mrf.mxu0
      %4266 = vmatprep.mubr.f32.mxu0 0.0
      %4267 = vmatmul.mubr.f32.gmra.mxu0 %v4007
      %v4268 = vpop.f32.mrf.mxu0
      %v4269 = vadd.f32 %v3692, %v4268
      %v4270 = vpop.f32.mrf.mxu0
      %4271 = vmatprep.mubr.f32.mxu0 0.0
      %4272 = vmatmul.mubr.f32.gmra.mxu0 %v4010
      %v4273 = vpop.f32.mrf.mxu0
      %v4274 = vadd.f32 %v3697, %v4273
      %v4275 = vpop.f32.mrf.mxu0
      %4276 = vmatprep.mubr.f32.mxu0 0.0
      %4277 = vmatmul.mubr.f32.gmra.mxu0 %v4013
      %v4278 = vpop.f32.mrf.mxu0
      %v4279 = vadd.f32 %v3702, %v4278
      %v4280 = vpop.f32.mrf.mxu0
      %4281 = vmatprep.mubr.f32.mxu0 0.0
      %4282 = vmatmul.mubr.f32.gmra.mxu0 %v4016
      %v4283 = vpop.f32.mrf.mxu0
      %v4284 = vadd.f32 %v3707, %v4283
      %v4285 = vpop.f32.mrf.mxu0
      %4286 = vmatprep.mubr.f32.mxu0 0.0
      %4287 = vmatmul.mubr.f32.gmra.mxu0 %v4019
      %v4288 = vpop.f32.mrf.mxu0
      %v4289 = vadd.f32 %v3712, %v4288
      %v4290 = vpop.f32.mrf.mxu0
      %4291 = vmatprep.mubr.f32.mxu0 0.0
      %4292 = vmatmul.mubr.f32.gmra.mxu0 %v4022
      %v4293 = vpop.f32.mrf.mxu0
      %v4294 = vadd.f32 %v3717, %v4293
      %v4295 = vpop.f32.mrf.mxu0
      %4296 = vmatprep.mubr.f32.mxu0 0.0
      %4297 = vmatmul.mubr.f32.gmra.mxu0 %v4025
      %v4298 = vpop.f32.mrf.mxu0
      %v4299 = vadd.f32 %v3722, %v4298
      %v4300 = vpop.f32.mrf.mxu0
      %4301 = vmatprep.mubr.f32.mxu0 0.0
      %4302 = vmatmul.mubr.f32.gmra.mxu0 %v4028
      %v4303 = vpop.f32.mrf.mxu0
      %v4304 = vadd.f32 %v3727, %v4303
      %v4305 = vpop.f32.mrf.mxu0
      %4306 = vmatprep.mubr.f32.mxu0 0.0
      %4307 = vmatmul.mubr.f32.gmra.mxu0 %v4031
      %v4308 = vpop.f32.mrf.mxu0
      %v4309 = vadd.f32 %v3732, %v4308
      %v4310 = vpop.f32.mrf.mxu0
      %4311 = vmatprep.mubr.f32.mxu0 0.0
      %4312 = vmatmul.mubr.f32.gmra.mxu0 %v4034
      %v4313 = vpop.f32.mrf.mxu0
      %v4314 = vadd.f32 %v3737, %v4313
      %v4315 = vpop.f32.mrf.mxu0
      %4316 = vmatprep.mubr.f32.mxu0 0.0
      %4317 = vmatmul.mubr.f32.gmra.mxu0 %v4037
      %v4318 = vpop.f32.mrf.mxu0
      %v4319 = vadd.f32 %v3742, %v4318
      %v4320 = vpop.f32.mrf.mxu0
      %4321 = vmatprep.mubr.f32.mxu0 0.0
      %4322 = vmatmul.mubr.f32.gmra.mxu0 %v4040
      %v4323 = vpop.f32.mrf.mxu0
      %v4324 = vadd.f32 %v3747, %v4323
      %v4325 = vpop.f32.mrf.mxu0
      %4326 = vmatprep.mubr.f32.mxu0 0.0
      %4327 = vmatmul.mubr.f32.gmra.mxu0 %v4043
      %v4328 = vpop.f32.mrf.mxu0
      %v4329 = vadd.f32 %v3752, %v4328
      %v4330 = vpop.f32.mrf.mxu0
      %4331 = vmatprep.mubr.f32.mxu0 0.0
      %4332 = vmatmul.mubr.f32.gmra.mxu0 %v4046
      %v4333 = vpop.f32.mrf.mxu0
      %v4334 = vadd.f32 %v3757, %v4333
      %v4335 = vpop.f32.mrf.mxu0
      %4336 = vmatprep.mubr.f32.mxu0 0.0
      %4337 = vmatmul.mubr.f32.gmra.mxu0 %v4049
      %v4338 = vpop.f32.mrf.mxu0
      %v4339 = vadd.f32 %v3762, %v4338
      %v4340 = vpop.f32.mrf.mxu0
      %4341 = vmatprep.mubr.f32.mxu0 0.0
      %4342 = vmatmul.mubr.f32.gmra.mxu0 %v4052
      %v4343 = vpop.f32.mrf.mxu0
      %v4344 = vadd.f32 %v3767, %v4343
      %v4345 = vpop.f32.mrf.mxu0
      %4346 = vmatprep.mubr.f32.mxu0 0.0
      %4347 = vmatmul.mubr.f32.gmra.mxu0 %v4055
      %v4348 = vpop.f32.mrf.mxu0
      %v4349 = vadd.f32 %v3772, %v4348
      %v4350 = vpop.f32.mrf.mxu0
      %4351 = vmatprep.mubr.f32.mxu0 0.0
      %4352 = vmatmul.mubr.f32.gmra.mxu0 %v4058
      %v4353 = vpop.f32.mrf.mxu0
      %v4354 = vadd.f32 %v3777, %v4353
      %v4355 = vpop.f32.mrf.mxu0
      %4356 = vmatprep.mubr.f32.mxu0 0.0
      %4357 = vmatmul.mubr.f32.gmra.mxu0 %v4061
      %v4358 = vpop.f32.mrf.mxu0
      %v4359 = vadd.f32 %v3782, %v4358
      %v4360 = vpop.f32.mrf.mxu0
      %4361 = vmatprep.mubr.f32.mxu0 0.0
      %4362 = vmatmul.mubr.f32.gmra.mxu0 %v4064
      %v4363 = vpop.f32.mrf.mxu0
      %v4364 = vadd.f32 %v3787, %v4363
      %v4365 = vpop.f32.mrf.mxu0
      %4366 = vmatprep.mubr.f32.mxu0 0.0
      %4367 = vmatmul.mubr.f32.gmra.mxu0 %v4067
      %v4368 = vpop.f32.mrf.mxu0
      %v4369 = vadd.f32 %v3792, %v4368
      %v4370 = vpop.f32.mrf.mxu0
      %4371 = vmatprep.mubr.f32.mxu0 0.0
      %4372 = vmatmul.mubr.f32.gmra.mxu0 %v4070
      %v4373 = vpop.f32.mrf.mxu0
      %v4374 = vadd.f32 %v3797, %v4373
      %v4375 = vpop.f32.mrf.mxu0
      %4376 = vmatprep.mubr.f32.mxu0 0.0
      %4377 = vmatmul.mubr.f32.gmra.mxu0 %v4073
      %v4378 = vpop.f32.mrf.mxu0
      %v4379 = vadd.f32 %v3802, %v4378
      %v4380 = vpop.f32.mrf.mxu0
      %4381 = vmatprep.mubr.f32.mxu0 0.0
      %4382 = vmatmul.mubr.f32.gmra.mxu0 %v4076
      %v4383 = vpop.f32.mrf.mxu0
      %v4384 = vadd.f32 %v3807, %v4383
      %v4385 = vpop.f32.mrf.mxu0
      %4386 = vmatprep.mubr.f32.mxu0 0.0
      %4387 = vmatmul.mubr.f32.gmra.mxu0 %v4079
      %v4388 = vpop.f32.mrf.mxu0
      %v4389 = vadd.f32 %v3812, %v4388
      %v4390 = vpop.f32.mrf.mxu0
      %4391 = vmatprep.mubr.f32.mxu0 0.0
      %4392 = vmatmul.mubr.f32.gmra.mxu0 %v4082
      %v4393 = vpop.f32.mrf.mxu0
      %v4394 = vadd.f32 %v3817, %v4393
      %v4395 = vpop.f32.mrf.mxu0
      %4396 = vmatprep.mubr.f32.mxu0 0.0
      %4397 = vmatmul.mubr.f32.gmra.mxu0 %v4085
      %v4398 = vpop.f32.mrf.mxu0
      %v4399 = vadd.f32 %v3822, %v4398
      %v4400 = vpop.f32.mrf.mxu0
      %4401 = vmatprep.mubr.f32.mxu0 0.0
      %4402 = vmatmul.mubr.f32.gmra.mxu0 %v4088
      %v4403 = vpop.f32.mrf.mxu0
      %v4404 = vadd.f32 %v3827, %v4403
      %v4405 = vpop.f32.mrf.mxu0
      %4406 = vmatprep.mubr.f32.mxu0 0.0
      %4407 = vmatmul.mubr.f32.gmra.mxu0 %v4091
      %v4408 = vpop.f32.mrf.mxu0
      %v4409 = vadd.f32 %v3832, %v4408
      %v4410 = vpop.f32.mrf.mxu0
      %4411 = vmatprep.mubr.f32.mxu0 0.0
      %4412 = vmatmul.mubr.f32.gmra.mxu0 %v4094
      %v4413 = vpop.f32.mrf.mxu0
      %v4414 = vadd.f32 %v3837, %v4413
      %v4415 = vpop.f32.mrf.mxu0
      %4416 = vmatprep.mubr.f32.mxu0 0.0
      %4417 = vmatmul.mubr.f32.gmra.mxu0 %v4097
      %v4418 = vpop.f32.mrf.mxu0
      %v4419 = vadd.f32 %v3842, %v4418
      %v4420 = vpop.f32.mrf.mxu0
      %4421 = vmatprep.mubr.f32.mxu0 0.0
      %4422 = vmatmul.mubr.f32.gmra.mxu0 %v4100
      %v4423 = vpop.f32.mrf.mxu0
      %v4424 = vadd.f32 %v3847, %v4423
      %v4425 = vpop.f32.mrf.mxu0
      %4426 = vmatprep.mubr.f32.mxu0 0.0
      %4427 = vmatmul.mubr.f32.gmra.mxu0 %v4103
      %v4428 = vpop.f32.mrf.mxu0
      %v4429 = vadd.f32 %v3852, %v4428
      %v4430 = vpop.f32.mrf.mxu0
      %4431 = vmatprep.mubr.f32.mxu0 0.0
      %4432 = vmatmul.mubr.f32.gmra.mxu0 %v4106
      %v4433 = vpop.f32.mrf.mxu0
      %v4434 = vadd.f32 %v3857, %v4433
      %v4435 = vpop.f32.mrf.mxu0
      %4436 = vmatprep.mubr.f32.mxu0 0.0
      %4437 = vmatmul.mubr.f32.gmra.mxu0 %v4109
      %v4438 = vpop.f32.mrf.mxu0
      %v4439 = vadd.f32 %v3862, %v4438
      %v4440 = vpop.f32.mrf.mxu0
      %4441 = vmatprep.mubr.f32.mxu0 0.0
      %4442 = vmatmul.mubr.f32.gmra.mxu0 %v4112
      %v4443 = vpop.f32.mrf.mxu0
      %v4444 = vadd.f32 %v3867, %v4443
      %v4445 = vpop.f32.mrf.mxu0
      %4446 = vmatprep.mubr.f32.mxu0 0.0
      %4447 = vmatmul.mubr.f32.gmra.mxu0 %v4115
      %v4448 = vpop.f32.mrf.mxu0
      %v4449 = vadd.f32 %v3872, %v4448
      %v4450 = vpop.f32.mrf.mxu0
      %4451 = vmatprep.mubr.f32.mxu0 0.0
      %4452 = vmatmul.mubr.f32.gmra.mxu0 %v4118
      %v4453 = vpop.f32.mrf.mxu0
      %v4454 = vadd.f32 %v3877, %v4453
      %v4455 = vpop.f32.mrf.mxu0
      %4456 = vmatprep.mubr.f32.mxu0 0.0
      %4457 = vmatmul.mubr.f32.gmra.mxu0 %v4121
      %v4458 = vpop.f32.mrf.mxu0
      %v4459 = vadd.f32 %v3882, %v4458
      %v4460 = vpop.f32.mrf.mxu0
      %4461 = vmatprep.mubr.f32.mxu0 0.0
      %4462 = vmatmul.mubr.f32.gmra.mxu0 %v4124
      %v4463 = vpop.f32.mrf.mxu0
      %v4464 = vadd.f32 %v3887, %v4463
      %v4465 = vpop.f32.mrf.mxu0
      %4466 = vmatprep.mubr.f32.mxu0 0.0
      %4467 = vmatmul.mubr.f32.gmra.mxu0 %v4127
      %v4468 = vpop.f32.mrf.mxu0
      %v4469 = vadd.f32 %v3892, %v4468
      %v4470 = vpop.f32.mrf.mxu0
      %4471 = vmatprep.mubr.f32.mxu0 0.0
      %4472 = vmatmul.mubr.f32.gmra.mxu0 %v4130
      %v4473 = vpop.f32.mrf.mxu0
      %v4474 = vadd.f32 %v3897, %v4473
      %v4475 = vpop.f32.mrf.mxu0
      %4476 = vmatprep.mubr.f32.mxu0 0.0
      %4477 = vmatmul.mubr.f32.gmra.mxu0 %v4133
      %v4478 = vpop.f32.mrf.mxu0
      %v4479 = vadd.f32 %v3902, %v4478
      %v4480 = vpop.f32.mrf.mxu0
      %4481 = vmatprep.mubr.f32.mxu0 0.0
      %4482 = vmatmul.mubr.f32.gmra.mxu0 %v4136
      %v4483 = vpop.f32.mrf.mxu0
      %v4484 = vadd.f32 %v3907, %v4483
      %v4485 = vpop.f32.mrf.mxu0
      %4486 = vmatprep.mubr.f32.mxu0 0.0
      %4487 = vmatmul.mubr.f32.gmra.mxu0 %v4139
      %v4488 = vpop.f32.mrf.mxu0
      %v4489 = vadd.f32 %v3912, %v4488
      %v4490 = vpop.f32.mrf.mxu0
      %4491 = vmatprep.mubr.f32.mxu0 0.0
      %4492 = vmatmul.mubr.f32.gmra.mxu0 %v4142
      %v4493 = vpop.f32.mrf.mxu0
      %v4494 = vadd.f32 %v3917, %v4493
      %v4495 = vpop.f32.mrf.mxu0
      %4496 = vmatprep.mubr.f32.mxu0 0.0
      %4497 = vmatmul.mubr.f32.gmra.mxu0 %v4145
      %v4498 = vpop.f32.mrf.mxu0
      %v4499 = vadd.f32 %v3922, %v4498
      %v4500 = vpop.f32.mrf.mxu0
      %4501 = vmatprep.mubr.f32.mxu0 0.0
      %4502 = vmatmul.mubr.f32.gmra.mxu0 %v4148
      %v4503 = vpop.f32.mrf.mxu0
      %v4504 = vadd.f32 %v3927, %v4503
      %v4505 = vpop.f32.mrf.mxu0
      %4506 = vmatprep.mubr.f32.mxu0 0.0
      %4507 = vmatmul.mubr.f32.gmra.mxu0 %v4151
      %v4508 = vpop.f32.mrf.mxu0
      %v4509 = vadd.f32 %v3932, %v4508
      %v4510 = vpop.f32.mrf.mxu0
      %4511 = vmatprep.mubr.f32.mxu0 0.0
      %4512 = vmatmul.mubr.f32.gmra.mxu0 %v4154
      %v4513 = vpop.f32.mrf.mxu0
      %v4514 = vadd.f32 %v3937, %v4513
      %v4515 = vpop.f32.mrf.mxu0
      %4516 = vmatprep.mubr.f32.mxu0 0.0
      %4517 = vmatmul.mubr.f32.gmra.mxu0 %v4157
      %v4518 = vpop.f32.mrf.mxu0
      %v4519 = vadd.f32 %v3942, %v4518
      %v4520 = vpop.f32.mrf.mxu0
      %4521 = vmatprep.mubr.f32.mxu0 0.0
      %4522 = vmatmul.mubr.f32.gmra.mxu0 %v4160
      %v4523 = vpop.f32.mrf.mxu0
      %v4524 = vadd.f32 %v3947, %v4523
      %v4525 = vpop.f32.mrf.mxu0
      %4526 = vmatprep.mubr.f32.mxu0 0.0
      %4527 = vmatmul.mubr.f32.gmra.mxu0 %v4163
      %v4528 = vpop.f32.mrf.mxu0
      %v4529 = vadd.f32 %v3952, %v4528
      %v4530 = vpop.f32.mrf.mxu0
      %4531 = vmatprep.mubr.f32.mxu0 0.0
      %4532 = vmatmul.mubr.f32.gmra.mxu0 %v4166
      %v4533 = vpop.f32.mrf.mxu0
      %v4534 = vadd.f32 %v3957, %v4533
      %v4535 = vpop.f32.mrf.mxu0
      %4536 = vmatprep.mubr.f32.mxu0 0.0
      %4537 = vmatmul.mubr.f32.gmra.mxu0 %v4169
      %v4538 = vpop.f32.mrf.mxu0
      %v4539 = vadd.f32 %v3962, %v4538
      %v4540 = vpop.f32.mrf.mxu0
      %4541 = vmatprep.mubr.f32.mxu0 0.0
      %4542 = vmatmul.mubr.f32.gmra.mxu0 %v4172
      %v4543 = vpop.f32.mrf.mxu0
      %v4544 = vadd.f32 %v3967, %v4543
      %v4545 = vpop.f32.mrf.mxu0
      %4546 = vmatprep.mubr.f32.mxu0 0.0
      %4547 = vmatmul.mubr.f32.gmra.mxu0 %v4175
      %v4548 = vpop.f32.mrf.mxu0
      %v4549 = vadd.f32 %v3972, %v4548
      %v4550 = vpop.f32.mrf.mxu0
      %4551 = vmatprep.mubr.f32.mxu0 0.0
      %4552 = vmatmul.mubr.f32.gmra.mxu0 %v4178
      %v4553 = vpop.f32.mrf.mxu0
      %v4554 = vadd.f32 %v3977, %v4553
      %v4555 = vpop.f32.mrf.mxu0
      %4556 = vmatprep.mubr.f32.mxu0 0.0
      %4557 = vmatmul.mubr.f32.gmra.mxu0 %v4181
      %v4558 = vpop.f32.mrf.mxu0
      %v4559 = vadd.f32 %v3982, %v4558
      %v4560 = vpop.f32.mrf.mxu0
      %4561 = vmatprep.mubr.f32.mxu0 0.0
      %4562 = vmatmul.mubr.f32.gmra.mxu0 %v4184
      %v4563 = vpop.f32.mrf.mxu0
      %v4564 = vadd.f32 %v3987, %v4563
      %v4565 = vpop.f32.mrf.mxu0
      %4566 = vmatprep.mubr.f32.mxu0 0.0
      %4567 = vmatmul.mubr.f32.gmra.mxu0 %v4187
      %v4568 = vpop.f32.mrf.mxu0
      %v4569 = vadd.f32 %v3992, %v4568
      %v4570 = vpop.f32.mrf.mxu0
      %4571 = vmatprep.mubr.f32.mxu0 0.0
      %4572 = vmatmul.mubr.f32.gmra.mxu0 %v4190
      %v4573 = vpop.f32.mrf.mxu0
      %v4574 = vadd.f32 %v3997, %v4573
      %v4575 = vpop.f32.mrf.mxu0
      %4576 = vdwg.mxu0
      %v4577 = vld [vmem:[%s9] sm:$0xff]
      %v4578 = vld [vmem:[%s9 + $0x8] sm:$0xff]
      %v4579 = vld [vmem:[%s9 + $0x10] sm:$0xff]
      %v4580 = vld [vmem:[%s9 + $0x18] sm:$0xff]
      %v4582 = vsel %vm2067, %v3290, 0
      %v4585 = vsel %vm2067, %v3291, 0
      %v4588 = vsel %vm2067, %v3292, 0
      %v4591 = vsel %vm2067, %v3293, 0
      %v4594 = vsel %vm2067, %v3294, 0
      %v4597 = vsel %vm2067, %v3295, 0
      %v4600 = vsel %vm2067, %v3296, 0
      %v4603 = vsel %vm2067, %v3297, 0
      %v4606 = vsel %vm2067, %v3298, 0
      %v4609 = vsel %vm2067, %v3299, 0
      %v4612 = vsel %vm2067, %v3300, 0
      %v4615 = vsel %vm2067, %v3301, 0
      %v4618 = vsel %vm2067, %v3302, 0
      %v4621 = vsel %vm2067, %v3303, 0
      %v4624 = vsel %vm2067, %v3304, 0
      %v4627 = vsel %vm2067, %v3305, 0
      %v4630 = vsel %vm2067, %v3306, 0
      %v4633 = vsel %vm2067, %v3307, 0
      %v4636 = vsel %vm2067, %v3308, 0
      %v4639 = vsel %vm2067, %v3309, 0
      %v4642 = vsel %vm2067, %v3310, 0
      %v4645 = vsel %vm2067, %v3311, 0
      %v4648 = vsel %vm2067, %v3312, 0
      %v4651 = vsel %vm2067, %v3313, 0
      %v4654 = vsel %vm2067, %v3314, 0
      %v4657 = vsel %vm2067, %v3315, 0
      %v4660 = vsel %vm2067, %v3316, 0
      %v4663 = vsel %vm2067, %v3317, 0
      %v4666 = vsel %vm2067, %v3318, 0
      %v4669 = vsel %vm2067, %v3319, 0
      %v4672 = vsel %vm2067, %v3320, 0
      %v4675 = vsel %vm2067, %v3321, 0
      %v4678 = vsel %vm2067, %v3322, 0
      %v4681 = vsel %vm2067, %v3323, 0
      %v4684 = vsel %vm2067, %v3324, 0
      %v4687 = vsel %vm2067, %v3325, 0
      %v4690 = vsel %vm2067, %v3326, 0
      %v4693 = vsel %vm2067, %v3327, 0
      %v4696 = vsel %vm2067, %v3328, 0
      %v4699 = vsel %vm2067, %v3329, 0
      %v4702 = vsel %vm2067, %v3330, 0
      %v4705 = vsel %vm2067, %v3331, 0
      %v4708 = vsel %vm2067, %v3332, 0
      %v4711 = vsel %vm2067, %v3333, 0
      %v4714 = vsel %vm2067, %v3334, 0
      %v4717 = vsel %vm2067, %v3335, 0
      %v4720 = vsel %vm2067, %v3336, 0
      %v4723 = vsel %vm2067, %v3337, 0
      %v4726 = vsel %vm2067, %v3338, 0
      %v4729 = vsel %vm2067, %v3339, 0
      %v4732 = vsel %vm2067, %v3340, 0
      %v4735 = vsel %vm2067, %v3341, 0
      %v4738 = vsel %vm2067, %v3342, 0
      %v4741 = vsel %vm2067, %v3343, 0
      %v4744 = vsel %vm2067, %v3344, 0
      %v4747 = vsel %vm2067, %v3345, 0
      %v4750 = vsel %vm2067, %v3346, 0
      %v4753 = vsel %vm2067, %v3347, 0
      %v4756 = vsel %vm2067, %v3348, 0
      %v4759 = vsel %vm2067, %v3349, 0
      %v4762 = vsel %vm2067, %v3350, 0
      %v4765 = vsel %vm2067, %v3351, 0
      %v4768 = vsel %vm2067, %v3352, 0
      %v4771 = vsel %vm2067, %v3353, 0
      %4773 = vmatprep.subr.mxu0 0.0
      %4774 = vmatpush1.msra.mxu0 0.0
      %4775 = vmatprep.subr.mxu0 0.0
      %4776 = vmatpush1.msra.mxu0 0.0
      %4777 = vmatprep.subr.mxu0 0.0
      %4778 = vmatpush1.msra.mxu0 0.0
      %4779 = vmatprep.subr.mxu0 0.0
      %4780 = vmatpush1.msra.mxu0 0.0
      %4781 = vmatprep.subr.mxu0 0.0
      %4782 = vmatpush1.msra.mxu0 0.0
      %4783 = vmatprep.subr.mxu0 0.0
      %4784 = vmatpush1.msra.mxu0 0.0
      %4785 = vmatprep.subr.mxu0 0.0
      %4786 = vmatpush1.msra.mxu0 0.0
      %4787 = vmatprep.subr.mxu0 0.0
      %4788 = vmatpush1.msra.mxu0 0.0
      %4789 = vmatprep.subr.mxu0 0.0
      %4790 = vmatpush1.msra.mxu0 0.0
      %4791 = vmatprep.subr.mxu0 0.0
      %4792 = vmatpush1.msra.mxu0 0.0
      %4793 = vmatprep.subr.mxu0 0.0
      %4794 = vmatpush1.msra.mxu0 0.0
      %4795 = vmatprep.subr.mxu0 0.0
      %4796 = vmatpush1.msra.mxu0 0.0
      %4797 = vmatprep.subr.mxu0 0.0
      %4798 = vmatpush1.msra.mxu0 %v4580
      %4799 = vmatprep.subr.mxu0 0.0
      %4800 = vmatpush1.msra.mxu0 %v4579
      %4801 = vmatprep.subr.mxu0 0.0
      %4802 = vmatpush1.msra.mxu0 %v4578
      %4803 = vmatprep.subr.mxu0 0.0
      %4804 = vmatpush1.msra.mxu0 %v4577
      %4805 = vmatprep.subr.mxu0 0.0
      %4806 = vmatpush2.msra.mxu0 0.0
      %4807 = vmatprep.subr.mxu0 0.0
      %4808 = vmatpush2.msra.mxu0 0.0
      %4809 = vmatprep.subr.mxu0 0.0
      %4810 = vmatpush2.msra.mxu0 0.0
      %4811 = vmatprep.subr.mxu0 0.0
      %4812 = vmatpush2.msra.mxu0 0.0
      %4813 = vmatprep.subr.mxu0 0.0
      %4814 = vmatpush2.msra.mxu0 0.0
      %4815 = vmatprep.subr.mxu0 0.0
      %4816 = vmatpush2.msra.mxu0 0.0
      %4817 = vmatprep.subr.mxu0 0.0
      %4818 = vmatpush2.msra.mxu0 0.0
      %4819 = vmatprep.subr.mxu0 0.0
      %4820 = vmatpush2.msra.mxu0 0.0
      %4821 = vmatprep.subr.mxu0 0.0
      %4822 = vmatpush2.msra.mxu0 0.0
      %4823 = vmatprep.subr.mxu0 0.0
      %4824 = vmatpush2.msra.mxu0 0.0
      %4825 = vmatprep.subr.mxu0 0.0
      %4826 = vmatpush2.msra.mxu0 0.0
      %4827 = vmatprep.subr.mxu0 0.0
      %4828 = vmatpush2.msra.mxu0 0.0
      %4829 = vmatprep.subr.mxu0 0.0
      %4830 = vmatpush2.msra.mxu0 0.0
      %4831 = vmatprep.subr.mxu0 0.0
      %4832 = vmatpush2.msra.mxu0 0.0
      %4833 = vmatprep.subr.mxu0 0.0
      %4834 = vmatpush2.msra.mxu0 0.0
      %4835 = vmatprep.subr.mxu0 0.0
      %4836 = vmatpush2.msra.mxu0 0.0
      %4837 = vmatprep.mubr.f32.mxu0 0.0
      %4838 = vmatmul.mubr.f32.gmra.mxu0 %v4582
      %v4839 = vpop.f32.mrf.mxu0
      %v4840 = vadd.f32 0.0, %v4839
      %v4841 = vpop.f32.mrf.mxu0
      %4842 = vmatprep.mubr.f32.mxu0 0.0
      %4843 = vmatmul.mubr.f32.gmra.mxu0 %v4585
      %v4844 = vpop.f32.mrf.mxu0
      %v4845 = vadd.f32 0.0, %v4844
      %v4846 = vpop.f32.mrf.mxu0
      %4847 = vmatprep.mubr.f32.mxu0 0.0
      %4848 = vmatmul.mubr.f32.gmra.mxu0 %v4588
      %v4849 = vpop.f32.mrf.mxu0
      %v4850 = vadd.f32 0.0, %v4849
      %v4851 = vpop.f32.mrf.mxu0
      %4852 = vmatprep.mubr.f32.mxu0 0.0
      %4853 = vmatmul.mubr.f32.gmra.mxu0 %v4591
      %v4854 = vpop.f32.mrf.mxu0
      %v4855 = vadd.f32 0.0, %v4854
      %v4856 = vpop.f32.mrf.mxu0
      %4857 = vmatprep.mubr.f32.mxu0 0.0
      %4858 = vmatmul.mubr.f32.gmra.mxu0 %v4594
      %v4859 = vpop.f32.mrf.mxu0
      %v4860 = vadd.f32 0.0, %v4859
      %v4861 = vpop.f32.mrf.mxu0
      %4862 = vmatprep.mubr.f32.mxu0 0.0
      %4863 = vmatmul.mubr.f32.gmra.mxu0 %v4597
      %v4864 = vpop.f32.mrf.mxu0
      %v4865 = vadd.f32 0.0, %v4864
      %v4866 = vpop.f32.mrf.mxu0
      %4867 = vmatprep.mubr.f32.mxu0 0.0
      %4868 = vmatmul.mubr.f32.gmra.mxu0 %v4600
      %v4869 = vpop.f32.mrf.mxu0
      %v4870 = vadd.f32 0.0, %v4869
      %v4871 = vpop.f32.mrf.mxu0
      %4872 = vmatprep.mubr.f32.mxu0 0.0
      %4873 = vmatmul.mubr.f32.gmra.mxu0 %v4603
      %v4874 = vpop.f32.mrf.mxu0
      %v4875 = vadd.f32 0.0, %v4874
      %v4876 = vpop.f32.mrf.mxu0
      %4877 = vmatprep.mubr.f32.mxu0 0.0
      %4878 = vmatmul.mubr.f32.gmra.mxu0 %v4606
      %v4879 = vpop.f32.mrf.mxu0
      %v4880 = vadd.f32 0.0, %v4879
      %v4881 = vpop.f32.mrf.mxu0
      %4882 = vmatprep.mubr.f32.mxu0 0.0
      %4883 = vmatmul.mubr.f32.gmra.mxu0 %v4609
      %v4884 = vpop.f32.mrf.mxu0
      %v4885 = vadd.f32 0.0, %v4884
      %v4886 = vpop.f32.mrf.mxu0
      %4887 = vmatprep.mubr.f32.mxu0 0.0
      %4888 = vmatmul.mubr.f32.gmra.mxu0 %v4612
      %v4889 = vpop.f32.mrf.mxu0
      %v4890 = vadd.f32 0.0, %v4889
      %v4891 = vpop.f32.mrf.mxu0
      %4892 = vmatprep.mubr.f32.mxu0 0.0
      %4893 = vmatmul.mubr.f32.gmra.mxu0 %v4615
      %v4894 = vpop.f32.mrf.mxu0
      %v4895 = vadd.f32 0.0, %v4894
      %v4896 = vpop.f32.mrf.mxu0
      %4897 = vmatprep.mubr.f32.mxu0 0.0
      %4898 = vmatmul.mubr.f32.gmra.mxu0 %v4618
      %v4899 = vpop.f32.mrf.mxu0
      %v4900 = vadd.f32 0.0, %v4899
      %v4901 = vpop.f32.mrf.mxu0
      %4902 = vmatprep.mubr.f32.mxu0 0.0
      %4903 = vmatmul.mubr.f32.gmra.mxu0 %v4621
      %v4904 = vpop.f32.mrf.mxu0
      %v4905 = vadd.f32 0.0, %v4904
      %v4906 = vpop.f32.mrf.mxu0
      %4907 = vmatprep.mubr.f32.mxu0 0.0
      %4908 = vmatmul.mubr.f32.gmra.mxu0 %v4624
      %v4909 = vpop.f32.mrf.mxu0
      %v4910 = vadd.f32 0.0, %v4909
      %v4911 = vpop.f32.mrf.mxu0
      %4912 = vmatprep.mubr.f32.mxu0 0.0
      %4913 = vmatmul.mubr.f32.gmra.mxu0 %v4627
      %v4914 = vpop.f32.mrf.mxu0
      %v4915 = vadd.f32 0.0, %v4914
      %v4916 = vpop.f32.mrf.mxu0
      %4917 = vmatprep.mubr.f32.mxu0 0.0
      %4918 = vmatmul.mubr.f32.gmra.mxu0 %v4630
      %v4919 = vpop.f32.mrf.mxu0
      %v4920 = vadd.f32 0.0, %v4919
      %v4921 = vpop.f32.mrf.mxu0
      %4922 = vmatprep.mubr.f32.mxu0 0.0
      %4923 = vmatmul.mubr.f32.gmra.mxu0 %v4633
      %v4924 = vpop.f32.mrf.mxu0
      %v4925 = vadd.f32 0.0, %v4924
      %v4926 = vpop.f32.mrf.mxu0
      %4927 = vmatprep.mubr.f32.mxu0 0.0
      %4928 = vmatmul.mubr.f32.gmra.mxu0 %v4636
      %v4929 = vpop.f32.mrf.mxu0
      %v4930 = vadd.f32 0.0, %v4929
      %v4931 = vpop.f32.mrf.mxu0
      %4932 = vmatprep.mubr.f32.mxu0 0.0
      %4933 = vmatmul.mubr.f32.gmra.mxu0 %v4639
      %v4934 = vpop.f32.mrf.mxu0
      %v4935 = vadd.f32 0.0, %v4934
      %v4936 = vpop.f32.mrf.mxu0
      %4937 = vmatprep.mubr.f32.mxu0 0.0
      %4938 = vmatmul.mubr.f32.gmra.mxu0 %v4642
      %v4939 = vpop.f32.mrf.mxu0
      %v4940 = vadd.f32 0.0, %v4939
      %v4941 = vpop.f32.mrf.mxu0
      %4942 = vmatprep.mubr.f32.mxu0 0.0
      %4943 = vmatmul.mubr.f32.gmra.mxu0 %v4645
      %v4944 = vpop.f32.mrf.mxu0
      %v4945 = vadd.f32 0.0, %v4944
      %v4946 = vpop.f32.mrf.mxu0
      %4947 = vmatprep.mubr.f32.mxu0 0.0
      %4948 = vmatmul.mubr.f32.gmra.mxu0 %v4648
      %v4949 = vpop.f32.mrf.mxu0
      %v4950 = vadd.f32 0.0, %v4949
      %v4951 = vpop.f32.mrf.mxu0
      %4952 = vmatprep.mubr.f32.mxu0 0.0
      %4953 = vmatmul.mubr.f32.gmra.mxu0 %v4651
      %v4954 = vpop.f32.mrf.mxu0
      %v4955 = vadd.f32 0.0, %v4954
      %v4956 = vpop.f32.mrf.mxu0
      %4957 = vmatprep.mubr.f32.mxu0 0.0
      %4958 = vmatmul.mubr.f32.gmra.mxu0 %v4654
      %v4959 = vpop.f32.mrf.mxu0
      %v4960 = vadd.f32 0.0, %v4959
      %v4961 = vpop.f32.mrf.mxu0
      %4962 = vmatprep.mubr.f32.mxu0 0.0
      %4963 = vmatmul.mubr.f32.gmra.mxu0 %v4657
      %v4964 = vpop.f32.mrf.mxu0
      %v4965 = vadd.f32 0.0, %v4964
      %v4966 = vpop.f32.mrf.mxu0
      %4967 = vmatprep.mubr.f32.mxu0 0.0
      %4968 = vmatmul.mubr.f32.gmra.mxu0 %v4660
      %v4969 = vpop.f32.mrf.mxu0
      %v4970 = vadd.f32 0.0, %v4969
      %v4971 = vpop.f32.mrf.mxu0
      %4972 = vmatprep.mubr.f32.mxu0 0.0
      %4973 = vmatmul.mubr.f32.gmra.mxu0 %v4663
      %v4974 = vpop.f32.mrf.mxu0
      %v4975 = vadd.f32 0.0, %v4974
      %v4976 = vpop.f32.mrf.mxu0
      %4977 = vmatprep.mubr.f32.mxu0 0.0
      %4978 = vmatmul.mubr.f32.gmra.mxu0 %v4666
      %v4979 = vpop.f32.mrf.mxu0
      %v4980 = vadd.f32 0.0, %v4979
      %v4981 = vpop.f32.mrf.mxu0
      %4982 = vmatprep.mubr.f32.mxu0 0.0
      %4983 = vmatmul.mubr.f32.gmra.mxu0 %v4669
      %v4984 = vpop.f32.mrf.mxu0
      %v4985 = vadd.f32 0.0, %v4984
      %v4986 = vpop.f32.mrf.mxu0
      %4987 = vmatprep.mubr.f32.mxu0 0.0
      %4988 = vmatmul.mubr.f32.gmra.mxu0 %v4672
      %v4989 = vpop.f32.mrf.mxu0
      %v4990 = vadd.f32 0.0, %v4989
      %v4991 = vpop.f32.mrf.mxu0
      %4992 = vmatprep.mubr.f32.mxu0 0.0
      %4993 = vmatmul.mubr.f32.gmra.mxu0 %v4675
      %v4994 = vpop.f32.mrf.mxu0
      %v4995 = vadd.f32 0.0, %v4994
      %v4996 = vpop.f32.mrf.mxu0
      %4997 = vmatprep.mubr.f32.mxu0 0.0
      %4998 = vmatmul.mubr.f32.gmra.mxu0 %v4678
      %v4999 = vpop.f32.mrf.mxu0
      %v5000 = vadd.f32 0.0, %v4999
      %v5001 = vpop.f32.mrf.mxu0
      %5002 = vmatprep.mubr.f32.mxu0 0.0
      %5003 = vmatmul.mubr.f32.gmra.mxu0 %v4681
      %v5004 = vpop.f32.mrf.mxu0
      %v5005 = vadd.f32 0.0, %v5004
      %v5006 = vpop.f32.mrf.mxu0
      %5007 = vmatprep.mubr.f32.mxu0 0.0
      %5008 = vmatmul.mubr.f32.gmra.mxu0 %v4684
      %v5009 = vpop.f32.mrf.mxu0
      %v5010 = vadd.f32 0.0, %v5009
      %v5011 = vpop.f32.mrf.mxu0
      %5012 = vmatprep.mubr.f32.mxu0 0.0
      %5013 = vmatmul.mubr.f32.gmra.mxu0 %v4687
      %v5014 = vpop.f32.mrf.mxu0
      %v5015 = vadd.f32 0.0, %v5014
      %v5016 = vpop.f32.mrf.mxu0
      %5017 = vmatprep.mubr.f32.mxu0 0.0
      %5018 = vmatmul.mubr.f32.gmra.mxu0 %v4690
      %v5019 = vpop.f32.mrf.mxu0
      %v5020 = vadd.f32 0.0, %v5019
      %v5021 = vpop.f32.mrf.mxu0
      %5022 = vmatprep.mubr.f32.mxu0 0.0
      %5023 = vmatmul.mubr.f32.gmra.mxu0 %v4693
      %v5024 = vpop.f32.mrf.mxu0
      %v5025 = vadd.f32 0.0, %v5024
      %v5026 = vpop.f32.mrf.mxu0
      %5027 = vmatprep.mubr.f32.mxu0 0.0
      %5028 = vmatmul.mubr.f32.gmra.mxu0 %v4696
      %v5029 = vpop.f32.mrf.mxu0
      %v5030 = vadd.f32 0.0, %v5029
      %v5031 = vpop.f32.mrf.mxu0
      %5032 = vmatprep.mubr.f32.mxu0 0.0
      %5033 = vmatmul.mubr.f32.gmra.mxu0 %v4699
      %v5034 = vpop.f32.mrf.mxu0
      %v5035 = vadd.f32 0.0, %v5034
      %v5036 = vpop.f32.mrf.mxu0
      %5037 = vmatprep.mubr.f32.mxu0 0.0
      %5038 = vmatmul.mubr.f32.gmra.mxu0 %v4702
      %v5039 = vpop.f32.mrf.mxu0
      %v5040 = vadd.f32 0.0, %v5039
      %v5041 = vpop.f32.mrf.mxu0
      %5042 = vmatprep.mubr.f32.mxu0 0.0
      %5043 = vmatmul.mubr.f32.gmra.mxu0 %v4705
      %v5044 = vpop.f32.mrf.mxu0
      %v5045 = vadd.f32 0.0, %v5044
      %v5046 = vpop.f32.mrf.mxu0
      %5047 = vmatprep.mubr.f32.mxu0 0.0
      %5048 = vmatmul.mubr.f32.gmra.mxu0 %v4708
      %v5049 = vpop.f32.mrf.mxu0
      %v5050 = vadd.f32 0.0, %v5049
      %v5051 = vpop.f32.mrf.mxu0
      %5052 = vmatprep.mubr.f32.mxu0 0.0
      %5053 = vmatmul.mubr.f32.gmra.mxu0 %v4711
      %v5054 = vpop.f32.mrf.mxu0
      %v5055 = vadd.f32 0.0, %v5054
      %v5056 = vpop.f32.mrf.mxu0
      %5057 = vmatprep.mubr.f32.mxu0 0.0
      %5058 = vmatmul.mubr.f32.gmra.mxu0 %v4714
      %v5059 = vpop.f32.mrf.mxu0
      %v5060 = vadd.f32 0.0, %v5059
      %v5061 = vpop.f32.mrf.mxu0
      %5062 = vmatprep.mubr.f32.mxu0 0.0
      %5063 = vmatmul.mubr.f32.gmra.mxu0 %v4717
      %v5064 = vpop.f32.mrf.mxu0
      %v5065 = vadd.f32 0.0, %v5064
      %v5066 = vpop.f32.mrf.mxu0
      %5067 = vmatprep.mubr.f32.mxu0 0.0
      %5068 = vmatmul.mubr.f32.gmra.mxu0 %v4720
      %v5069 = vpop.f32.mrf.mxu0
      %v5070 = vadd.f32 0.0, %v5069
      %v5071 = vpop.f32.mrf.mxu0
      %5072 = vmatprep.mubr.f32.mxu0 0.0
      %5073 = vmatmul.mubr.f32.gmra.mxu0 %v4723
      %v5074 = vpop.f32.mrf.mxu0
      %v5075 = vadd.f32 0.0, %v5074
      %v5076 = vpop.f32.mrf.mxu0
      %5077 = vmatprep.mubr.f32.mxu0 0.0
      %5078 = vmatmul.mubr.f32.gmra.mxu0 %v4726
      %v5079 = vpop.f32.mrf.mxu0
      %v5080 = vadd.f32 0.0, %v5079
      %v5081 = vpop.f32.mrf.mxu0
      %5082 = vmatprep.mubr.f32.mxu0 0.0
      %5083 = vmatmul.mubr.f32.gmra.mxu0 %v4729
      %v5084 = vpop.f32.mrf.mxu0
      %v5085 = vadd.f32 0.0, %v5084
      %v5086 = vpop.f32.mrf.mxu0
      %5087 = vmatprep.mubr.f32.mxu0 0.0
      %5088 = vmatmul.mubr.f32.gmra.mxu0 %v4732
      %v5089 = vpop.f32.mrf.mxu0
      %v5090 = vadd.f32 0.0, %v5089
      %v5091 = vpop.f32.mrf.mxu0
      %5092 = vmatprep.mubr.f32.mxu0 0.0
      %5093 = vmatmul.mubr.f32.gmra.mxu0 %v4735
      %v5094 = vpop.f32.mrf.mxu0
      %v5095 = vadd.f32 0.0, %v5094
      %v5096 = vpop.f32.mrf.mxu0
      %5097 = vmatprep.mubr.f32.mxu0 0.0
      %5098 = vmatmul.mubr.f32.gmra.mxu0 %v4738
      %v5099 = vpop.f32.mrf.mxu0
      %v5100 = vadd.f32 0.0, %v5099
      %v5101 = vpop.f32.mrf.mxu0
      %5102 = vmatprep.mubr.f32.mxu0 0.0
      %5103 = vmatmul.mubr.f32.gmra.mxu0 %v4741
      %v5104 = vpop.f32.mrf.mxu0
      %v5105 = vadd.f32 0.0, %v5104
      %v5106 = vpop.f32.mrf.mxu0
      %5107 = vmatprep.mubr.f32.mxu0 0.0
      %5108 = vmatmul.mubr.f32.gmra.mxu0 %v4744
      %v5109 = vpop.f32.mrf.mxu0
      %v5110 = vadd.f32 0.0, %v5109
      %v5111 = vpop.f32.mrf.mxu0
      %5112 = vmatprep.mubr.f32.mxu0 0.0
      %5113 = vmatmul.mubr.f32.gmra.mxu0 %v4747
      %v5114 = vpop.f32.mrf.mxu0
      %v5115 = vadd.f32 0.0, %v5114
      %v5116 = vpop.f32.mrf.mxu0
      %5117 = vmatprep.mubr.f32.mxu0 0.0
      %5118 = vmatmul.mubr.f32.gmra.mxu0 %v4750
      %v5119 = vpop.f32.mrf.mxu0
      %v5120 = vadd.f32 0.0, %v5119
      %v5121 = vpop.f32.mrf.mxu0
      %5122 = vmatprep.mubr.f32.mxu0 0.0
      %5123 = vmatmul.mubr.f32.gmra.mxu0 %v4753
      %v5124 = vpop.f32.mrf.mxu0
      %v5125 = vadd.f32 0.0, %v5124
      %v5126 = vpop.f32.mrf.mxu0
      %5127 = vmatprep.mubr.f32.mxu0 0.0
      %5128 = vmatmul.mubr.f32.gmra.mxu0 %v4756
      %v5129 = vpop.f32.mrf.mxu0
      %v5130 = vadd.f32 0.0, %v5129
      %v5131 = vpop.f32.mrf.mxu0
      %5132 = vmatprep.mubr.f32.mxu0 0.0
      %5133 = vmatmul.mubr.f32.gmra.mxu0 %v4759
      %v5134 = vpop.f32.mrf.mxu0
      %v5135 = vadd.f32 0.0, %v5134
      %v5136 = vpop.f32.mrf.mxu0
      %5137 = vmatprep.mubr.f32.mxu0 0.0
      %5138 = vmatmul.mubr.f32.gmra.mxu0 %v4762
      %v5139 = vpop.f32.mrf.mxu0
      %v5140 = vadd.f32 0.0, %v5139
      %v5141 = vpop.f32.mrf.mxu0
      %5142 = vmatprep.mubr.f32.mxu0 0.0
      %5143 = vmatmul.mubr.f32.gmra.mxu0 %v4765
      %v5144 = vpop.f32.mrf.mxu0
      %v5145 = vadd.f32 0.0, %v5144
      %v5146 = vpop.f32.mrf.mxu0
      %5147 = vmatprep.mubr.f32.mxu0 0.0
      %5148 = vmatmul.mubr.f32.gmra.mxu0 %v4768
      %v5149 = vpop.f32.mrf.mxu0
      %v5150 = vadd.f32 0.0, %v5149
      %v5151 = vpop.f32.mrf.mxu0
      %5152 = vmatprep.mubr.f32.mxu0 0.0
      %5153 = vmatmul.mubr.f32.gmra.mxu0 %v4771
      %v5154 = vpop.f32.mrf.mxu0
      %v5155 = vadd.f32 0.0, %v5154
      %v5156 = vpop.f32.mrf.mxu0
      %5157 = vdwg.mxu0
      %v5158 = vadd.f32 %v4259, %v4840
      %v5159 = vadd.f32 %v4264, %v4845
      %v5160 = vadd.f32 %v4269, %v4850
      %v5161 = vadd.f32 %v4274, %v4855
      %v5162 = vadd.f32 %v4279, %v4860
      %v5163 = vadd.f32 %v4284, %v4865
      %v5164 = vadd.f32 %v4289, %v4870
      %v5165 = vadd.f32 %v4294, %v4875
      %v5166 = vadd.f32 %v4299, %v4880
      %v5167 = vadd.f32 %v4304, %v4885
      %v5168 = vadd.f32 %v4309, %v4890
      %v5169 = vadd.f32 %v4314, %v4895
      %v5170 = vadd.f32 %v4319, %v4900
      %v5171 = vadd.f32 %v4324, %v4905
      %v5172 = vadd.f32 %v4329, %v4910
      %v5173 = vadd.f32 %v4334, %v4915
      %v5174 = vadd.f32 %v4339, %v4920
      %v5175 = vadd.f32 %v4344, %v4925
      %v5176 = vadd.f32 %v4349, %v4930
      %v5177 = vadd.f32 %v4354, %v4935
      %v5178 = vadd.f32 %v4359, %v4940
      %v5179 = vadd.f32 %v4364, %v4945
      %v5180 = vadd.f32 %v4369, %v4950
      %v5181 = vadd.f32 %v4374, %v4955
      %v5182 = vadd.f32 %v4379, %v4960
      %v5183 = vadd.f32 %v4384, %v4965
      %v5184 = vadd.f32 %v4389, %v4970
      %v5185 = vadd.f32 %v4394, %v4975
      %v5186 = vadd.f32 %v4399, %v4980
      %v5187 = vadd.f32 %v4404, %v4985
      %v5188 = vadd.f32 %v4409, %v4990
      %v5189 = vadd.f32 %v4414, %v4995
      %v5190 = vadd.f32 %v4419, %v5000
      %v5191 = vadd.f32 %v4424, %v5005
      %v5192 = vadd.f32 %v4429, %v5010
      %v5193 = vadd.f32 %v4434, %v5015
      %v5194 = vadd.f32 %v4439, %v5020
      %v5195 = vadd.f32 %v4444, %v5025
      %v5196 = vadd.f32 %v4449, %v5030
      %v5197 = vadd.f32 %v4454, %v5035
      %v5198 = vadd.f32 %v4459, %v5040
      %v5199 = vadd.f32 %v4464, %v5045
      %v5200 = vadd.f32 %v4469, %v5050
      %v5201 = vadd.f32 %v4474, %v5055
      %v5202 = vadd.f32 %v4479, %v5060
      %v5203 = vadd.f32 %v4484, %v5065
      %v5204 = vadd.f32 %v4489, %v5070
      %v5205 = vadd.f32 %v4494, %v5075
      %v5206 = vadd.f32 %v4499, %v5080
      %v5207 = vadd.f32 %v4504, %v5085
      %v5208 = vadd.f32 %v4509, %v5090
      %v5209 = vadd.f32 %v4514, %v5095
      %v5210 = vadd.f32 %v4519, %v5100
      %v5211 = vadd.f32 %v4524, %v5105
      %v5212 = vadd.f32 %v4529, %v5110
      %v5213 = vadd.f32 %v4534, %v5115
      %v5214 = vadd.f32 %v4539, %v5120
      %v5215 = vadd.f32 %v4544, %v5125
      %v5216 = vadd.f32 %v4549, %v5130
      %v5217 = vadd.f32 %v4554, %v5135
      %v5218 = vadd.f32 %v4559, %v5140
      %v5219 = vadd.f32 %v4564, %v5145
      %v5220 = vadd.f32 %v4569, %v5150
      %v5221 = vadd.f32 %v4574, %v5155
      %5222 = vst.msk [vmem:[%s405] sm:$0xff] %vm2067, %v5158
      %5223 = vst.msk [vmem:[%s405 + $0x8] sm:$0xff] %vm2067, %v5159
      %5224 = vst.msk [vmem:[%s405 + $0x10] sm:$0xff] %vm2067, %v5160
      %5225 = vst.msk [vmem:[%s405 + $0x18] sm:$0xff] %vm2067, %v5161
      %5226 = vst.msk [vmem:[%s405 + $0x20] sm:$0xff] %vm2067, %v5162
      %5227 = vst.msk [vmem:[%s405 + $0x28] sm:$0xff] %vm2067, %v5163
      %5228 = vst.msk [vmem:[%s405 + $0x30] sm:$0xff] %vm2067, %v5164
      %5229 = vst.msk [vmem:[%s405 + $0x38] sm:$0xff] %vm2067, %v5165
      %5230 = vst.msk [vmem:[%s405 + $0x40] sm:$0xff] %vm2067, %v5166
      %5231 = vst.msk [vmem:[%s405 + $0x48] sm:$0xff] %vm2067, %v5167
      %5232 = vst.msk [vmem:[%s405 + $0x50] sm:$0xff] %vm2067, %v5168
      %5233 = vst.msk [vmem:[%s405 + $0x58] sm:$0xff] %vm2067, %v5169
      %5234 = vst.msk [vmem:[%s405 + $0x60] sm:$0xff] %vm2067, %v5170
      %5235 = vst.msk [vmem:[%s405 + $0x68] sm:$0xff] %vm2067, %v5171
      %5236 = vst.msk [vmem:[%s405 + $0x70] sm:$0xff] %vm2067, %v5172
      %5237 = vst.msk [vmem:[%s405 + $0x78] sm:$0xff] %vm2067, %v5173
      %5238 = vst.msk [vmem:[%s405 + $0x80] sm:$0xff] %vm2067, %v5174
      %5239 = vst.msk [vmem:[%s405 + $0x88] sm:$0xff] %vm2067, %v5175
      %5240 = vst.msk [vmem:[%s405 + $0x90] sm:$0xff] %vm2067, %v5176
      %5241 = vst.msk [vmem:[%s405 + $0x98] sm:$0xff] %vm2067, %v5177
      %5242 = vst.msk [vmem:[%s405 + $0xa0] sm:$0xff] %vm2067, %v5178
      %5243 = vst.msk [vmem:[%s405 + $0xa8] sm:$0xff] %vm2067, %v5179
      %5244 = vst.msk [vmem:[%s405 + $0xb0] sm:$0xff] %vm2067, %v5180
      %5245 = vst.msk [vmem:[%s405 + $0xb8] sm:$0xff] %vm2067, %v5181
      %5246 = vst.msk [vmem:[%s405 + $0xc0] sm:$0xff] %vm2067, %v5182
      %5247 = vst.msk [vmem:[%s405 + $0xc8] sm:$0xff] %vm2067, %v5183
      %5248 = vst.msk [vmem:[%s405 + $0xd0] sm:$0xff] %vm2067, %v5184
      %5249 = vst.msk [vmem:[%s405 + $0xd8] sm:$0xff] %vm2067, %v5185
      %5250 = vst.msk [vmem:[%s405 + $0xe0] sm:$0xff] %vm2067, %v5186
      %5251 = vst.msk [vmem:[%s405 + $0xe8] sm:$0xff] %vm2067, %v5187
      %5252 = vst.msk [vmem:[%s405 + $0xf0] sm:$0xff] %vm2067, %v5188
      %5253 = vst.msk [vmem:[%s405 + $0xf8] sm:$0xff] %vm2067, %v5189
      %5254 = vst.msk [vmem:[%s405 + $0x100] sm:$0xff] %vm2067, %v5190
      %5255 = vst.msk [vmem:[%s405 + $0x108] sm:$0xff] %vm2067, %v5191
      %5256 = vst.msk [vmem:[%s405 + $0x110] sm:$0xff] %vm2067, %v5192
      %5257 = vst.msk [vmem:[%s405 + $0x118] sm:$0xff] %vm2067, %v5193
      %5258 = vst.msk [vmem:[%s405 + $0x120] sm:$0xff] %vm2067, %v5194
      %5259 = vst.msk [vmem:[%s405 + $0x128] sm:$0xff] %vm2067, %v5195
      %5260 = vst.msk [vmem:[%s405 + $0x130] sm:$0xff] %vm2067, %v5196
      %5261 = vst.msk [vmem:[%s405 + $0x138] sm:$0xff] %vm2067, %v5197
      %5262 = vst.msk [vmem:[%s405 + $0x140] sm:$0xff] %vm2067, %v5198
      %5263 = vst.msk [vmem:[%s405 + $0x148] sm:$0xff] %vm2067, %v5199
      %5264 = vst.msk [vmem:[%s405 + $0x150] sm:$0xff] %vm2067, %v5200
      %5265 = vst.msk [vmem:[%s405 + $0x158] sm:$0xff] %vm2067, %v5201
      %5266 = vst.msk [vmem:[%s405 + $0x160] sm:$0xff] %vm2067, %v5202
      %5267 = vst.msk [vmem:[%s405 + $0x168] sm:$0xff] %vm2067, %v5203
      %5268 = vst.msk [vmem:[%s405 + $0x170] sm:$0xff] %vm2067, %v5204
      %5269 = vst.msk [vmem:[%s405 + $0x178] sm:$0xff] %vm2067, %v5205
      %5270 = vst.msk [vmem:[%s405 + $0x180] sm:$0xff] %vm2067, %v5206
      %5271 = vst.msk [vmem:[%s405 + $0x188] sm:$0xff] %vm2067, %v5207
      %5272 = vst.msk [vmem:[%s405 + $0x190] sm:$0xff] %vm2067, %v5208
      %5273 = vst.msk [vmem:[%s405 + $0x198] sm:$0xff] %vm2067, %v5209
      %5274 = vst.msk [vmem:[%s405 + $0x1a0] sm:$0xff] %vm2067, %v5210
      %5275 = vst.msk [vmem:[%s405 + $0x1a8] sm:$0xff] %vm2067, %v5211
      %5276 = vst.msk [vmem:[%s405 + $0x1b0] sm:$0xff] %vm2067, %v5212
      %5277 = vst.msk [vmem:[%s405 + $0x1b8] sm:$0xff] %vm2067, %v5213
      %5278 = vst.msk [vmem:[%s405 + $0x1c0] sm:$0xff] %vm2067, %v5214
      %5279 = vst.msk [vmem:[%s405 + $0x1c8] sm:$0xff] %vm2067, %v5215
      %5280 = vst.msk [vmem:[%s405 + $0x1d0] sm:$0xff] %vm2067, %v5216
      %5281 = vst.msk [vmem:[%s405 + $0x1d8] sm:$0xff] %vm2067, %v5217
      %5282 = vst.msk [vmem:[%s405 + $0x1e0] sm:$0xff] %vm2067, %v5218
      %5283 = vst.msk [vmem:[%s405 + $0x1e8] sm:$0xff] %vm2067, %v5219
      %5284 = vst.msk [vmem:[%s405 + $0x1f0] sm:$0xff] %vm2067, %v5220
      %5285 = vst.msk [vmem:[%s405 + $0x1f8] sm:$0xff] %vm2067, %v5221
      %s5286 = smul.u32 64, %s21
      %p5287 = scmp.lt.s32.totalorder %s5286, 127
      %s5288 = scalar_select %p5287, %s5286, 127
      %s5289 = smul.addr %s5288, 8
      %s5290 = scalar_lea.vmem %s10, %s5289
      // Predicated region
      $region61: #{tpu_custom_call.1} parent=59 // pred_check
        %p5291 = pneg %p264
      $region62: #{tpu_custom_call.1} parent=59 // pred_check_branch
        %5293 = sbr.rel (%p5291) target = $region64
      $region63: #{tpu_custom_call.1} parent=59 // pred_region
        %s5294 = smul.u32 64, %s21
      $region64: #{tpu_custom_call.1} parent=59 // pred_fallthru
        _
    $region60: #{tpu_custom_call.1} parent=5 // pred_fallthru
      _
    %p5295 = scmp.le.s32.totalorder 2, %s16
    // Predicated region
    $region65: #{tpu_custom_call.1} parent=5 // pred_check
      %p5296 = pneg %p5295
    $region66: #{tpu_custom_call.1} parent=5 // pred_check_branch
      %5298 = sbr.rel (%p5296) target = $region68
    $region67: #{tpu_custom_call.1} parent=5 // pred_region
      %s5299 = ssub.s32 %s16, 2
      // Predicated region
      $region69: #{tpu_custom_call.1} parent=67 // pred_check
        %p5300 = pneg %p270
      $region70: #{tpu_custom_call.1} parent=67 // pred_check_branch
        %5302 = sbr.rel (%p5300) target = $region72
      $region71: #{tpu_custom_call.1} parent=67 // pred_region
        %s5303 = smul.u32 64, %s22
        %p5304 = scmp.lt.s32.totalorder %s5303, 127
        %s5305 = scalar_select %p5304, %s5303, 127
        %s5306 = smul.addr %s5305, 8
        %s5307 = scalar_lea.vmem %s10, %s5306
      $region72: #{tpu_custom_call.1} parent=67 // pred_fallthru
        _
    $region68: #{tpu_custom_call.1} parent=5 // pred_fallthru
      _
  $region6: #{tpu_custom_call.1} parent=0 // loop_footer
    %s20 = sadd.s32 1, %s16
  $region7: #{tpu_custom_call.1} parent=0 // loop_footer_branch
    %15 = sbr.rel target = $region3
  $region8: #{tpu_custom_call.1} parent=0 // loop_exit
    _

</llo_original>
